<compile_context>
chip_gen: v7x
topology: tpu7x:2x2x1
jax: 0.10.0
libtpu: 0.0.40
codegen_flags: <defaults>
</compile_context>

<pallas_src>
import math

import jax
import jax.numpy as jnp
from jax import lax
from jax.experimental import pallas as pl
from jax.experimental.pallas import tpu as pltpu


def _conv3x3_s1_kernel(x_ref, w_ref, b_ref, o_ref, xp_ref):
    """3x3 / stride-1 / pad-1 conv on one NHWC batch element.

    x_ref : (1, H, W, C_in)   VMEM block (unpadded activations)
    w_ref : (9, C_in, C_out)  VMEM, resident (constant index_map)
    b_ref : (1, C_out)        VMEM, resident
    o_ref : (1, H, W, C_out)  VMEM output block
    xp_ref: (H+2, W+2, C_in)  VMEM scratch: zero-padded copy of the input tile
    """
    _, H, W, C_in = x_ref.shape
    C_out = o_ref.shape[-1]

    # Build the zero-padded tile entirely in VMEM (no extra HBM pad pass).
    xp_ref[...] = jnp.zeros_like(xp_ref)
    xp_ref[1:H + 1, 1:W + 1, :] = x_ref[0]

    # 3x3 conv == 9 shifted (H*W, C_in) @ (C_in, C_out) MXU matmuls, f32 accum.
    acc = jnp.zeros((H * W, C_out), jnp.float32)
    for tap in range(9):                       # fully unrolled, static slices
        dh, dw = tap // 3, tap % 3
        xs = xp_ref[dh:dh + H, dw:dw + W, :].reshape(H * W, C_in)
        acc = acc + jnp.dot(xs, w_ref[tap],
                            preferred_element_type=jnp.float32)

    # Epilogue: bias add (single broadcast) + single cast to the output dtype.
    acc = acc + b_ref[...].astype(jnp.float32)
    o_ref[0] = acc.reshape(H, W, C_out).astype(o_ref.dtype)


def downsample3d_conv(x_nchw, weight, bias):
    """Conv2d(C_in, C_out, 3, stride=1, padding=1) with PyTorch NCHW layouts."""
    N, C_in, H, W = x_nchw.shape
    C_out = weight.shape[0]

    # NCHW -> NHWC so channels sit on the lane axis.  (If the surrounding
    # graph is already NHWC, this transpose disappears.)
    x = jnp.transpose(x_nchw, (0, 2, 3, 1))

    # (C_out, C_in, 3, 3) -> (9, C_in, C_out): one matmul RHS per tap.
    w9 = jnp.transpose(weight, (2, 3, 1, 0)).reshape(9, C_in, C_out)
    b2 = bias.reshape(1, C_out)

    out_nhwc = pl.pallas_call(
        _conv3x3_s1_kernel,
        out_shape=jax.ShapeDtypeStruct((N, H, W, C_out), x.dtype),
        grid_spec=pltpu.PrefetchScalarGridSpec(
            num_scalar_prefetch=0,
            grid=(N,),
            in_specs=[
                # Per-batch activation block.
                pl.BlockSpec((1, H, W, C_in), lambda n: (n, 0, 0, 0)),
                # Weights / bias: constant index_map -> DMA'd once, resident.
                pl.BlockSpec((9, C_in, C_out), lambda n: (0, 0, 0)),
                pl.BlockSpec((1, C_out), lambda n: (0, 0)),
            ],
            out_specs=pl.BlockSpec((1, H, W, C_out), lambda n: (n, 0, 0, 0)),
            scratch_shapes=[pltpu.VMEM((H + 2, W + 2, C_in), x.dtype)],
        ),
        compiler_params=pltpu.CompilerParams(
            dimension_semantics=("parallel",),
            # Explicit VMEM budget (safe on v5e/v6e/v7x); tiny demo tiles use
            # well under 1 MiB, production tiles should be re-derived per chip.
            vmem_limit_bytes=64 * 1024 * 1024,
        ),
    )(x, w9, b2)

    return jnp.transpose(out_nhwc, (0, 3, 1, 2))


def downsample3d_forward(x, weight=None, bias=None, *, use_conv=True):
    """Forward pass of Downsample3D (dims=2, stride hardcoded to 1)."""
    if not use_conv:
        # AvgPool2d(kernel_size=1, stride=1) is the identity.
        return x
    return downsample3d_conv(x, weight, bias)


if __name__ == "__main__":
    key = jax.random.PRNGKey(0)
    kx, kw, kb = jax.random.split(key, 3)

    N, C_in, H, W = 2, 4, 16, 16
    C_out = C_in  # Downsample3D default: out_channels = channels

    x = jax.random.normal(kx, (N, C_in, H, W), dtype=jnp.float32)
    fan_in = C_in * 3 * 3
    w = jax.random.normal(kw, (C_out, C_in, 3, 3), dtype=jnp.float32) / math.sqrt(fan_in)
    b = jax.random.normal(kb, (C_out,), dtype=jnp.float32) * 0.1

    conv = jax.jit(downsample3d_conv)
    y = jax.block_until_ready(conv(x, w, b))
    assert y.shape == (N, C_out, H, W), y.shape

    # use_conv=False path (identity).
    y_id = downsample3d_forward(x, use_conv=False)
    assert y_id.shape == x.shape

    # Reference: XLA convolution with the same semantics as the PyTorch Conv2d.
    y_ref = lax.conv_general_dilated(
        x, w, window_strides=(1, 1), padding=((1, 1), (1, 1)),
        dimension_numbers=("NCHW", "OIHW", "NCHW"),
    ) + b.reshape(1, C_out, 1, 1)
    y_ref = jax.block_until_ready(y_ref)

    max_err = float(jnp.max(jnp.abs(y - y_ref)))
    assert max_err < 5e-2, f"max |err| = {max_err}"
    print("KERNEL_OK")
</pallas_src>

<mosaic_0001>
module attributes {stable_mosaic.version = 11 : i64} {
  func.func @_conv3x3_s1_kernel(%arg0: i32, %arg1: memref<1x16x16x4xf32, #tpu.memory_space<vmem>>, %arg2: memref<9x4x4xf32, #tpu.memory_space<vmem>>, %arg3: memref<1x4xf32, #tpu.memory_space<vmem>>, %arg4: memref<1x16x16x4xf32, #tpu.memory_space<vmem>>, %arg5: memref<18x18x4xf32, #tpu.memory_space<vmem>>) attributes {dimension_semantics = [#tpu.dimension_semantics<parallel>], iteration_bounds = array<i64: 2>, scalar_prefetch = 0 : i64, scratch_operands = 1 : i64, tpu.core_type = #tpu.core_type<tc>, window_params = [{transform_indices = @transform_0, window_bounds = array<i64: 1, 16, 16, 4>}, {pipeline_mode = #tpu.pipeline_mode<synchronous>, transform_indices = @transform_1, window_bounds = array<i64: 9, 4, 4>}, {pipeline_mode = #tpu.pipeline_mode<synchronous>, transform_indices = @transform_2, window_bounds = array<i64: 1, 4>}, {transform_indices = @transform_3, window_bounds = array<i64: 1, 16, 16, 4>}]} {
    %cst = arith.constant 0.000000e+00 : f32
    %0 = vector.broadcast %cst : f32 to vector<18x18x4xf32>
    %c0 = arith.constant 0 : index
    %c0_0 = arith.constant 0 : index
    %c0_1 = arith.constant 0 : index
    %1 = vector.load %arg5[%c0, %c0_0, %c0_1] : memref<18x18x4xf32, #tpu.memory_space<vmem>>, vector<18x18x4xf32>
    tpu.vector_store %arg5[%c0, %c0_0, %c0_1], %0 {strides = array<i32>} : memref<18x18x4xf32, #tpu.memory_space<vmem>>, vector<18x18x4xf32>,
    %c0_2 = arith.constant 0 : index
    %c0_3 = arith.constant 0 : index
    %c0_4 = arith.constant 0 : index
    %c0_5 = arith.constant 0 : index
    %2 = vector.load %arg1[%c0_2, %c0_3, %c0_4, %c0_5] : memref<1x16x16x4xf32, #tpu.memory_space<vmem>>, vector<1x16x16x4xf32>
    %3 = vector.shape_cast %2 : vector<1x16x16x4xf32> to vector<16x16x4xf32>
    %c1 = arith.constant 1 : index
    %c1_6 = arith.constant 1 : index
    %c0_7 = arith.constant 0 : index
    %4 = vector.load %arg5[%c1, %c1_6, %c0_7] : memref<18x18x4xf32, #tpu.memory_space<vmem>>, vector<16x16x4xf32>
    tpu.vector_store %arg5[%c1, %c1_6, %c0_7], %3 {strides = array<i32>} : memref<18x18x4xf32, #tpu.memory_space<vmem>>, vector<16x16x4xf32>,
    %cst_8 = arith.constant 0.000000e+00 : f32
    %5 = vector.broadcast %cst_8 : f32 to vector<256x4xf32>
    %c0_9 = arith.constant 0 : index
    %c0_10 = arith.constant 0 : index
    %c0_11 = arith.constant 0 : index
    %6 = vector.load %arg5[%c0_9, %c0_10, %c0_11] : memref<18x18x4xf32, #tpu.memory_space<vmem>>, vector<16x16x4xf32>
    %7 = vector.shape_cast %6 : vector<16x16x4xf32> to vector<256x4xf32>
    %c0_12 = arith.constant 0 : index
    %c0_13 = arith.constant 0 : index
    %c0_14 = arith.constant 0 : index
    %8 = vector.load %arg2[%c0_12, %c0_13, %c0_14] : memref<9x4x4xf32, #tpu.memory_space<vmem>>, vector<1x4x4xf32>
    %9 = vector.shape_cast %8 : vector<1x4x4xf32> to vector<4x4xf32>
    %cst_15 = arith.constant dense<0.000000e+00> : vector<256x4xf32>
    %10 = tpu.matmul %7, %9, %cst_15 {dimension_numbers = #tpu.dot_dimension_numbers<[1], [0], [0], [1], [0, 0, 1, 1], [], []>} : vector<256x4xf32>, vector<4x4xf32>, vector<256x4xf32> -> vector<256x4xf32>
    %11 = arith.addf %5, %10 : vector<256x4xf32>
    %c0_16 = arith.constant 0 : index
    %c1_17 = arith.constant 1 : index
    %c0_18 = arith.constant 0 : index
    %12 = vector.load %arg5[%c0_16, %c1_17, %c0_18] : memref<18x18x4xf32, #tpu.memory_space<vmem>>, vector<16x16x4xf32>
    %13 = vector.shape_cast %12 : vector<16x16x4xf32> to vector<256x4xf32>
    %c1_19 = arith.constant 1 : index
    %c0_20 = arith.constant 0 : index
    %c0_21 = arith.constant 0 : index
    %14 = vector.load %arg2[%c1_19, %c0_20, %c0_21] : memref<9x4x4xf32, #tpu.memory_space<vmem>>, vector<1x4x4xf32>
    %15 = vector.shape_cast %14 : vector<1x4x4xf32> to vector<4x4xf32>
    %cst_22 = arith.constant dense<0.000000e+00> : vector<256x4xf32>
    %16 = tpu.matmul %13, %15, %cst_22 {dimension_numbers = #tpu.dot_dimension_numbers<[1], [0], [0], [1], [0, 0, 1, 1], [], []>} : vector<256x4xf32>, vector<4x4xf32>, vector<256x4xf32> -> vector<256x4xf32>
    %17 = arith.addf %11, %16 : vector<256x4xf32>
    %c0_23 = arith.constant 0 : index
    %c2 = arith.constant 2 : index
    %c0_24 = arith.constant 0 : index
    %18 = vector.load %arg5[%c0_23, %c2, %c0_24] : memref<18x18x4xf32, #tpu.memory_space<vmem>>, vector<16x16x4xf32>
    %19 = vector.shape_cast %18 : vector<16x16x4xf32> to vector<256x4xf32>
    %c2_25 = arith.constant 2 : index
    %c0_26 = arith.constant 0 : index
    %c0_27 = arith.constant 0 : index
    %20 = vector.load %arg2[%c2_25, %c0_26, %c0_27] : memref<9x4x4xf32, #tpu.memory_space<vmem>>, vector<1x4x4xf32>
    %21 = vector.shape_cast %20 : vector<1x4x4xf32> to vector<4x4xf32>
    %cst_28 = arith.constant dense<0.000000e+00> : vector<256x4xf32>
    %22 = tpu.matmul %19, %21, %cst_28 {dimension_numbers = #tpu.dot_dimension_numbers<[1], [0], [0], [1], [0, 0, 1, 1], [], []>} : vector<256x4xf32>, vector<4x4xf32>, vector<256x4xf32> -> vector<256x4xf32>
    %23 = arith.addf %17, %22 : vector<256x4xf32>
    %c1_29 = arith.constant 1 : index
    %c0_30 = arith.constant 0 : index
    %c0_31 = arith.constant 0 : index
    %24 = vector.load %arg5[%c1_29, %c0_30, %c0_31] : memref<18x18x4xf32, #tpu.memory_space<vmem>>, vector<16x16x4xf32>
    %25 = vector.shape_cast %24 : vector<16x16x4xf32> to vector<256x4xf32>
    %c3 = arith.constant 3 : index
    %c0_32 = arith.constant 0 : index
    %c0_33 = arith.constant 0 : index
    %26 = vector.load %arg2[%c3, %c0_32, %c0_33] : memref<9x4x4xf32, #tpu.memory_space<vmem>>, vector<1x4x4xf32>
    %27 = vector.shape_cast %26 : vector<1x4x4xf32> to vector<4x4xf32>
    %cst_34 = arith.constant dense<0.000000e+00> : vector<256x4xf32>
    %28 = tpu.matmul %25, %27, %cst_34 {dimension_numbers = #tpu.dot_dimension_numbers<[1], [0], [0], [1], [0, 0, 1, 1], [], []>} : vector<256x4xf32>, vector<4x4xf32>, vector<256x4xf32> -> vector<256x4xf32>
    %29 = arith.addf %23, %28 : vector<256x4xf32>
    %c1_35 = arith.constant 1 : index
    %c1_36 = arith.constant 1 : index
    %c0_37 = arith.constant 0 : index
    %30 = vector.load %arg5[%c1_35, %c1_36, %c0_37] : memref<18x18x4xf32, #tpu.memory_space<vmem>>, vector<16x16x4xf32>
    %31 = vector.shape_cast %30 : vector<16x16x4xf32> to vector<256x4xf32>
    %c4 = arith.constant 4 : index
    %c0_38 = arith.constant 0 : index
    %c0_39 = arith.constant 0 : index
    %32 = vector.load %arg2[%c4, %c0_38, %c0_39] : memref<9x4x4xf32, #tpu.memory_space<vmem>>, vector<1x4x4xf32>
    %33 = vector.shape_cast %32 : vector<1x4x4xf32> to vector<4x4xf32>
    %cst_40 = arith.constant dense<0.000000e+00> : vector<256x4xf32>
    %34 = tpu.matmul %31, %33, %cst_40 {dimension_numbers = #tpu.dot_dimension_numbers<[1], [0], [0], [1], [0, 0, 1, 1], [], []>} : vector<256x4xf32>, vector<4x4xf32>, vector<256x4xf32> -> vector<256x4xf32>
    %35 = arith.addf %29, %34 : vector<256x4xf32>
    %c1_41 = arith.constant 1 : index
    %c2_42 = arith.constant 2 : index
    %c0_43 = arith.constant 0 : index
    %36 = vector.load %arg5[%c1_41, %c2_42, %c0_43] : memref<18x18x4xf32, #tpu.memory_space<vmem>>, vector<16x16x4xf32>
    %37 = vector.shape_cast %36 : vector<16x16x4xf32> to vector<256x4xf32>
    %c5 = arith.constant 5 : index
    %c0_44 = arith.constant 0 : index
    %c0_45 = arith.constant 0 : index
    %38 = vector.load %arg2[%c5, %c0_44, %c0_45] : memref<9x4x4xf32, #tpu.memory_space<vmem>>, vector<1x4x4xf32>
    %39 = vector.shape_cast %38 : vector<1x4x4xf32> to vector<4x4xf32>
    %cst_46 = arith.constant dense<0.000000e+00> : vector<256x4xf32>
    %40 = tpu.matmul %37, %39, %cst_46 {dimension_numbers = #tpu.dot_dimension_numbers<[1], [0], [0], [1], [0, 0, 1, 1], [], []>} : vector<256x4xf32>, vector<4x4xf32>, vector<256x4xf32> -> vector<256x4xf32>
    %41 = arith.addf %35, %40 : vector<256x4xf32>
    %c2_47 = arith.constant 2 : index
    %c0_48 = arith.constant 0 : index
    %c0_49 = arith.constant 0 : index
    %42 = vector.load %arg5[%c2_47, %c0_48, %c0_49] : memref<18x18x4xf32, #tpu.memory_space<vmem>>, vector<16x16x4xf32>
    %43 = vector.shape_cast %42 : vector<16x16x4xf32> to vector<256x4xf32>
    %c6 = arith.constant 6 : index
    %c0_50 = arith.constant 0 : index
    %c0_51 = arith.constant 0 : index
    %44 = vector.load %arg2[%c6, %c0_50, %c0_51] : memref<9x4x4xf32, #tpu.memory_space<vmem>>, vector<1x4x4xf32>
    %45 = vector.shape_cast %44 : vector<1x4x4xf32> to vector<4x4xf32>
    %cst_52 = arith.constant dense<0.000000e+00> : vector<256x4xf32>
    %46 = tpu.matmul %43, %45, %cst_52 {dimension_numbers = #tpu.dot_dimension_numbers<[1], [0], [0], [1], [0, 0, 1, 1], [], []>} : vector<256x4xf32>, vector<4x4xf32>, vector<256x4xf32> -> vector<256x4xf32>
    %47 = arith.addf %41, %46 : vector<256x4xf32>
    %c2_53 = arith.constant 2 : index
    %c1_54 = arith.constant 1 : index
    %c0_55 = arith.constant 0 : index
    %48 = vector.load %arg5[%c2_53, %c1_54, %c0_55] : memref<18x18x4xf32, #tpu.memory_space<vmem>>, vector<16x16x4xf32>
    %49 = vector.shape_cast %48 : vector<16x16x4xf32> to vector<256x4xf32>
    %c7 = arith.constant 7 : index
    %c0_56 = arith.constant 0 : index
    %c0_57 = arith.constant 0 : index
    %50 = vector.load %arg2[%c7, %c0_56, %c0_57] : memref<9x4x4xf32, #tpu.memory_space<vmem>>, vector<1x4x4xf32>
    %51 = vector.shape_cast %50 : vector<1x4x4xf32> to vector<4x4xf32>
    %cst_58 = arith.constant dense<0.000000e+00> : vector<256x4xf32>
    %52 = tpu.matmul %49, %51, %cst_58 {dimension_numbers = #tpu.dot_dimension_numbers<[1], [0], [0], [1], [0, 0, 1, 1], [], []>} : vector<256x4xf32>, vector<4x4xf32>, vector<256x4xf32> -> vector<256x4xf32>
    %53 = arith.addf %47, %52 : vector<256x4xf32>
    %c2_59 = arith.constant 2 : index
    %c2_60 = arith.constant 2 : index
    %c0_61 = arith.constant 0 : index
    %54 = vector.load %arg5[%c2_59, %c2_60, %c0_61] : memref<18x18x4xf32, #tpu.memory_space<vmem>>, vector<16x16x4xf32>
    %55 = vector.shape_cast %54 : vector<16x16x4xf32> to vector<256x4xf32>
    %c8 = arith.constant 8 : index
    %c0_62 = arith.constant 0 : index
    %c0_63 = arith.constant 0 : index
    %56 = vector.load %arg2[%c8, %c0_62, %c0_63] : memref<9x4x4xf32, #tpu.memory_space<vmem>>, vector<1x4x4xf32>
    %57 = vector.shape_cast %56 : vector<1x4x4xf32> to vector<4x4xf32>
    %cst_64 = arith.constant dense<0.000000e+00> : vector<256x4xf32>
    %58 = tpu.matmul %55, %57, %cst_64 {dimension_numbers = #tpu.dot_dimension_numbers<[1], [0], [0], [1], [0, 0, 1, 1], [], []>} : vector<256x4xf32>, vector<4x4xf32>, vector<256x4xf32> -> vector<256x4xf32>
    %59 = arith.addf %53, %58 : vector<256x4xf32>
    %c0_65 = arith.constant 0 : index
    %c0_66 = arith.constant 0 : index
    %60 = vector.load %arg3[%c0_65, %c0_66] : memref<1x4xf32, #tpu.memory_space<vmem>>, vector<1x4xf32>
    %61 = vector.broadcast %60 : vector<1x4xf32> to vector<256x4xf32>
    %62 = arith.addf %59, %61 : vector<256x4xf32>
    %63 = vector.shape_cast %62 : vector<256x4xf32> to vector<16x16x4xf32>
    %c0_67 = arith.constant 0 : index
    %c0_68 = arith.constant 0 : index
    %c0_69 = arith.constant 0 : index
    %c0_70 = arith.constant 0 : index
    %64 = vector.load %arg4[%c0_67, %c0_68, %c0_69, %c0_70] : memref<1x16x16x4xf32, #tpu.memory_space<vmem>>, vector<1x16x16x4xf32>
    %65 = vector.shape_cast %64 : vector<1x16x16x4xf32> to vector<16x16x4xf32>
    %66 = vector.shape_cast %63 : vector<16x16x4xf32> to vector<1x16x16x4xf32>
    tpu.vector_store %arg4[%c0_67, %c0_68, %c0_69, %c0_70], %66 {strides = array<i32>} : memref<1x16x16x4xf32, #tpu.memory_space<vmem>>, vector<1x16x16x4xf32>,
    return
  }
  func.func @transform_0(%arg0: i32) -> (i32, i32, i32, i32) {
    %c0_i32 = arith.constant 0 : i32
    %c0_i32_0 = arith.constant 0 : i32
    %c0_i32_1 = arith.constant 0 : i32
    %c0_i32_2 = arith.constant 0 : i32
    return %arg0, %c0_i32, %c0_i32_0, %c0_i32_1 : i32, i32, i32, i32
  }
  func.func @transform_1(%arg0: i32) -> (i32, i32, i32) {
    %c0_i32 = arith.constant 0 : i32
    %c0_i32_0 = arith.constant 0 : i32
    %c0_i32_1 = arith.constant 0 : i32
    %c0_i32_2 = arith.constant 0 : i32
    return %c0_i32, %c0_i32_0, %c0_i32_1 : i32, i32, i32
  }
  func.func @transform_2(%arg0: i32) -> (i32, i32) {
    %c0_i32 = arith.constant 0 : i32
    %c0_i32_0 = arith.constant 0 : i32
    %c0_i32_1 = arith.constant 0 : i32
    return %c0_i32, %c0_i32_0 : i32, i32
  }
  func.func @transform_3(%arg0: i32) -> (i32, i32, i32, i32) {
    %c0_i32 = arith.constant 0 : i32
    %c0_i32_0 = arith.constant 0 : i32
    %c0_i32_1 = arith.constant 0 : i32
    %c0_i32_2 = arith.constant 0 : i32
    return %arg0, %c0_i32, %c0_i32_0, %c0_i32_1 : i32, i32, i32, i32
  }
}

</mosaic_0001>

<llo_original>
// kernel: downsample3d_conv.1
$region0: #{downsample3d_conv.1}
  #allocation0 [shape = 'u32[]', space=smem, size = 0x4, offset = 0x4, fixed_abs, tag = 'smem constant byte address 0x4 - core index']
  #allocation1 [shape = 'u32[144,128]{1,0:T(1,128)}', space=vmem, size = 0x12000, scoped, tag = 'internal scratch']
  #allocation2 [shape = 'f32[18,18,4]{2,1,0:T(8,128)}', space=vmem, size = 0x36000, scoped, tag = 'scratch operand']
  %s0 = inlined_call_operand.hbm [shape: f32[2,16,16,4], index: 0, kind: input, shape index: {}]
  %s1 = inlined_call_operand.hbm [shape: f32[9,4,4], index: 1, kind: input, shape index: {}]
  %s2 = inlined_call_operand.hbm [shape: f32[1,4], index: 2, kind: input, shape index: {}]
  %s3 = inlined_call_operand.hbm [shape: f32[2,16,16,4], index: 3, kind: output, shape index: {}]
  %s4 = sld [smem:[#allocation0]]
  $region57: #{downsample3d_conv.1} parent=0
    _
  %s6 = ssub.s32 1, %s4
  %s7 = scalar_select 0, %s6, %s4
  $region1: #{downsample3d_conv.1} parent=0
    #allocation3 [shape = 'u8[262144]{0}', space=vmem, size = 0x40000, scoped, tag = 'input window, operand 0']
    #allocation4 [shape = 's32[2]{0}', space=sflag, size = 0x8, scoped, tag = 'scoped memory for downsample3d_conv.1']
    #allocation5 [shape = 's32[2]{0}', space=sflag, size = 0x8, scoped, tag = 'scoped memory for downsample3d_conv.1']
    #allocation6 [shape = 'u8[18432]{0}', space=vmem, size = 0x4800, scoped, tag = 'input window, operand 1, single buffered']
    #allocation7 [shape = 's32[1]{0}', space=sflag, size = 0x4, scoped, tag = 'scoped memory for downsample3d_conv.1']
    #allocation8 [shape = 'u8[512]{0}', space=vmem, size = 0x400, scoped, tag = 'input window, operand 2, single buffered']
    #allocation9 [shape = 'u8[262144]{0}', space=vmem, size = 0x40000, scoped, tag = 'output window, operand 0']
    %8 = vsyncpa [#allocation4], 0
    %s9 = scalar_lea.sflag [#allocation4], 1
    %10 = vsyncpa %s9, 0
    %11 = vsyncpa [#allocation7], 0
    %12 = vsyncpa [#allocation5], 0
    %s13 = scalar_lea.sflag [#allocation5], 1
    %14 = vsyncpa %s13, 0
    loop: start=0, step=1, limit=4
    $region2: #{downsample3d_conv.1} parent=1 // loop_pre_header
      _
    $region3: #{downsample3d_conv.1} parent=1 // loop_header
      %s16 = sphi 0, %s20
      %p17 = scmp.ge.s32.totalorder %s16, 4
      %s26 = sphi 0, %s28
      %s29 = sphi 0, %s26
      %s30 = sphi 0, %s29
      %s46 = sphi 0, %s30
      %s50 = sphi 0, %s50
      %s52 = sphi 0, %s50
      %s53 = sphi 0, %s52
      %s67 = sphi 0, %s53
      %s71 = sphi 0, %s71
      %s73 = sphi 0, %s71
      %s74 = sphi 0, %s73
      %s88 = sphi 0, %s74
      %s94 = sphi 0, %s96
      %s97 = sphi 0, %s94
      %s98 = sphi 0, %s97
      %s114 = sphi 0, %s98
    $region4: #{downsample3d_conv.1} parent=1 // loop_header_branch
      %19 = sbr.rel (%p17) target = $region8
    $region5: #{downsample3d_conv.1} parent=1 // loop_body
      %s21 = ssub.s32 %s16, 1
      %s22 = ssub.s32 %s16, 2
      %s23 = sadd.s32 %s16, 1
      %s24 = ssub.s32 %s16, %s23
      %p25 = scmp.eq.s32.totalorder %s24, 0
      %s27 = sadd.s32 %s26, 1
      %s28 = scalar_select %p25, %s26, %s27
      %p31 = pneg %p25
      %p32 = scmp.eq.s32.totalorder %s16, 1
      %p33 = por %p31, %p32
      %p34 = scmp.ne.s32.totalorder %s26, %s29
      %p35 = scmp.eq.s32.totalorder %s16, 0
      %p36 = por %p34, %p35
      %p37 = scmp.ne.s32.totalorder %s26, %s29
      %p38 = scmp.eq.s32.totalorder %s21, 1
      %p39 = por %p37, %p38
      %p40 = scmp.ne.s32.totalorder %s29, %s30
      %p41 = scmp.eq.s32.totalorder %s21, 0
      %p42 = por %p40, %p41
      %p43 = scmp.ne.s32.totalorder %s29, %s30
      %p44 = scmp.eq.s32.totalorder %s22, 1
      %p45 = por %p43, %p44
      %p47 = scmp.ne.s32.totalorder %s30, %s46
      %p48 = scmp.eq.s32.totalorder %s22, 0
      %p49 = por %p47, %p48
      %s51 = sadd.s32 %s50, 1
      %p54 = scmp.eq.s32.totalorder %s16, 1
      %p55 = scmp.ne.s32.totalorder %s50, %s52
      %p56 = scmp.eq.s32.totalorder %s16, 0
      %p57 = por %p55, %p56
      %p58 = scmp.ne.s32.totalorder %s50, %s52
      %p59 = scmp.eq.s32.totalorder %s21, 1
      %p60 = por %p58, %p59
      %p61 = scmp.ne.s32.totalorder %s52, %s53
      %p62 = scmp.eq.s32.totalorder %s21, 0
      %p63 = por %p61, %p62
      %p64 = scmp.ne.s32.totalorder %s52, %s53
      %p65 = scmp.eq.s32.totalorder %s22, 1
      %p66 = por %p64, %p65
      %p68 = scmp.ne.s32.totalorder %s53, %s67
      %p69 = scmp.eq.s32.totalorder %s22, 0
      %p70 = por %p68, %p69
      %s72 = sadd.s32 %s71, 1
      %p75 = scmp.eq.s32.totalorder %s16, 1
      %p76 = scmp.ne.s32.totalorder %s71, %s73
      %p77 = scmp.eq.s32.totalorder %s16, 0
      %p78 = por %p76, %p77
      %p79 = scmp.ne.s32.totalorder %s71, %s73
      %p80 = scmp.eq.s32.totalorder %s21, 1
      %p81 = por %p79, %p80
      %p82 = scmp.ne.s32.totalorder %s73, %s74
      %p83 = scmp.eq.s32.totalorder %s21, 0
      %p84 = por %p82, %p83
      %p85 = scmp.ne.s32.totalorder %s73, %s74
      %p86 = scmp.eq.s32.totalorder %s22, 1
      %p87 = por %p85, %p86
      %p89 = scmp.ne.s32.totalorder %s74, %s88
      %p90 = scmp.eq.s32.totalorder %s22, 0
      %p91 = por %p89, %p90
      %s92 = ssub.s32 %s16, %s23
      %p93 = scmp.eq.s32.totalorder %s92, 0
      %s95 = sadd.s32 %s94, 1
      %s96 = scalar_select %p93, %s94, %s95
      %p99 = pneg %p93
      %p100 = scmp.eq.s32.totalorder %s16, 1
      %p101 = por %p99, %p100
      %p102 = scmp.ne.s32.totalorder %s94, %s97
      %p103 = scmp.eq.s32.totalorder %s16, 0
      %p104 = por %p102, %p103
      %p105 = scmp.ne.s32.totalorder %s94, %s97
      %p106 = scmp.eq.s32.totalorder %s21, 1
      %p107 = por %p105, %p106
      %p108 = scmp.ne.s32.totalorder %s97, %s98
      %p109 = scmp.eq.s32.totalorder %s21, 0
      %p110 = por %p108, %p109
      %p111 = scmp.ne.s32.totalorder %s97, %s98
      %p112 = scmp.eq.s32.totalorder %s22, 1
      %p113 = por %p111, %p112
      %p115 = scmp.ne.s32.totalorder %s98, %s114
      %p116 = scmp.eq.s32.totalorder %s22, 0
      %p117 = por %p115, %p116
      %p118 = scmp.le.s32.totalorder 1, %s16
      %p119 = scmp.lt.s32.totalorder %s16, 3
      %p120 = pnand %p118, %p119
      %p121 = pneg %p120
      // Predicated region
      $region9: #{downsample3d_conv.1} parent=5 // pred_check
        _
      $region10: #{downsample3d_conv.1} parent=5 // pred_check_branch
        %123 = sbr.rel (%p120) target = $region12
      $region11: #{downsample3d_conv.1} parent=5 // pred_region
        %s124 = ssub.s32 %s16, 1
        // Predicated region
        $region13: #{downsample3d_conv.1} parent=11 // pred_check
          %p125 = pneg %p63
        $region14: #{downsample3d_conv.1} parent=11 // pred_check_branch
          %127 = sbr.rel (%p125) target = $region16
        $region15: #{downsample3d_conv.1} parent=11 // pred_region
          %s129 = ssub.s32 576, 576
          %130 = vsyncadd [#allocation7], %s129
          %s131 = sshll.u32 [#allocation6], 4
          %s132 = int_to_ptr.vmem [resolvable:$true] %s131
          %137 = dma.hbm_to_vmem [thread:$0]  %s1, 576, %s132, [#allocation7], 64, 64, 4
        $region16: #{downsample3d_conv.1} parent=11 // pred_fallthru
          _
        // Predicated region
        $region17: #{downsample3d_conv.1} parent=11 // pred_check
          %p138 = pneg %p84
        $region18: #{downsample3d_conv.1} parent=11 // pred_check_branch
          %140 = sbr.rel (%p138) target = $region20
        $region19: #{downsample3d_conv.1} parent=11 // pred_region
          %s142 = ssub.s32 16, 16
          %143 = vsyncadd [#allocation7], %s142
          %s145 = sshll.u32 [#allocation8], 4
          %s146 = int_to_ptr.vmem [resolvable:$true] %s145
          %148 = dma.hbm_to_vmem [thread:$0]  %s2, 16, %s146, [#allocation7]
        $region20: #{downsample3d_conv.1} parent=11 // pred_fallthru
          _
      $region12: #{downsample3d_conv.1} parent=5 // pred_fallthru
        _
      %p149 = scmp.lt.s32.totalorder %s16, 2
      // Predicated region
      $region21: #{downsample3d_conv.1} parent=5 // pred_check
        %p150 = pneg %p149
      $region22: #{downsample3d_conv.1} parent=5 // pred_check_branch
        %152 = sbr.rel (%p150) target = $region24
      $region23: #{downsample3d_conv.1} parent=5 // pred_region
        // Predicated region
        $region25: #{downsample3d_conv.1} parent=23 // pred_check
          %p153 = pneg %p36
        $region26: #{downsample3d_conv.1} parent=23 // pred_check_branch
          %155 = sbr.rel (%p153) target = $region28
        $region27: #{downsample3d_conv.1} parent=23 // pred_region
          %s156 = sand.u32 %s26, 1
          %s157 = scalar_lea.sflag [#allocation4], %s156
          %s158 = sand.u32 %s26, 1
          %s159 = smul.addr %s158, 256
          %s160 = scalar_lea.vmem [#allocation3], %s159
          %s162 = ssub.s32 4096, 4096
          %163 = vsyncadd %s157, %s162
          %s164 = smul.addr %s16, 32
          %s165 = smul.addr %s164, 128
          %s166 = scalar_lea.hbm %s0, %s165
          %s167 = sshll.u32 %s160, 4
          %s168 = int_to_ptr.vmem [resolvable:$true] %s167
          %173 = dma.hbm_to_vmem [thread:$0]  %s166, 4096, %s168, %s157, 128, 128, 8
        $region28: #{downsample3d_conv.1} parent=23 // pred_fallthru
          _
      $region24: #{downsample3d_conv.1} parent=5 // pred_fallthru
        _
      %p174 = scmp.le.s32.totalorder 1, %s16
      %p175 = scmp.lt.s32.totalorder %s16, 3
      %p176 = pnand %p174, %p175
      %p177 = pneg %p176
      // Predicated region
      $region29: #{downsample3d_conv.1} parent=5 // pred_check
        _
      $region30: #{downsample3d_conv.1} parent=5 // pred_check_branch
        %179 = sbr.rel (%p176) target = $region32
      $region31: #{downsample3d_conv.1} parent=5 // pred_region
        %s180 = ssub.s32 %s16, 1
        %s181 = sand.u32 %s29, 1
        %s182 = scalar_lea.sflag [#allocation4], %s181
        %s183 = sand.u32 %s29, 1
        %s184 = smul.addr %s183, 256
        %s185 = scalar_lea.vmem [#allocation3], %s184
        // Predicated region
        $region33: #{downsample3d_conv.1} parent=31 // pred_check
          %p186 = pneg %p42
        $region34: #{downsample3d_conv.1} parent=31 // pred_check_branch
          %188 = sbr.rel (%p186) target = $region36
        $region35: #{downsample3d_conv.1} parent=31 // pred_region
          %189 = dma.done %s182, 4096
        $region36: #{downsample3d_conv.1} parent=31 // pred_fallthru
          _
        // Predicated region
        $region37: #{downsample3d_conv.1} parent=31 // pred_check
          %p190 = pneg %p63
        $region38: #{downsample3d_conv.1} parent=31 // pred_check_branch
          %192 = sbr.rel (%p190) target = $region40
        $region39: #{downsample3d_conv.1} parent=31 // pred_region
          %193 = dma.done [#allocation7], 576
        $region40: #{downsample3d_conv.1} parent=31 // pred_fallthru
          _
        // Predicated region
        $region41: #{downsample3d_conv.1} parent=31 // pred_check
          %p194 = pneg %p84
        $region42: #{downsample3d_conv.1} parent=31 // pred_check_branch
          %196 = sbr.rel (%p194) target = $region44
        $region43: #{downsample3d_conv.1} parent=31 // pred_region
          %197 = dma.done [#allocation7], 16
        $region44: #{downsample3d_conv.1} parent=31 // pred_fallthru
          _
        %s198 = sand.u32 %s29, 1
        %s199 = scalar_lea.sflag [#allocation4], %s198
        %s200 = sand.u32 %s29, 1
        %s201 = smul.addr %s200, 256
        %s202 = scalar_lea.vmem [#allocation3], %s201
        %p203 = pneg %p42
        %p204 = pneg %p39
        %p205 = pneg %p63
        %p206 = pneg %p60
        %p207 = pneg %p84
        %p208 = pneg %p81
        %p209 = pneg %p110
        %p210 = pneg %p107
        %s211 = sand.u32 %s97, 1
        %s212 = scalar_lea.sflag [#allocation5], %s211
        %s213 = sand.u32 %s97, 1
        %s214 = smul.addr %s213, 256
        %s215 = scalar_lea.vmem [#allocation9], %s214
        %vm216 = vcmask 31744
        %217 = vst.msk [vmem:[#allocation2] sm:$0xff] %vm216, 0.0
        %218 = vst.msk [vmem:[#allocation2 + $0x8] sm:$0xff] %vm216, 0.0
        %vm219 = vcmask 25600
        %220 = vst.msk [vmem:[#allocation2 + $0x10] sm:$0x3] %vm219, 0.0
        %221 = vst.msk [vmem:[#allocation2 + $0x18] sm:$0xff] %vm216, 0.0
        %222 = vst.msk [vmem:[#allocation2 + $0x20] sm:$0xff] %vm216, 0.0
        %223 = vst.msk [vmem:[#allocation2 + $0x28] sm:$0x3] %vm219, 0.0
        %224 = vst.msk [vmem:[#allocation2 + $0x30] sm:$0xff] %vm216, 0.0
        %225 = vst.msk [vmem:[#allocation2 + $0x38] sm:$0xff] %vm216, 0.0
        %226 = vst.msk [vmem:[#allocation2 + $0x40] sm:$0x3] %vm219, 0.0
        %227 = vst.msk [vmem:[#allocation2 + $0x48] sm:$0xff] %vm216, 0.0
        %228 = vst.msk [vmem:[#allocation2 + $0x50] sm:$0xff] %vm216, 0.0
        %229 = vst.msk [vmem:[#allocation2 + $0x58] sm:$0x3] %vm219, 0.0
        %230 = vst.msk [vmem:[#allocation2 + $0x60] sm:$0xff] %vm216, 0.0
        %231 = vst.msk [vmem:[#allocation2 + $0x68] sm:$0xff] %vm216, 0.0
        %232 = vst.msk [vmem:[#allocation2 + $0x70] sm:$0x3] %vm219, 0.0
        %233 = vst.msk [vmem:[#allocation2 + $0x78] sm:$0xff] %vm216, 0.0
        %234 = vst.msk [vmem:[#allocation2 + $0x80] sm:$0xff] %vm216, 0.0
        %235 = vst.msk [vmem:[#allocation2 + $0x88] sm:$0x3] %vm219, 0.0
        %236 = vst.msk [vmem:[#allocation2 + $0x90] sm:$0xff] %vm216, 0.0
        %237 = vst.msk [vmem:[#allocation2 + $0x98] sm:$0xff] %vm216, 0.0
        %238 = vst.msk [vmem:[#allocation2 + $0xa0] sm:$0x3] %vm219, 0.0
        %239 = vst.msk [vmem:[#allocation2 + $0xa8] sm:$0xff] %vm216, 0.0
        %240 = vst.msk [vmem:[#allocation2 + $0xb0] sm:$0xff] %vm216, 0.0
        %241 = vst.msk [vmem:[#allocation2 + $0xb8] sm:$0x3] %vm219, 0.0
        %242 = vst.msk [vmem:[#allocation2 + $0xc0] sm:$0xff] %vm216, 0.0
        %243 = vst.msk [vmem:[#allocation2 + $0xc8] sm:$0xff] %vm216, 0.0
        %244 = vst.msk [vmem:[#allocation2 + $0xd0] sm:$0x3] %vm219, 0.0
        %245 = vst.msk [vmem:[#allocation2 + $0xd8] sm:$0xff] %vm216, 0.0
        %246 = vst.msk [vmem:[#allocation2 + $0xe0] sm:$0xff] %vm216, 0.0
        %247 = vst.msk [vmem:[#allocation2 + $0xe8] sm:$0x3] %vm219, 0.0
        %248 = vst.msk [vmem:[#allocation2 + $0xf0] sm:$0xff] %vm216, 0.0
        %249 = vst.msk [vmem:[#allocation2 + $0xf8] sm:$0xff] %vm216, 0.0
        %250 = vst.msk [vmem:[#allocation2 + $0x100] sm:$0x3] %vm219, 0.0
        %251 = vst.msk [vmem:[#allocation2 + $0x108] sm:$0xff] %vm216, 0.0
        %252 = vst.msk [vmem:[#allocation2 + $0x110] sm:$0xff] %vm216, 0.0
        %253 = vst.msk [vmem:[#allocation2 + $0x118] sm:$0x3] %vm219, 0.0
        %254 = vst.msk [vmem:[#allocation2 + $0x120] sm:$0xff] %vm216, 0.0
        %255 = vst.msk [vmem:[#allocation2 + $0x128] sm:$0xff] %vm216, 0.0
        %256 = vst.msk [vmem:[#allocation2 + $0x130] sm:$0x3] %vm219, 0.0
        %257 = vst.msk [vmem:[#allocation2 + $0x138] sm:$0xff] %vm216, 0.0
        %258 = vst.msk [vmem:[#allocation2 + $0x140] sm:$0xff] %vm216, 0.0
        %259 = vst.msk [vmem:[#allocation2 + $0x148] sm:$0x3] %vm219, 0.0
        %260 = vst.msk [vmem:[#allocation2 + $0x150] sm:$0xff] %vm216, 0.0
        %261 = vst.msk [vmem:[#allocation2 + $0x158] sm:$0xff] %vm216, 0.0
        %262 = vst.msk [vmem:[#allocation2 + $0x160] sm:$0x3] %vm219, 0.0
        %263 = vst.msk [vmem:[#allocation2 + $0x168] sm:$0xff] %vm216, 0.0
        %264 = vst.msk [vmem:[#allocation2 + $0x170] sm:$0xff] %vm216, 0.0
        %265 = vst.msk [vmem:[#allocation2 + $0x178] sm:$0x3] %vm219, 0.0
        %266 = vst.msk [vmem:[#allocation2 + $0x180] sm:$0xff] %vm216, 0.0
        %267 = vst.msk [vmem:[#allocation2 + $0x188] sm:$0xff] %vm216, 0.0
        %268 = vst.msk [vmem:[#allocation2 + $0x190] sm:$0x3] %vm219, 0.0
        %269 = vst.msk [vmem:[#allocation2 + $0x198] sm:$0xff] %vm216, 0.0
        %270 = vst.msk [vmem:[#allocation2 + $0x1a0] sm:$0xff] %vm216, 0.0
        %271 = vst.msk [vmem:[#allocation2 + $0x1a8] sm:$0x3] %vm219, 0.0
        %v272 = vld [vmem:[%s185] sm:$0xff]
        %v273 = vld [vmem:[%s185 + $0x8] sm:$0xff]
        %v274 = vld [vmem:[%s185 + $0x10] sm:$0xff]
        %v275 = vld [vmem:[%s185 + $0x18] sm:$0xff]
        %v276 = vld [vmem:[%s185 + $0x20] sm:$0xff]
        %v277 = vld [vmem:[%s185 + $0x28] sm:$0xff]
        %v278 = vld [vmem:[%s185 + $0x30] sm:$0xff]
        %v279 = vld [vmem:[%s185 + $0x38] sm:$0xff]
        %v280 = vld [vmem:[%s185 + $0x40] sm:$0xff]
        %v281 = vld [vmem:[%s185 + $0x48] sm:$0xff]
        %v282 = vld [vmem:[%s185 + $0x50] sm:$0xff]
        %v283 = vld [vmem:[%s185 + $0x58] sm:$0xff]
        %v284 = vld [vmem:[%s185 + $0x60] sm:$0xff]
        %v285 = vld [vmem:[%s185 + $0x68] sm:$0xff]
        %v286 = vld [vmem:[%s185 + $0x70] sm:$0xff]
        %v287 = vld [vmem:[%s185 + $0x78] sm:$0xff]
        %v288 = vld [vmem:[%s185 + $0x80] sm:$0xff]
        %v289 = vld [vmem:[%s185 + $0x88] sm:$0xff]
        %v290 = vld [vmem:[%s185 + $0x90] sm:$0xff]
        %v291 = vld [vmem:[%s185 + $0x98] sm:$0xff]
        %v292 = vld [vmem:[%s185 + $0xa0] sm:$0xff]
        %v293 = vld [vmem:[%s185 + $0xa8] sm:$0xff]
        %v294 = vld [vmem:[%s185 + $0xb0] sm:$0xff]
        %v295 = vld [vmem:[%s185 + $0xb8] sm:$0xff]
        %v296 = vld [vmem:[%s185 + $0xc0] sm:$0xff]
        %v297 = vld [vmem:[%s185 + $0xc8] sm:$0xff]
        %v298 = vld [vmem:[%s185 + $0xd0] sm:$0xff]
        %v299 = vld [vmem:[%s185 + $0xd8] sm:$0xff]
        %v300 = vld [vmem:[%s185 + $0xe0] sm:$0xff]
        %v301 = vld [vmem:[%s185 + $0xe8] sm:$0xff]
        %v302 = vld [vmem:[%s185 + $0xf0] sm:$0xff]
        %v303 = vld [vmem:[%s185 + $0xf8] sm:$0xff]
        %s304 = scalar_lea.vmem [#allocation2], 24
        %305 = vst.msk [vmem:[%s304 + $0x1] sm:$0xff] %vm216, %v272
        %306 = vst.msk [vmem:[%s304 + $0x9] sm:$0xff] %vm216, %v273
        %307 = vst.msk [vmem:[%s304 + $0x19] sm:$0xff] %vm216, %v274
        %308 = vst.msk [vmem:[%s304 + $0x21] sm:$0xff] %vm216, %v275
        %309 = vst.msk [vmem:[%s304 + $0x31] sm:$0xff] %vm216, %v276
        %310 = vst.msk [vmem:[%s304 + $0x39] sm:$0xff] %vm216, %v277
        %311 = vst.msk [vmem:[%s304 + $0x49] sm:$0xff] %vm216, %v278
        %312 = vst.msk [vmem:[%s304 + $0x51] sm:$0xff] %vm216, %v279
        %313 = vst.msk [vmem:[%s304 + $0x61] sm:$0xff] %vm216, %v280
        %314 = vst.msk [vmem:[%s304 + $0x69] sm:$0xff] %vm216, %v281
        %315 = vst.msk [vmem:[%s304 + $0x79] sm:$0xff] %vm216, %v282
        %316 = vst.msk [vmem:[%s304 + $0x81] sm:$0xff] %vm216, %v283
        %317 = vst.msk [vmem:[%s304 + $0x91] sm:$0xff] %vm216, %v284
        %318 = vst.msk [vmem:[%s304 + $0x99] sm:$0xff] %vm216, %v285
        %319 = vst.msk [vmem:[%s304 + $0xa9] sm:$0xff] %vm216, %v286
        %320 = vst.msk [vmem:[%s304 + $0xb1] sm:$0xff] %vm216, %v287
        %321 = vst.msk [vmem:[%s304 + $0xc1] sm:$0xff] %vm216, %v288
        %322 = vst.msk [vmem:[%s304 + $0xc9] sm:$0xff] %vm216, %v289
        %323 = vst.msk [vmem:[%s304 + $0xd9] sm:$0xff] %vm216, %v290
        %324 = vst.msk [vmem:[%s304 + $0xe1] sm:$0xff] %vm216, %v291
        %325 = vst.msk [vmem:[%s304 + $0xf1] sm:$0xff] %vm216, %v292
        %326 = vst.msk [vmem:[%s304 + $0xf9] sm:$0xff] %vm216, %v293
        %327 = vst.msk [vmem:[%s304 + $0x109] sm:$0xff] %vm216, %v294
        %328 = vst.msk [vmem:[%s304 + $0x111] sm:$0xff] %vm216, %v295
        %329 = vst.msk [vmem:[%s304 + $0x121] sm:$0xff] %vm216, %v296
        %330 = vst.msk [vmem:[%s304 + $0x129] sm:$0xff] %vm216, %v297
        %331 = vst.msk [vmem:[%s304 + $0x139] sm:$0xff] %vm216, %v298
        %332 = vst.msk [vmem:[%s304 + $0x141] sm:$0xff] %vm216, %v299
        %333 = vst.msk [vmem:[%s304 + $0x151] sm:$0xff] %vm216, %v300
        %334 = vst.msk [vmem:[%s304 + $0x159] sm:$0xff] %vm216, %v301
        %335 = vst.msk [vmem:[%s304 + $0x169] sm:$0xff] %vm216, %v302
        %336 = vst.msk [vmem:[%s304 + $0x171] sm:$0xff] %vm216, %v303
        %v337 = vld [vmem:[#allocation2] sm:$0xff]
        %v338 = vld [vmem:[#allocation2 + $0x8] sm:$0xff]
        %v339 = vld [vmem:[#allocation2 + $0x18] sm:$0xff]
        %v340 = vld [vmem:[#allocation2 + $0x20] sm:$0xff]
        %v341 = vld [vmem:[#allocation2 + $0x30] sm:$0xff]
        %v342 = vld [vmem:[#allocation2 + $0x38] sm:$0xff]
        %v343 = vld [vmem:[#allocation2 + $0x48] sm:$0xff]
        %v344 = vld [vmem:[#allocation2 + $0x50] sm:$0xff]
        %v345 = vld [vmem:[#allocation2 + $0x60] sm:$0xff]
        %v346 = vld [vmem:[#allocation2 + $0x68] sm:$0xff]
        %v347 = vld [vmem:[#allocation2 + $0x78] sm:$0xff]
        %v348 = vld [vmem:[#allocation2 + $0x80] sm:$0xff]
        %v349 = vld [vmem:[#allocation2 + $0x90] sm:$0xff]
        %v350 = vld [vmem:[#allocation2 + $0x98] sm:$0xff]
        %v351 = vld [vmem:[#allocation2 + $0xa8] sm:$0xff]
        %v352 = vld [vmem:[#allocation2 + $0xb0] sm:$0xff]
        %v353 = vld [vmem:[#allocation2 + $0xc0] sm:$0xff]
        %v354 = vld [vmem:[#allocation2 + $0xc8] sm:$0xff]
        %v355 = vld [vmem:[#allocation2 + $0xd8] sm:$0xff]
        %v356 = vld [vmem:[#allocation2 + $0xe0] sm:$0xff]
        %v357 = vld [vmem:[#allocation2 + $0xf0] sm:$0xff]
        %v358 = vld [vmem:[#allocation2 + $0xf8] sm:$0xff]
        %v359 = vld [vmem:[#allocation2 + $0x108] sm:$0xff]
        %v360 = vld [vmem:[#allocation2 + $0x110] sm:$0xff]
        %v361 = vld [vmem:[#allocation2 + $0x120] sm:$0xff]
        %v362 = vld [vmem:[#allocation2 + $0x128] sm:$0xff]
        %v363 = vld [vmem:[#allocation2 + $0x138] sm:$0xff]
        %v364 = vld [vmem:[#allocation2 + $0x140] sm:$0xff]
        %v365 = vld [vmem:[#allocation2 + $0x150] sm:$0xff]
        %v366 = vld [vmem:[#allocation2 + $0x158] sm:$0xff]
        %v367 = vld [vmem:[#allocation2 + $0x168] sm:$0xff]
        %v368 = vld [vmem:[#allocation2 + $0x170] sm:$0xff]
        %v369 = vld [vmem:[#allocation6] sm:$0xf]
        %v370 = vld [vmem:[#allocation2 + $0x1] sm:$0xff]
        %v371 = vld [vmem:[#allocation2 + $0x9] sm:$0xff]
        %v372 = vld [vmem:[#allocation2 + $0x19] sm:$0xff]
        %v373 = vld [vmem:[#allocation2 + $0x21] sm:$0xff]
        %v374 = vld [vmem:[#allocation2 + $0x31] sm:$0xff]
        %v375 = vld [vmem:[#allocation2 + $0x39] sm:$0xff]
        %v376 = vld [vmem:[#allocation2 + $0x49] sm:$0xff]
        %v377 = vld [vmem:[#allocation2 + $0x51] sm:$0xff]
        %v378 = vld [vmem:[#allocation2 + $0x61] sm:$0xff]
        %v379 = vld [vmem:[#allocation2 + $0x69] sm:$0xff]
        %v380 = vld [vmem:[#allocation2 + $0x79] sm:$0xff]
        %v381 = vld [vmem:[#allocation2 + $0x81] sm:$0xff]
        %v382 = vld [vmem:[#allocation2 + $0x91] sm:$0xff]
        %v383 = vld [vmem:[#allocation2 + $0x99] sm:$0xff]
        %v384 = vld [vmem:[#allocation2 + $0xa9] sm:$0xff]
        %v385 = vld [vmem:[#allocation2 + $0xb1] sm:$0xff]
        %v386 = vld [vmem:[#allocation2 + $0xc1] sm:$0xff]
        %v387 = vld [vmem:[#allocation2 + $0xc9] sm:$0xff]
        %v388 = vld [vmem:[#allocation2 + $0xd9] sm:$0xff]
        %v389 = vld [vmem:[#allocation2 + $0xe1] sm:$0xff]
        %v390 = vld [vmem:[#allocation2 + $0xf1] sm:$0xff]
        %v391 = vld [vmem:[#allocation2 + $0xf9] sm:$0xff]
        %v392 = vld [vmem:[#allocation2 + $0x109] sm:$0xff]
        %v393 = vld [vmem:[#allocation2 + $0x111] sm:$0xff]
        %v394 = vld [vmem:[#allocation2 + $0x121] sm:$0xff]
        %v395 = vld [vmem:[#allocation2 + $0x129] sm:$0xff]
        %v396 = vld [vmem:[#allocation2 + $0x139] sm:$0xff]
        %v397 = vld [vmem:[#allocation2 + $0x141] sm:$0xff]
        %v398 = vld [vmem:[#allocation2 + $0x151] sm:$0xff]
        %v399 = vld [vmem:[#allocation2 + $0x159] sm:$0xff]
        %v400 = vld [vmem:[#allocation2 + $0x169] sm:$0xff]
        %v401 = vld [vmem:[#allocation2 + $0x171] sm:$0xff]
        %s402 = scalar_lea.vmem [#allocation6], 4
        %v403 = vld [vmem:[%s402] sm:$0xf]
        %v405 = vsel %vm216, %v370, 0
        %v408 = vsel %vm216, %v371, 0
        %v411 = vsel %vm216, %v372, 0
        %v414 = vsel %vm216, %v373, 0
        %v417 = vsel %vm216, %v374, 0
        %v420 = vsel %vm216, %v375, 0
        %v423 = vsel %vm216, %v376, 0
        %v426 = vsel %vm216, %v377, 0
        %v429 = vsel %vm216, %v378, 0
        %v432 = vsel %vm216, %v379, 0
        %v435 = vsel %vm216, %v380, 0
        %v438 = vsel %vm216, %v381, 0
        %v441 = vsel %vm216, %v382, 0
        %v444 = vsel %vm216, %v383, 0
        %v447 = vsel %vm216, %v384, 0
        %v450 = vsel %vm216, %v385, 0
        %v453 = vsel %vm216, %v386, 0
        %v456 = vsel %vm216, %v387, 0
        %v459 = vsel %vm216, %v388, 0
        %v462 = vsel %vm216, %v389, 0
        %v465 = vsel %vm216, %v390, 0
        %v468 = vsel %vm216, %v391, 0
        %v471 = vsel %vm216, %v392, 0
        %v474 = vsel %vm216, %v393, 0
        %v477 = vsel %vm216, %v394, 0
        %v480 = vsel %vm216, %v395, 0
        %v483 = vsel %vm216, %v396, 0
        %v486 = vsel %vm216, %v397, 0
        %v489 = vsel %vm216, %v398, 0
        %v492 = vsel %vm216, %v399, 0
        %v495 = vsel %vm216, %v400, 0
        %v498 = vsel %vm216, %v401, 0
        %vm500 = vcmask 1043456
        %v502 = vsel %vm500, %v403, 0
        %504 = vmatprep.subr.mxu0 0.0
        %505 = vmatpush1.msra.mxu0 %v502
        %506 = vmatprep.subr.mxu0 0.0
        %507 = vmatpush1.msra.mxu0 0.0
        %508 = vmatprep.subr.mxu0 0.0
        %509 = vmatpush1.msra.mxu0 0.0
        %510 = vmatprep.subr.mxu0 0.0
        %511 = vmatpush1.msra.mxu0 0.0
        %512 = vmatprep.subr.mxu0 0.0
        %513 = vmatpush1.msra.mxu0 0.0
        %514 = vmatprep.subr.mxu0 0.0
        %515 = vmatpush1.msra.mxu0 0.0
        %516 = vmatprep.subr.mxu0 0.0
        %517 = vmatpush1.msra.mxu0 0.0
        %518 = vmatprep.subr.mxu0 0.0
        %519 = vmatpush1.msra.mxu0 0.0
        %520 = vmatprep.subr.mxu0 0.0
        %521 = vmatpush1.msra.mxu0 0.0
        %522 = vmatprep.subr.mxu0 0.0
        %523 = vmatpush1.msra.mxu0 0.0
        %524 = vmatprep.subr.mxu0 0.0
        %525 = vmatpush1.msra.mxu0 0.0
        %526 = vmatprep.subr.mxu0 0.0
        %527 = vmatpush1.msra.mxu0 0.0
        %528 = vmatprep.subr.mxu0 0.0
        %529 = vmatpush1.msra.mxu0 0.0
        %530 = vmatprep.subr.mxu0 0.0
        %531 = vmatpush1.msra.mxu0 0.0
        %532 = vmatprep.subr.mxu0 0.0
        %533 = vmatpush1.msra.mxu0 0.0
        %534 = vmatprep.subr.mxu0 0.0
        %535 = vmatpush1.msra.mxu0 0.0
        %536 = vmatprep.subr.mxu0 0.0
        %537 = vmatpush1.msra.mxu0 0.0
        %538 = vmatprep.subr.mxu0 0.0
        %539 = vmatpush1.msra.mxu0 0.0
        %540 = vmatprep.subr.mxu0 0.0
        %541 = vmatpush1.msra.mxu0 0.0
        %542 = vmatprep.subr.mxu0 0.0
        %543 = vmatpush1.msra.mxu0 0.0
        %544 = vmatprep.subr.mxu0 0.0
        %545 = vmatpush1.msra.mxu0 0.0
        %546 = vmatprep.subr.mxu0 0.0
        %547 = vmatpush1.msra.mxu0 0.0
        %548 = vmatprep.subr.mxu0 0.0
        %549 = vmatpush1.msra.mxu0 0.0
        %550 = vmatprep.subr.mxu0 0.0
        %551 = vmatpush1.msra.mxu0 0.0
        %552 = vmatprep.subr.mxu0 0.0
        %553 = vmatpush1.msra.mxu0 0.0
        %554 = vmatprep.subr.mxu0 0.0
        %555 = vmatpush1.msra.mxu0 0.0
        %556 = vmatprep.subr.mxu0 0.0
        %557 = vmatpush1.msra.mxu0 0.0
        %558 = vmatprep.subr.mxu0 0.0
        %559 = vmatpush1.msra.mxu0 0.0
        %560 = vmatprep.subr.mxu0 0.0
        %561 = vmatpush1.msra.mxu0 0.0
        %562 = vmatprep.subr.mxu0 0.0
        %563 = vmatpush1.msra.mxu0 0.0
        %564 = vmatprep.subr.mxu0 0.0
        %565 = vmatpush1.msra.mxu0 0.0
        %566 = vmatprep.subr.mxu0 0.0
        %567 = vmatpush1.msra.mxu0 0.0
        %568 = vmatprep.mubr.f32.mxu0 0.0
        %569 = vmatmul.mubr.f32.gmra.mrb[0].mxu0 %v405
        %v570 = vpop.f32.mrb[0].mxu0
        %v571 = vadd.f32 0.0, %v570
        %v572 = vpop.f32.mrb[0].mxu0
        %573 = vmatprep.mubr.f32.mxu0 0.0
        %574 = vmatmul.mubr.f32.gmra.mrb[0].mxu0 %v408
        %v575 = vpop.f32.mrb[0].mxu0
        %v576 = vadd.f32 0.0, %v575
        %v577 = vpop.f32.mrb[0].mxu0
        %578 = vmatprep.mubr.f32.mxu0 0.0
        %579 = vmatmul.mubr.f32.gmra.mrb[0].mxu0 %v411
        %v580 = vpop.f32.mrb[0].mxu0
        %v581 = vadd.f32 0.0, %v580
        %v582 = vpop.f32.mrb[0].mxu0
        %583 = vmatprep.mubr.f32.mxu0 0.0
        %584 = vmatmul.mubr.f32.gmra.mrb[0].mxu0 %v414
        %v585 = vpop.f32.mrb[0].mxu0
        %v586 = vadd.f32 0.0, %v585
        %v587 = vpop.f32.mrb[0].mxu0
        %588 = vmatprep.mubr.f32.mxu0 0.0
        %589 = vmatmul.mubr.f32.gmra.mrb[0].mxu0 %v417
        %v590 = vpop.f32.mrb[0].mxu0
        %v591 = vadd.f32 0.0, %v590
        %v592 = vpop.f32.mrb[0].mxu0
        %593 = vmatprep.mubr.f32.mxu0 0.0
        %594 = vmatmul.mubr.f32.gmra.mrb[0].mxu0 %v420
        %v595 = vpop.f32.mrb[0].mxu0
        %v596 = vadd.f32 0.0, %v595
        %v597 = vpop.f32.mrb[0].mxu0
        %598 = vmatprep.mubr.f32.mxu0 0.0
        %599 = vmatmul.mubr.f32.gmra.mrb[0].mxu0 %v423
        %v600 = vpop.f32.mrb[0].mxu0
        %v601 = vadd.f32 0.0, %v600
        %v602 = vpop.f32.mrb[0].mxu0
        %603 = vmatprep.mubr.f32.mxu0 0.0
        %604 = vmatmul.mubr.f32.gmra.mrb[0].mxu0 %v426
        %v605 = vpop.f32.mrb[0].mxu0
        %v606 = vadd.f32 0.0, %v605
        %v607 = vpop.f32.mrb[0].mxu0
        %608 = vmatprep.mubr.f32.mxu0 0.0
        %609 = vmatmul.mubr.f32.gmra.mrb[0].mxu0 %v429
        %v610 = vpop.f32.mrb[0].mxu0
        %v611 = vadd.f32 0.0, %v610
        %v612 = vpop.f32.mrb[0].mxu0
        %613 = vmatprep.mubr.f32.mxu0 0.0
        %614 = vmatmul.mubr.f32.gmra.mrb[0].mxu0 %v432
        %v615 = vpop.f32.mrb[0].mxu0
        %v616 = vadd.f32 0.0, %v615
        %v617 = vpop.f32.mrb[0].mxu0
        %618 = vmatprep.mubr.f32.mxu0 0.0
        %619 = vmatmul.mubr.f32.gmra.mrb[0].mxu0 %v435
        %v620 = vpop.f32.mrb[0].mxu0
        %v621 = vadd.f32 0.0, %v620
        %v622 = vpop.f32.mrb[0].mxu0
        %623 = vmatprep.mubr.f32.mxu0 0.0
        %624 = vmatmul.mubr.f32.gmra.mrb[0].mxu0 %v438
        %v625 = vpop.f32.mrb[0].mxu0
        %v626 = vadd.f32 0.0, %v625
        %v627 = vpop.f32.mrb[0].mxu0
        %628 = vmatprep.mubr.f32.mxu0 0.0
        %629 = vmatmul.mubr.f32.gmra.mrb[0].mxu0 %v441
        %v630 = vpop.f32.mrb[0].mxu0
        %v631 = vadd.f32 0.0, %v630
        %v632 = vpop.f32.mrb[0].mxu0
        %633 = vmatprep.mubr.f32.mxu0 0.0
        %634 = vmatmul.mubr.f32.gmra.mrb[0].mxu0 %v444
        %v635 = vpop.f32.mrb[0].mxu0
        %v636 = vadd.f32 0.0, %v635
        %v637 = vpop.f32.mrb[0].mxu0
        %638 = vmatprep.mubr.f32.mxu0 0.0
        %639 = vmatmul.mubr.f32.gmra.mrb[0].mxu0 %v447
        %v640 = vpop.f32.mrb[0].mxu0
        %v641 = vadd.f32 0.0, %v640
        %v642 = vpop.f32.mrb[0].mxu0
        %643 = vmatprep.mubr.f32.mxu0 0.0
        %644 = vmatmul.mubr.f32.gmra.mrb[0].mxu0 %v450
        %v645 = vpop.f32.mrb[0].mxu0
        %v646 = vadd.f32 0.0, %v645
        %v647 = vpop.f32.mrb[0].mxu0
        %648 = vmatprep.mubr.f32.mxu0 0.0
        %649 = vmatmul.mubr.f32.gmra.mrb[0].mxu0 %v453
        %v650 = vpop.f32.mrb[0].mxu0
        %v651 = vadd.f32 0.0, %v650
        %v652 = vpop.f32.mrb[0].mxu0
        %653 = vmatprep.mubr.f32.mxu0 0.0
        %654 = vmatmul.mubr.f32.gmra.mrb[0].mxu0 %v456
        %v655 = vpop.f32.mrb[0].mxu0
        %v656 = vadd.f32 0.0, %v655
        %v657 = vpop.f32.mrb[0].mxu0
        %658 = vmatprep.mubr.f32.mxu0 0.0
        %659 = vmatmul.mubr.f32.gmra.mrb[0].mxu0 %v459
        %v660 = vpop.f32.mrb[0].mxu0
        %v661 = vadd.f32 0.0, %v660
        %v662 = vpop.f32.mrb[0].mxu0
        %663 = vmatprep.mubr.f32.mxu0 0.0
        %664 = vmatmul.mubr.f32.gmra.mrb[0].mxu0 %v462
        %v665 = vpop.f32.mrb[0].mxu0
        %v666 = vadd.f32 0.0, %v665
        %v667 = vpop.f32.mrb[0].mxu0
        %668 = vmatprep.mubr.f32.mxu0 0.0
        %669 = vmatmul.mubr.f32.gmra.mrb[0].mxu0 %v465
        %v670 = vpop.f32.mrb[0].mxu0
        %v671 = vadd.f32 0.0, %v670
        %v672 = vpop.f32.mrb[0].mxu0
        %673 = vmatprep.mubr.f32.mxu0 0.0
        %674 = vmatmul.mubr.f32.gmra.mrb[0].mxu0 %v468
        %v675 = vpop.f32.mrb[0].mxu0
        %v676 = vadd.f32 0.0, %v675
        %v677 = vpop.f32.mrb[0].mxu0
        %678 = vmatprep.mubr.f32.mxu0 0.0
        %679 = vmatmul.mubr.f32.gmra.mrb[0].mxu0 %v471
        %v680 = vpop.f32.mrb[0].mxu0
        %v681 = vadd.f32 0.0, %v680
        %v682 = vpop.f32.mrb[0].mxu0
        %683 = vmatprep.mubr.f32.mxu0 0.0
        %684 = vmatmul.mubr.f32.gmra.mrb[0].mxu0 %v474
        %v685 = vpop.f32.mrb[0].mxu0
        %v686 = vadd.f32 0.0, %v685
        %v687 = vpop.f32.mrb[0].mxu0
        %688 = vmatprep.mubr.f32.mxu0 0.0
        %689 = vmatmul.mubr.f32.gmra.mrb[0].mxu0 %v477
        %v690 = vpop.f32.mrb[0].mxu0
        %v691 = vadd.f32 0.0, %v690
        %v692 = vpop.f32.mrb[0].mxu0
        %693 = vmatprep.mubr.f32.mxu0 0.0
        %694 = vmatmul.mubr.f32.gmra.mrb[0].mxu0 %v480
        %v695 = vpop.f32.mrb[0].mxu0
        %v696 = vadd.f32 0.0, %v695
        %v697 = vpop.f32.mrb[0].mxu0
        %698 = vmatprep.mubr.f32.mxu0 0.0
        %699 = vmatmul.mubr.f32.gmra.mrb[0].mxu0 %v483
        %v700 = vpop.f32.mrb[0].mxu0
        %v701 = vadd.f32 0.0, %v700
        %v702 = vpop.f32.mrb[0].mxu0
        %703 = vmatprep.mubr.f32.mxu0 0.0
        %704 = vmatmul.mubr.f32.gmra.mrb[0].mxu0 %v486
        %v705 = vpop.f32.mrb[0].mxu0
        %v706 = vadd.f32 0.0, %v705
        %v707 = vpop.f32.mrb[0].mxu0
        %708 = vmatprep.mubr.f32.mxu0 0.0
        %709 = vmatmul.mubr.f32.gmra.mrb[0].mxu0 %v489
        %v710 = vpop.f32.mrb[0].mxu0
        %v711 = vadd.f32 0.0, %v710
        %v712 = vpop.f32.mrb[0].mxu0
        %713 = vmatprep.mubr.f32.mxu0 0.0
        %714 = vmatmul.mubr.f32.gmra.mrb[0].mxu0 %v492
        %v715 = vpop.f32.mrb[0].mxu0
        %v716 = vadd.f32 0.0, %v715
        %v717 = vpop.f32.mrb[0].mxu0
        %718 = vmatprep.mubr.f32.mxu0 0.0
        %719 = vmatmul.mubr.f32.gmra.mrb[0].mxu0 %v495
        %v720 = vpop.f32.mrb[0].mxu0
        %v721 = vadd.f32 0.0, %v720
        %v722 = vpop.f32.mrb[0].mxu0
        %723 = vmatprep.mubr.f32.mxu0 0.0
        %724 = vmatmul.mubr.f32.gmra.mrb[0].mxu0 %v498
        %v725 = vpop.f32.mrb[0].mxu0
        %v726 = vadd.f32 0.0, %v725
        %v727 = vpop.f32.mrb[0].mxu0
        %728 = vdwg.mxu0
        %v730 = vsel %vm216, %v337, 0
        %v733 = vsel %vm216, %v338, 0
        %v736 = vsel %vm216, %v339, 0
        %v739 = vsel %vm216, %v340, 0
        %v742 = vsel %vm216, %v341, 0
        %v745 = vsel %vm216, %v342, 0
        %v748 = vsel %vm216, %v343, 0
        %v751 = vsel %vm216, %v344, 0
        %v754 = vsel %vm216, %v345, 0
        %v757 = vsel %vm216, %v346, 0
        %v760 = vsel %vm216, %v347, 0
        %v763 = vsel %vm216, %v348, 0
        %v766 = vsel %vm216, %v349, 0
        %v769 = vsel %vm216, %v350, 0
        %v772 = vsel %vm216, %v351, 0
        %v775 = vsel %vm216, %v352, 0
        %v778 = vsel %vm216, %v353, 0
        %v781 = vsel %vm216, %v354, 0
        %v784 = vsel %vm216, %v355, 0
        %v787 = vsel %vm216, %v356, 0
        %v790 = vsel %vm216, %v357, 0
        %v793 = vsel %vm216, %v358, 0
        %v796 = vsel %vm216, %v359, 0
        %v799 = vsel %vm216, %v360, 0
        %v802 = vsel %vm216, %v361, 0
        %v805 = vsel %vm216, %v362, 0
        %v808 = vsel %vm216, %v363, 0
        %v811 = vsel %vm216, %v364, 0
        %v814 = vsel %vm216, %v365, 0
        %v817 = vsel %vm216, %v366, 0
        %v820 = vsel %vm216, %v367, 0
        %v823 = vsel %vm216, %v368, 0
        %v826 = vsel %vm500, %v369, 0
        %828 = vmatprep.subr.mxu0 0.0
        %829 = vmatpush1.msra.mxu0 %v826
        %830 = vmatprep.subr.mxu0 0.0
        %831 = vmatpush1.msra.mxu0 0.0
        %832 = vmatprep.subr.mxu0 0.0
        %833 = vmatpush1.msra.mxu0 0.0
        %834 = vmatprep.subr.mxu0 0.0
        %835 = vmatpush1.msra.mxu0 0.0
        %836 = vmatprep.subr.mxu0 0.0
        %837 = vmatpush1.msra.mxu0 0.0
        %838 = vmatprep.subr.mxu0 0.0
        %839 = vmatpush1.msra.mxu0 0.0
        %840 = vmatprep.subr.mxu0 0.0
        %841 = vmatpush1.msra.mxu0 0.0
        %842 = vmatprep.subr.mxu0 0.0
        %843 = vmatpush1.msra.mxu0 0.0
        %844 = vmatprep.subr.mxu0 0.0
        %845 = vmatpush1.msra.mxu0 0.0
        %846 = vmatprep.subr.mxu0 0.0
        %847 = vmatpush1.msra.mxu0 0.0
        %848 = vmatprep.subr.mxu0 0.0
        %849 = vmatpush1.msra.mxu0 0.0
        %850 = vmatprep.subr.mxu0 0.0
        %851 = vmatpush1.msra.mxu0 0.0
        %852 = vmatprep.subr.mxu0 0.0
        %853 = vmatpush1.msra.mxu0 0.0
        %854 = vmatprep.subr.mxu0 0.0
        %855 = vmatpush1.msra.mxu0 0.0
        %856 = vmatprep.subr.mxu0 0.0
        %857 = vmatpush1.msra.mxu0 0.0
        %858 = vmatprep.subr.mxu0 0.0
        %859 = vmatpush1.msra.mxu0 0.0
        %860 = vmatprep.subr.mxu0 0.0
        %861 = vmatpush1.msra.mxu0 0.0
        %862 = vmatprep.subr.mxu0 0.0
        %863 = vmatpush1.msra.mxu0 0.0
        %864 = vmatprep.subr.mxu0 0.0
        %865 = vmatpush1.msra.mxu0 0.0
        %866 = vmatprep.subr.mxu0 0.0
        %867 = vmatpush1.msra.mxu0 0.0
        %868 = vmatprep.subr.mxu0 0.0
        %869 = vmatpush1.msra.mxu0 0.0
        %870 = vmatprep.subr.mxu0 0.0
        %871 = vmatpush1.msra.mxu0 0.0
        %872 = vmatprep.subr.mxu0 0.0
        %873 = vmatpush1.msra.mxu0 0.0
        %874 = vmatprep.subr.mxu0 0.0
        %875 = vmatpush1.msra.mxu0 0.0
        %876 = vmatprep.subr.mxu0 0.0
        %877 = vmatpush1.msra.mxu0 0.0
        %878 = vmatprep.subr.mxu0 0.0
        %879 = vmatpush1.msra.mxu0 0.0
        %880 = vmatprep.subr.mxu0 0.0
        %881 = vmatpush1.msra.mxu0 0.0
        %882 = vmatprep.subr.mxu0 0.0
        %883 = vmatpush1.msra.mxu0 0.0
        %884 = vmatprep.subr.mxu0 0.0
        %885 = vmatpush1.msra.mxu0 0.0
        %886 = vmatprep.subr.mxu0 0.0
        %887 = vmatpush1.msra.mxu0 0.0
        %888 = vmatprep.subr.mxu0 0.0
        %889 = vmatpush1.msra.mxu0 0.0
        %890 = vmatprep.subr.mxu0 0.0
        %891 = vmatpush1.msra.mxu0 0.0
        %892 = vmatprep.mubr.f32.mxu0 0.0
        %893 = vmatmul.mubr.f32.gmra.mrb[0].mxu0 %v730
        %v894 = vpop.f32.mrb[0].mxu0
        %v895 = vadd.f32 %v571, %v894
        %v896 = vpop.f32.mrb[0].mxu0
        %897 = vmatprep.mubr.f32.mxu0 0.0
        %898 = vmatmul.mubr.f32.gmra.mrb[0].mxu0 %v733
        %v899 = vpop.f32.mrb[0].mxu0
        %v900 = vadd.f32 %v576, %v899
        %v901 = vpop.f32.mrb[0].mxu0
        %902 = vmatprep.mubr.f32.mxu0 0.0
        %903 = vmatmul.mubr.f32.gmra.mrb[0].mxu0 %v736
        %v904 = vpop.f32.mrb[0].mxu0
        %v905 = vadd.f32 %v581, %v904
        %v906 = vpop.f32.mrb[0].mxu0
        %907 = vmatprep.mubr.f32.mxu0 0.0
        %908 = vmatmul.mubr.f32.gmra.mrb[0].mxu0 %v739
        %v909 = vpop.f32.mrb[0].mxu0
        %v910 = vadd.f32 %v586, %v909
        %v911 = vpop.f32.mrb[0].mxu0
        %912 = vmatprep.mubr.f32.mxu0 0.0
        %913 = vmatmul.mubr.f32.gmra.mrb[0].mxu0 %v742
        %v914 = vpop.f32.mrb[0].mxu0
        %v915 = vadd.f32 %v591, %v914
        %v916 = vpop.f32.mrb[0].mxu0
        %917 = vmatprep.mubr.f32.mxu0 0.0
        %918 = vmatmul.mubr.f32.gmra.mrb[0].mxu0 %v745
        %v919 = vpop.f32.mrb[0].mxu0
        %v920 = vadd.f32 %v596, %v919
        %v921 = vpop.f32.mrb[0].mxu0
        %922 = vmatprep.mubr.f32.mxu0 0.0
        %923 = vmatmul.mubr.f32.gmra.mrb[0].mxu0 %v748
        %v924 = vpop.f32.mrb[0].mxu0
        %v925 = vadd.f32 %v601, %v924
        %v926 = vpop.f32.mrb[0].mxu0
        %927 = vmatprep.mubr.f32.mxu0 0.0
        %928 = vmatmul.mubr.f32.gmra.mrb[0].mxu0 %v751
        %v929 = vpop.f32.mrb[0].mxu0
        %v930 = vadd.f32 %v606, %v929
        %v931 = vpop.f32.mrb[0].mxu0
        %932 = vmatprep.mubr.f32.mxu0 0.0
        %933 = vmatmul.mubr.f32.gmra.mrb[0].mxu0 %v754
        %v934 = vpop.f32.mrb[0].mxu0
        %v935 = vadd.f32 %v611, %v934
        %v936 = vpop.f32.mrb[0].mxu0
        %937 = vmatprep.mubr.f32.mxu0 0.0
        %938 = vmatmul.mubr.f32.gmra.mrb[0].mxu0 %v757
        %v939 = vpop.f32.mrb[0].mxu0
        %v940 = vadd.f32 %v616, %v939
        %v941 = vpop.f32.mrb[0].mxu0
        %942 = vmatprep.mubr.f32.mxu0 0.0
        %943 = vmatmul.mubr.f32.gmra.mrb[0].mxu0 %v760
        %v944 = vpop.f32.mrb[0].mxu0
        %v945 = vadd.f32 %v621, %v944
        %v946 = vpop.f32.mrb[0].mxu0
        %947 = vmatprep.mubr.f32.mxu0 0.0
        %948 = vmatmul.mubr.f32.gmra.mrb[0].mxu0 %v763
        %v949 = vpop.f32.mrb[0].mxu0
        %v950 = vadd.f32 %v626, %v949
        %v951 = vpop.f32.mrb[0].mxu0
        %952 = vmatprep.mubr.f32.mxu0 0.0
        %953 = vmatmul.mubr.f32.gmra.mrb[0].mxu0 %v766
        %v954 = vpop.f32.mrb[0].mxu0
        %v955 = vadd.f32 %v631, %v954
        %v956 = vpop.f32.mrb[0].mxu0
        %957 = vmatprep.mubr.f32.mxu0 0.0
        %958 = vmatmul.mubr.f32.gmra.mrb[0].mxu0 %v769
        %v959 = vpop.f32.mrb[0].mxu0
        %v960 = vadd.f32 %v636, %v959
        %v961 = vpop.f32.mrb[0].mxu0
        %962 = vmatprep.mubr.f32.mxu0 0.0
        %963 = vmatmul.mubr.f32.gmra.mrb[0].mxu0 %v772
        %v964 = vpop.f32.mrb[0].mxu0
        %v965 = vadd.f32 %v641, %v964
        %v966 = vpop.f32.mrb[0].mxu0
        %967 = vmatprep.mubr.f32.mxu0 0.0
        %968 = vmatmul.mubr.f32.gmra.mrb[0].mxu0 %v775
        %v969 = vpop.f32.mrb[0].mxu0
        %v970 = vadd.f32 %v646, %v969
        %v971 = vpop.f32.mrb[0].mxu0
        %972 = vmatprep.mubr.f32.mxu0 0.0
        %973 = vmatmul.mubr.f32.gmra.mrb[0].mxu0 %v778
        %v974 = vpop.f32.mrb[0].mxu0
        %v975 = vadd.f32 %v651, %v974
        %v976 = vpop.f32.mrb[0].mxu0
        %977 = vmatprep.mubr.f32.mxu0 0.0
        %978 = vmatmul.mubr.f32.gmra.mrb[0].mxu0 %v781
        %v979 = vpop.f32.mrb[0].mxu0
        %v980 = vadd.f32 %v656, %v979
        %v981 = vpop.f32.mrb[0].mxu0
        %982 = vmatprep.mubr.f32.mxu0 0.0
        %983 = vmatmul.mubr.f32.gmra.mrb[0].mxu0 %v784
        %v984 = vpop.f32.mrb[0].mxu0
        %v985 = vadd.f32 %v661, %v984
        %v986 = vpop.f32.mrb[0].mxu0
        %987 = vmatprep.mubr.f32.mxu0 0.0
        %988 = vmatmul.mubr.f32.gmra.mrb[0].mxu0 %v787
        %v989 = vpop.f32.mrb[0].mxu0
        %v990 = vadd.f32 %v666, %v989
        %v991 = vpop.f32.mrb[0].mxu0
        %992 = vmatprep.mubr.f32.mxu0 0.0
        %993 = vmatmul.mubr.f32.gmra.mrb[0].mxu0 %v790
        %v994 = vpop.f32.mrb[0].mxu0
        %v995 = vadd.f32 %v671, %v994
        %v996 = vpop.f32.mrb[0].mxu0
        %997 = vmatprep.mubr.f32.mxu0 0.0
        %998 = vmatmul.mubr.f32.gmra.mrb[0].mxu0 %v793
        %v999 = vpop.f32.mrb[0].mxu0
        %v1000 = vadd.f32 %v676, %v999
        %v1001 = vpop.f32.mrb[0].mxu0
        %1002 = vmatprep.mubr.f32.mxu0 0.0
        %1003 = vmatmul.mubr.f32.gmra.mrb[0].mxu0 %v796
        %v1004 = vpop.f32.mrb[0].mxu0
        %v1005 = vadd.f32 %v681, %v1004
        %v1006 = vpop.f32.mrb[0].mxu0
        %1007 = vmatprep.mubr.f32.mxu0 0.0
        %1008 = vmatmul.mubr.f32.gmra.mrb[0].mxu0 %v799
        %v1009 = vpop.f32.mrb[0].mxu0
        %v1010 = vadd.f32 %v686, %v1009
        %v1011 = vpop.f32.mrb[0].mxu0
        %1012 = vmatprep.mubr.f32.mxu0 0.0
        %1013 = vmatmul.mubr.f32.gmra.mrb[0].mxu0 %v802
        %v1014 = vpop.f32.mrb[0].mxu0
        %v1015 = vadd.f32 %v691, %v1014
        %v1016 = vpop.f32.mrb[0].mxu0
        %1017 = vmatprep.mubr.f32.mxu0 0.0
        %1018 = vmatmul.mubr.f32.gmra.mrb[0].mxu0 %v805
        %v1019 = vpop.f32.mrb[0].mxu0
        %v1020 = vadd.f32 %v696, %v1019
        %v1021 = vpop.f32.mrb[0].mxu0
        %1022 = vmatprep.mubr.f32.mxu0 0.0
        %1023 = vmatmul.mubr.f32.gmra.mrb[0].mxu0 %v808
        %v1024 = vpop.f32.mrb[0].mxu0
        %v1025 = vadd.f32 %v701, %v1024
        %v1026 = vpop.f32.mrb[0].mxu0
        %1027 = vmatprep.mubr.f32.mxu0 0.0
        %1028 = vmatmul.mubr.f32.gmra.mrb[0].mxu0 %v811
        %v1029 = vpop.f32.mrb[0].mxu0
        %v1030 = vadd.f32 %v706, %v1029
        %v1031 = vpop.f32.mrb[0].mxu0
        %1032 = vmatprep.mubr.f32.mxu0 0.0
        %1033 = vmatmul.mubr.f32.gmra.mrb[0].mxu0 %v814
        %v1034 = vpop.f32.mrb[0].mxu0
        %v1035 = vadd.f32 %v711, %v1034
        %v1036 = vpop.f32.mrb[0].mxu0
        %1037 = vmatprep.mubr.f32.mxu0 0.0
        %1038 = vmatmul.mubr.f32.gmra.mrb[0].mxu0 %v817
        %v1039 = vpop.f32.mrb[0].mxu0
        %v1040 = vadd.f32 %v716, %v1039
        %v1041 = vpop.f32.mrb[0].mxu0
        %1042 = vmatprep.mubr.f32.mxu0 0.0
        %1043 = vmatmul.mubr.f32.gmra.mrb[0].mxu0 %v820
        %v1044 = vpop.f32.mrb[0].mxu0
        %v1045 = vadd.f32 %v721, %v1044
        %v1046 = vpop.f32.mrb[0].mxu0
        %1047 = vmatprep.mubr.f32.mxu0 0.0
        %1048 = vmatmul.mubr.f32.gmra.mrb[0].mxu0 %v823
        %v1049 = vpop.f32.mrb[0].mxu0
        %v1050 = vadd.f32 %v726, %v1049
        %v1051 = vpop.f32.mrb[0].mxu0
        %1052 = vdwg.mxu0
        %v1053 = vld [vmem:[#allocation2 + $0x2] sm:$0xff]
        %v1054 = vld [vmem:[#allocation2 + $0xa] sm:$0xff]
        %v1055 = vld [vmem:[#allocation2 + $0x1a] sm:$0xff]
        %v1056 = vld [vmem:[#allocation2 + $0x22] sm:$0xff]
        %v1057 = vld [vmem:[#allocation2 + $0x32] sm:$0xff]
        %v1058 = vld [vmem:[#allocation2 + $0x3a] sm:$0xff]
        %v1059 = vld [vmem:[#allocation2 + $0x4a] sm:$0xff]
        %v1060 = vld [vmem:[#allocation2 + $0x52] sm:$0xff]
        %v1061 = vld [vmem:[#allocation2 + $0x62] sm:$0xff]
        %v1062 = vld [vmem:[#allocation2 + $0x6a] sm:$0xff]
        %v1063 = vld [vmem:[#allocation2 + $0x7a] sm:$0xff]
        %v1064 = vld [vmem:[#allocation2 + $0x82] sm:$0xff]
        %v1065 = vld [vmem:[#allocation2 + $0x92] sm:$0xff]
        %v1066 = vld [vmem:[#allocation2 + $0x9a] sm:$0xff]
        %v1067 = vld [vmem:[#allocation2 + $0xaa] sm:$0xff]
        %v1068 = vld [vmem:[#allocation2 + $0xb2] sm:$0xff]
        %v1069 = vld [vmem:[#allocation2 + $0xc2] sm:$0xff]
        %v1070 = vld [vmem:[#allocation2 + $0xca] sm:$0xff]
        %v1071 = vld [vmem:[#allocation2 + $0xda] sm:$0xff]
        %v1072 = vld [vmem:[#allocation2 + $0xe2] sm:$0xff]
        %v1073 = vld [vmem:[#allocation2 + $0xf2] sm:$0xff]
        %v1074 = vld [vmem:[#allocation2 + $0xfa] sm:$0xff]
        %v1075 = vld [vmem:[#allocation2 + $0x10a] sm:$0xff]
        %v1076 = vld [vmem:[#allocation2 + $0x112] sm:$0xff]
        %v1077 = vld [vmem:[#allocation2 + $0x122] sm:$0xff]
        %v1078 = vld [vmem:[#allocation2 + $0x12a] sm:$0xff]
        %v1079 = vld [vmem:[#allocation2 + $0x13a] sm:$0xff]
        %v1080 = vld [vmem:[#allocation2 + $0x142] sm:$0xff]
        %v1081 = vld [vmem:[#allocation2 + $0x152] sm:$0xff]
        %v1082 = vld [vmem:[#allocation2 + $0x15a] sm:$0xff]
        %v1083 = vld [vmem:[#allocation2 + $0x16a] sm:$0xff]
        %v1084 = vld [vmem:[#allocation2 + $0x172] sm:$0xff]
        %s1085 = scalar_lea.vmem [#allocation6], 8
        %v1086 = vld [vmem:[%s1085] sm:$0xf]
        %v1088 = vsel %vm216, %v1053, 0
        %v1091 = vsel %vm216, %v1054, 0
        %v1094 = vsel %vm216, %v1055, 0
        %v1097 = vsel %vm216, %v1056, 0
        %v1100 = vsel %vm216, %v1057, 0
        %v1103 = vsel %vm216, %v1058, 0
        %v1106 = vsel %vm216, %v1059, 0
        %v1109 = vsel %vm216, %v1060, 0
        %v1112 = vsel %vm216, %v1061, 0
        %v1115 = vsel %vm216, %v1062, 0
        %v1118 = vsel %vm216, %v1063, 0
        %v1121 = vsel %vm216, %v1064, 0
        %v1124 = vsel %vm216, %v1065, 0
        %v1127 = vsel %vm216, %v1066, 0
        %v1130 = vsel %vm216, %v1067, 0
        %v1133 = vsel %vm216, %v1068, 0
        %v1136 = vsel %vm216, %v1069, 0
        %v1139 = vsel %vm216, %v1070, 0
        %v1142 = vsel %vm216, %v1071, 0
        %v1145 = vsel %vm216, %v1072, 0
        %v1148 = vsel %vm216, %v1073, 0
        %v1151 = vsel %vm216, %v1074, 0
        %v1154 = vsel %vm216, %v1075, 0
        %v1157 = vsel %vm216, %v1076, 0
        %v1160 = vsel %vm216, %v1077, 0
        %v1163 = vsel %vm216, %v1078, 0
        %v1166 = vsel %vm216, %v1079, 0
        %v1169 = vsel %vm216, %v1080, 0
        %v1172 = vsel %vm216, %v1081, 0
        %v1175 = vsel %vm216, %v1082, 0
        %v1178 = vsel %vm216, %v1083, 0
        %v1181 = vsel %vm216, %v1084, 0
        %v1184 = vsel %vm500, %v1086, 0
        %1186 = vmatprep.subr.mxu0 0.0
        %1187 = vmatpush1.msra.mxu0 %v1184
        %1188 = vmatprep.subr.mxu0 0.0
        %1189 = vmatpush1.msra.mxu0 0.0
        %1190 = vmatprep.subr.mxu0 0.0
        %1191 = vmatpush1.msra.mxu0 0.0
        %1192 = vmatprep.subr.mxu0 0.0
        %1193 = vmatpush1.msra.mxu0 0.0
        %1194 = vmatprep.subr.mxu0 0.0
        %1195 = vmatpush1.msra.mxu0 0.0
        %1196 = vmatprep.subr.mxu0 0.0
        %1197 = vmatpush1.msra.mxu0 0.0
        %1198 = vmatprep.subr.mxu0 0.0
        %1199 = vmatpush1.msra.mxu0 0.0
        %1200 = vmatprep.subr.mxu0 0.0
        %1201 = vmatpush1.msra.mxu0 0.0
        %1202 = vmatprep.subr.mxu0 0.0
        %1203 = vmatpush1.msra.mxu0 0.0
        %1204 = vmatprep.subr.mxu0 0.0
        %1205 = vmatpush1.msra.mxu0 0.0
        %1206 = vmatprep.subr.mxu0 0.0
        %1207 = vmatpush1.msra.mxu0 0.0
        %1208 = vmatprep.subr.mxu0 0.0
        %1209 = vmatpush1.msra.mxu0 0.0
        %1210 = vmatprep.subr.mxu0 0.0
        %1211 = vmatpush1.msra.mxu0 0.0
        %1212 = vmatprep.subr.mxu0 0.0
        %1213 = vmatpush1.msra.mxu0 0.0
        %1214 = vmatprep.subr.mxu0 0.0
        %1215 = vmatpush1.msra.mxu0 0.0
        %1216 = vmatprep.subr.mxu0 0.0
        %1217 = vmatpush1.msra.mxu0 0.0
        %1218 = vmatprep.subr.mxu0 0.0
        %1219 = vmatpush1.msra.mxu0 0.0
        %1220 = vmatprep.subr.mxu0 0.0
        %1221 = vmatpush1.msra.mxu0 0.0
        %1222 = vmatprep.subr.mxu0 0.0
        %1223 = vmatpush1.msra.mxu0 0.0
        %1224 = vmatprep.subr.mxu0 0.0
        %1225 = vmatpush1.msra.mxu0 0.0
        %1226 = vmatprep.subr.mxu0 0.0
        %1227 = vmatpush1.msra.mxu0 0.0
        %1228 = vmatprep.subr.mxu0 0.0
        %1229 = vmatpush1.msra.mxu0 0.0
        %1230 = vmatprep.subr.mxu0 0.0
        %1231 = vmatpush1.msra.mxu0 0.0
        %1232 = vmatprep.subr.mxu0 0.0
        %1233 = vmatpush1.msra.mxu0 0.0
        %1234 = vmatprep.subr.mxu0 0.0
        %1235 = vmatpush1.msra.mxu0 0.0
        %1236 = vmatprep.subr.mxu0 0.0
        %1237 = vmatpush1.msra.mxu0 0.0
        %1238 = vmatprep.subr.mxu0 0.0
        %1239 = vmatpush1.msra.mxu0 0.0
        %1240 = vmatprep.subr.mxu0 0.0
        %1241 = vmatpush1.msra.mxu0 0.0
        %1242 = vmatprep.subr.mxu0 0.0
        %1243 = vmatpush1.msra.mxu0 0.0
        %1244 = vmatprep.subr.mxu0 0.0
        %1245 = vmatpush1.msra.mxu0 0.0
        %1246 = vmatprep.subr.mxu0 0.0
        %1247 = vmatpush1.msra.mxu0 0.0
        %1248 = vmatprep.subr.mxu0 0.0
        %1249 = vmatpush1.msra.mxu0 0.0
        %1250 = vmatprep.mubr.f32.mxu0 0.0
        %1251 = vmatmul.mubr.f32.gmra.mrb[0].mxu0 %v1088
        %v1252 = vpop.f32.mrb[0].mxu0
        %v1253 = vadd.f32 0.0, %v1252
        %v1254 = vpop.f32.mrb[0].mxu0
        %1255 = vmatprep.mubr.f32.mxu0 0.0
        %1256 = vmatmul.mubr.f32.gmra.mrb[0].mxu0 %v1091
        %v1257 = vpop.f32.mrb[0].mxu0
        %v1258 = vadd.f32 0.0, %v1257
        %v1259 = vpop.f32.mrb[0].mxu0
        %1260 = vmatprep.mubr.f32.mxu0 0.0
        %1261 = vmatmul.mubr.f32.gmra.mrb[0].mxu0 %v1094
        %v1262 = vpop.f32.mrb[0].mxu0
        %v1263 = vadd.f32 0.0, %v1262
        %v1264 = vpop.f32.mrb[0].mxu0
        %1265 = vmatprep.mubr.f32.mxu0 0.0
        %1266 = vmatmul.mubr.f32.gmra.mrb[0].mxu0 %v1097
        %v1267 = vpop.f32.mrb[0].mxu0
        %v1268 = vadd.f32 0.0, %v1267
        %v1269 = vpop.f32.mrb[0].mxu0
        %1270 = vmatprep.mubr.f32.mxu0 0.0
        %1271 = vmatmul.mubr.f32.gmra.mrb[0].mxu0 %v1100
        %v1272 = vpop.f32.mrb[0].mxu0
        %v1273 = vadd.f32 0.0, %v1272
        %v1274 = vpop.f32.mrb[0].mxu0
        %1275 = vmatprep.mubr.f32.mxu0 0.0
        %1276 = vmatmul.mubr.f32.gmra.mrb[0].mxu0 %v1103
        %v1277 = vpop.f32.mrb[0].mxu0
        %v1278 = vadd.f32 0.0, %v1277
        %v1279 = vpop.f32.mrb[0].mxu0
        %1280 = vmatprep.mubr.f32.mxu0 0.0
        %1281 = vmatmul.mubr.f32.gmra.mrb[0].mxu0 %v1106
        %v1282 = vpop.f32.mrb[0].mxu0
        %v1283 = vadd.f32 0.0, %v1282
        %v1284 = vpop.f32.mrb[0].mxu0
        %1285 = vmatprep.mubr.f32.mxu0 0.0
        %1286 = vmatmul.mubr.f32.gmra.mrb[0].mxu0 %v1109
        %v1287 = vpop.f32.mrb[0].mxu0
        %v1288 = vadd.f32 0.0, %v1287
        %v1289 = vpop.f32.mrb[0].mxu0
        %1290 = vmatprep.mubr.f32.mxu0 0.0
        %1291 = vmatmul.mubr.f32.gmra.mrb[0].mxu0 %v1112
        %v1292 = vpop.f32.mrb[0].mxu0
        %v1293 = vadd.f32 0.0, %v1292
        %v1294 = vpop.f32.mrb[0].mxu0
        %1295 = vmatprep.mubr.f32.mxu0 0.0
        %1296 = vmatmul.mubr.f32.gmra.mrb[0].mxu0 %v1115
        %v1297 = vpop.f32.mrb[0].mxu0
        %v1298 = vadd.f32 0.0, %v1297
        %v1299 = vpop.f32.mrb[0].mxu0
        %1300 = vmatprep.mubr.f32.mxu0 0.0
        %1301 = vmatmul.mubr.f32.gmra.mrb[0].mxu0 %v1118
        %v1302 = vpop.f32.mrb[0].mxu0
        %v1303 = vadd.f32 0.0, %v1302
        %v1304 = vpop.f32.mrb[0].mxu0
        %1305 = vmatprep.mubr.f32.mxu0 0.0
        %1306 = vmatmul.mubr.f32.gmra.mrb[0].mxu0 %v1121
        %v1307 = vpop.f32.mrb[0].mxu0
        %v1308 = vadd.f32 0.0, %v1307
        %v1309 = vpop.f32.mrb[0].mxu0
        %1310 = vmatprep.mubr.f32.mxu0 0.0
        %1311 = vmatmul.mubr.f32.gmra.mrb[0].mxu0 %v1124
        %v1312 = vpop.f32.mrb[0].mxu0
        %v1313 = vadd.f32 0.0, %v1312
        %v1314 = vpop.f32.mrb[0].mxu0
        %1315 = vmatprep.mubr.f32.mxu0 0.0
        %1316 = vmatmul.mubr.f32.gmra.mrb[0].mxu0 %v1127
        %v1317 = vpop.f32.mrb[0].mxu0
        %v1318 = vadd.f32 0.0, %v1317
        %v1319 = vpop.f32.mrb[0].mxu0
        %1320 = vmatprep.mubr.f32.mxu0 0.0
        %1321 = vmatmul.mubr.f32.gmra.mrb[0].mxu0 %v1130
        %v1322 = vpop.f32.mrb[0].mxu0
        %v1323 = vadd.f32 0.0, %v1322
        %v1324 = vpop.f32.mrb[0].mxu0
        %1325 = vmatprep.mubr.f32.mxu0 0.0
        %1326 = vmatmul.mubr.f32.gmra.mrb[0].mxu0 %v1133
        %v1327 = vpop.f32.mrb[0].mxu0
        %v1328 = vadd.f32 0.0, %v1327
        %v1329 = vpop.f32.mrb[0].mxu0
        %1330 = vmatprep.mubr.f32.mxu0 0.0
        %1331 = vmatmul.mubr.f32.gmra.mrb[0].mxu0 %v1136
        %v1332 = vpop.f32.mrb[0].mxu0
        %v1333 = vadd.f32 0.0, %v1332
        %v1334 = vpop.f32.mrb[0].mxu0
        %1335 = vmatprep.mubr.f32.mxu0 0.0
        %1336 = vmatmul.mubr.f32.gmra.mrb[0].mxu0 %v1139
        %v1337 = vpop.f32.mrb[0].mxu0
        %v1338 = vadd.f32 0.0, %v1337
        %v1339 = vpop.f32.mrb[0].mxu0
        %1340 = vmatprep.mubr.f32.mxu0 0.0
        %1341 = vmatmul.mubr.f32.gmra.mrb[0].mxu0 %v1142
        %v1342 = vpop.f32.mrb[0].mxu0
        %v1343 = vadd.f32 0.0, %v1342
        %v1344 = vpop.f32.mrb[0].mxu0
        %1345 = vmatprep.mubr.f32.mxu0 0.0
        %1346 = vmatmul.mubr.f32.gmra.mrb[0].mxu0 %v1145
        %v1347 = vpop.f32.mrb[0].mxu0
        %v1348 = vadd.f32 0.0, %v1347
        %v1349 = vpop.f32.mrb[0].mxu0
        %1350 = vmatprep.mubr.f32.mxu0 0.0
        %1351 = vmatmul.mubr.f32.gmra.mrb[0].mxu0 %v1148
        %v1352 = vpop.f32.mrb[0].mxu0
        %v1353 = vadd.f32 0.0, %v1352
        %v1354 = vpop.f32.mrb[0].mxu0
        %1355 = vmatprep.mubr.f32.mxu0 0.0
        %1356 = vmatmul.mubr.f32.gmra.mrb[0].mxu0 %v1151
        %v1357 = vpop.f32.mrb[0].mxu0
        %v1358 = vadd.f32 0.0, %v1357
        %v1359 = vpop.f32.mrb[0].mxu0
        %1360 = vmatprep.mubr.f32.mxu0 0.0
        %1361 = vmatmul.mubr.f32.gmra.mrb[0].mxu0 %v1154
        %v1362 = vpop.f32.mrb[0].mxu0
        %v1363 = vadd.f32 0.0, %v1362
        %v1364 = vpop.f32.mrb[0].mxu0
        %1365 = vmatprep.mubr.f32.mxu0 0.0
        %1366 = vmatmul.mubr.f32.gmra.mrb[0].mxu0 %v1157
        %v1367 = vpop.f32.mrb[0].mxu0
        %v1368 = vadd.f32 0.0, %v1367
        %v1369 = vpop.f32.mrb[0].mxu0
        %1370 = vmatprep.mubr.f32.mxu0 0.0
        %1371 = vmatmul.mubr.f32.gmra.mrb[0].mxu0 %v1160
        %v1372 = vpop.f32.mrb[0].mxu0
        %v1373 = vadd.f32 0.0, %v1372
        %v1374 = vpop.f32.mrb[0].mxu0
        %1375 = vmatprep.mubr.f32.mxu0 0.0
        %1376 = vmatmul.mubr.f32.gmra.mrb[0].mxu0 %v1163
        %v1377 = vpop.f32.mrb[0].mxu0
        %v1378 = vadd.f32 0.0, %v1377
        %v1379 = vpop.f32.mrb[0].mxu0
        %1380 = vmatprep.mubr.f32.mxu0 0.0
        %1381 = vmatmul.mubr.f32.gmra.mrb[0].mxu0 %v1166
        %v1382 = vpop.f32.mrb[0].mxu0
        %v1383 = vadd.f32 0.0, %v1382
        %v1384 = vpop.f32.mrb[0].mxu0
        %1385 = vmatprep.mubr.f32.mxu0 0.0
        %1386 = vmatmul.mubr.f32.gmra.mrb[0].mxu0 %v1169
        %v1387 = vpop.f32.mrb[0].mxu0
        %v1388 = vadd.f32 0.0, %v1387
        %v1389 = vpop.f32.mrb[0].mxu0
        %1390 = vmatprep.mubr.f32.mxu0 0.0
        %1391 = vmatmul.mubr.f32.gmra.mrb[0].mxu0 %v1172
        %v1392 = vpop.f32.mrb[0].mxu0
        %v1393 = vadd.f32 0.0, %v1392
        %v1394 = vpop.f32.mrb[0].mxu0
        %1395 = vmatprep.mubr.f32.mxu0 0.0
        %1396 = vmatmul.mubr.f32.gmra.mrb[0].mxu0 %v1175
        %v1397 = vpop.f32.mrb[0].mxu0
        %v1398 = vadd.f32 0.0, %v1397
        %v1399 = vpop.f32.mrb[0].mxu0
        %1400 = vmatprep.mubr.f32.mxu0 0.0
        %1401 = vmatmul.mubr.f32.gmra.mrb[0].mxu0 %v1178
        %v1402 = vpop.f32.mrb[0].mxu0
        %v1403 = vadd.f32 0.0, %v1402
        %v1404 = vpop.f32.mrb[0].mxu0
        %1405 = vmatprep.mubr.f32.mxu0 0.0
        %1406 = vmatmul.mubr.f32.gmra.mrb[0].mxu0 %v1181
        %v1407 = vpop.f32.mrb[0].mxu0
        %v1408 = vadd.f32 0.0, %v1407
        %v1409 = vpop.f32.mrb[0].mxu0
        %1410 = vdwg.mxu0
        %v1411 = vadd.f32 %v895, %v1253
        %v1412 = vadd.f32 %v900, %v1258
        %v1413 = vadd.f32 %v905, %v1263
        %v1414 = vadd.f32 %v910, %v1268
        %v1415 = vadd.f32 %v915, %v1273
        %v1416 = vadd.f32 %v920, %v1278
        %v1417 = vadd.f32 %v925, %v1283
        %v1418 = vadd.f32 %v930, %v1288
        %v1419 = vadd.f32 %v935, %v1293
        %v1420 = vadd.f32 %v940, %v1298
        %v1421 = vadd.f32 %v945, %v1303
        %v1422 = vadd.f32 %v950, %v1308
        %v1423 = vadd.f32 %v955, %v1313
        %v1424 = vadd.f32 %v960, %v1318
        %v1425 = vadd.f32 %v965, %v1323
        %v1426 = vadd.f32 %v970, %v1328
        %v1427 = vadd.f32 %v975, %v1333
        %v1428 = vadd.f32 %v980, %v1338
        %v1429 = vadd.f32 %v985, %v1343
        %v1430 = vadd.f32 %v990, %v1348
        %v1431 = vadd.f32 %v995, %v1353
        %v1432 = vadd.f32 %v1000, %v1358
        %v1433 = vadd.f32 %v1005, %v1363
        %v1434 = vadd.f32 %v1010, %v1368
        %v1435 = vadd.f32 %v1015, %v1373
        %v1436 = vadd.f32 %v1020, %v1378
        %v1437 = vadd.f32 %v1025, %v1383
        %v1438 = vadd.f32 %v1030, %v1388
        %v1439 = vadd.f32 %v1035, %v1393
        %v1440 = vadd.f32 %v1040, %v1398
        %v1441 = vadd.f32 %v1045, %v1403
        %v1442 = vadd.f32 %v1050, %v1408
        %v1443 = vld [vmem:[%s304] sm:$0xff]
        %v1444 = vld [vmem:[%s304 + $0x8] sm:$0xff]
        %v1445 = vld [vmem:[%s304 + $0x18] sm:$0xff]
        %v1446 = vld [vmem:[%s304 + $0x20] sm:$0xff]
        %v1447 = vld [vmem:[%s304 + $0x30] sm:$0xff]
        %v1448 = vld [vmem:[%s304 + $0x38] sm:$0xff]
        %v1449 = vld [vmem:[%s304 + $0x48] sm:$0xff]
        %v1450 = vld [vmem:[%s304 + $0x50] sm:$0xff]
        %v1451 = vld [vmem:[%s304 + $0x60] sm:$0xff]
        %v1452 = vld [vmem:[%s304 + $0x68] sm:$0xff]
        %v1453 = vld [vmem:[%s304 + $0x78] sm:$0xff]
        %v1454 = vld [vmem:[%s304 + $0x80] sm:$0xff]
        %v1455 = vld [vmem:[%s304 + $0x90] sm:$0xff]
        %v1456 = vld [vmem:[%s304 + $0x98] sm:$0xff]
        %v1457 = vld [vmem:[%s304 + $0xa8] sm:$0xff]
        %v1458 = vld [vmem:[%s304 + $0xb0] sm:$0xff]
        %v1459 = vld [vmem:[%s304 + $0xc0] sm:$0xff]
        %v1460 = vld [vmem:[%s304 + $0xc8] sm:$0xff]
        %v1461 = vld [vmem:[%s304 + $0xd8] sm:$0xff]
        %v1462 = vld [vmem:[%s304 + $0xe0] sm:$0xff]
        %v1463 = vld [vmem:[%s304 + $0xf0] sm:$0xff]
        %v1464 = vld [vmem:[%s304 + $0xf8] sm:$0xff]
        %v1465 = vld [vmem:[%s304 + $0x108] sm:$0xff]
        %v1466 = vld [vmem:[%s304 + $0x110] sm:$0xff]
        %v1467 = vld [vmem:[%s304 + $0x120] sm:$0xff]
        %v1468 = vld [vmem:[%s304 + $0x128] sm:$0xff]
        %v1469 = vld [vmem:[%s304 + $0x138] sm:$0xff]
        %v1470 = vld [vmem:[%s304 + $0x140] sm:$0xff]
        %v1471 = vld [vmem:[%s304 + $0x150] sm:$0xff]
        %v1472 = vld [vmem:[%s304 + $0x158] sm:$0xff]
        %v1473 = vld [vmem:[%s304 + $0x168] sm:$0xff]
        %v1474 = vld [vmem:[%s304 + $0x170] sm:$0xff]
        %s1475 = scalar_lea.vmem [#allocation6], 12
        %v1476 = vld [vmem:[%s1475] sm:$0xf]
        %v1478 = vsel %vm216, %v1443, 0
        %v1481 = vsel %vm216, %v1444, 0
        %v1484 = vsel %vm216, %v1445, 0
        %v1487 = vsel %vm216, %v1446, 0
        %v1490 = vsel %vm216, %v1447, 0
        %v1493 = vsel %vm216, %v1448, 0
        %v1496 = vsel %vm216, %v1449, 0
        %v1499 = vsel %vm216, %v1450, 0
        %v1502 = vsel %vm216, %v1451, 0
        %v1505 = vsel %vm216, %v1452, 0
        %v1508 = vsel %vm216, %v1453, 0
        %v1511 = vsel %vm216, %v1454, 0
        %v1514 = vsel %vm216, %v1455, 0
        %v1517 = vsel %vm216, %v1456, 0
        %v1520 = vsel %vm216, %v1457, 0
        %v1523 = vsel %vm216, %v1458, 0
        %v1526 = vsel %vm216, %v1459, 0
        %v1529 = vsel %vm216, %v1460, 0
        %v1532 = vsel %vm216, %v1461, 0
        %v1535 = vsel %vm216, %v1462, 0
        %v1538 = vsel %vm216, %v1463, 0
        %v1541 = vsel %vm216, %v1464, 0
        %v1544 = vsel %vm216, %v1465, 0
        %v1547 = vsel %vm216, %v1466, 0
        %v1550 = vsel %vm216, %v1467, 0
        %v1553 = vsel %vm216, %v1468, 0
        %v1556 = vsel %vm216, %v1469, 0
        %v1559 = vsel %vm216, %v1470, 0
        %v1562 = vsel %vm216, %v1471, 0
        %v1565 = vsel %vm216, %v1472, 0
        %v1568 = vsel %vm216, %v1473, 0
        %v1571 = vsel %vm216, %v1474, 0
        %v1574 = vsel %vm500, %v1476, 0
        %1576 = vmatprep.subr.mxu0 0.0
        %1577 = vmatpush1.msra.mxu0 %v1574
        %1578 = vmatprep.subr.mxu0 0.0
        %1579 = vmatpush1.msra.mxu0 0.0
        %1580 = vmatprep.subr.mxu0 0.0
        %1581 = vmatpush1.msra.mxu0 0.0
        %1582 = vmatprep.subr.mxu0 0.0
        %1583 = vmatpush1.msra.mxu0 0.0
        %1584 = vmatprep.subr.mxu0 0.0
        %1585 = vmatpush1.msra.mxu0 0.0
        %1586 = vmatprep.subr.mxu0 0.0
        %1587 = vmatpush1.msra.mxu0 0.0
        %1588 = vmatprep.subr.mxu0 0.0
        %1589 = vmatpush1.msra.mxu0 0.0
        %1590 = vmatprep.subr.mxu0 0.0
        %1591 = vmatpush1.msra.mxu0 0.0
        %1592 = vmatprep.subr.mxu0 0.0
        %1593 = vmatpush1.msra.mxu0 0.0
        %1594 = vmatprep.subr.mxu0 0.0
        %1595 = vmatpush1.msra.mxu0 0.0
        %1596 = vmatprep.subr.mxu0 0.0
        %1597 = vmatpush1.msra.mxu0 0.0
        %1598 = vmatprep.subr.mxu0 0.0
        %1599 = vmatpush1.msra.mxu0 0.0
        %1600 = vmatprep.subr.mxu0 0.0
        %1601 = vmatpush1.msra.mxu0 0.0
        %1602 = vmatprep.subr.mxu0 0.0
        %1603 = vmatpush1.msra.mxu0 0.0
        %1604 = vmatprep.subr.mxu0 0.0
        %1605 = vmatpush1.msra.mxu0 0.0
        %1606 = vmatprep.subr.mxu0 0.0
        %1607 = vmatpush1.msra.mxu0 0.0
        %1608 = vmatprep.subr.mxu0 0.0
        %1609 = vmatpush1.msra.mxu0 0.0
        %1610 = vmatprep.subr.mxu0 0.0
        %1611 = vmatpush1.msra.mxu0 0.0
        %1612 = vmatprep.subr.mxu0 0.0
        %1613 = vmatpush1.msra.mxu0 0.0
        %1614 = vmatprep.subr.mxu0 0.0
        %1615 = vmatpush1.msra.mxu0 0.0
        %1616 = vmatprep.subr.mxu0 0.0
        %1617 = vmatpush1.msra.mxu0 0.0
        %1618 = vmatprep.subr.mxu0 0.0
        %1619 = vmatpush1.msra.mxu0 0.0
        %1620 = vmatprep.subr.mxu0 0.0
        %1621 = vmatpush1.msra.mxu0 0.0
        %1622 = vmatprep.subr.mxu0 0.0
        %1623 = vmatpush1.msra.mxu0 0.0
        %1624 = vmatprep.subr.mxu0 0.0
        %1625 = vmatpush1.msra.mxu0 0.0
        %1626 = vmatprep.subr.mxu0 0.0
        %1627 = vmatpush1.msra.mxu0 0.0
        %1628 = vmatprep.subr.mxu0 0.0
        %1629 = vmatpush1.msra.mxu0 0.0
        %1630 = vmatprep.subr.mxu0 0.0
        %1631 = vmatpush1.msra.mxu0 0.0
        %1632 = vmatprep.subr.mxu0 0.0
        %1633 = vmatpush1.msra.mxu0 0.0
        %1634 = vmatprep.subr.mxu0 0.0
        %1635 = vmatpush1.msra.mxu0 0.0
        %1636 = vmatprep.subr.mxu0 0.0
        %1637 = vmatpush1.msra.mxu0 0.0
        %1638 = vmatprep.subr.mxu0 0.0
        %1639 = vmatpush1.msra.mxu0 0.0
        %1640 = vmatprep.mubr.f32.mxu0 0.0
        %1641 = vmatmul.mubr.f32.gmra.mrb[0].mxu0 %v1478
        %v1642 = vpop.f32.mrb[0].mxu0
        %v1643 = vadd.f32 0.0, %v1642
        %v1644 = vpop.f32.mrb[0].mxu0
        %1645 = vmatprep.mubr.f32.mxu0 0.0
        %1646 = vmatmul.mubr.f32.gmra.mrb[0].mxu0 %v1481
        %v1647 = vpop.f32.mrb[0].mxu0
        %v1648 = vadd.f32 0.0, %v1647
        %v1649 = vpop.f32.mrb[0].mxu0
        %1650 = vmatprep.mubr.f32.mxu0 0.0
        %1651 = vmatmul.mubr.f32.gmra.mrb[0].mxu0 %v1484
        %v1652 = vpop.f32.mrb[0].mxu0
        %v1653 = vadd.f32 0.0, %v1652
        %v1654 = vpop.f32.mrb[0].mxu0
        %1655 = vmatprep.mubr.f32.mxu0 0.0
        %1656 = vmatmul.mubr.f32.gmra.mrb[0].mxu0 %v1487
        %v1657 = vpop.f32.mrb[0].mxu0
        %v1658 = vadd.f32 0.0, %v1657
        %v1659 = vpop.f32.mrb[0].mxu0
        %1660 = vmatprep.mubr.f32.mxu0 0.0
        %1661 = vmatmul.mubr.f32.gmra.mrb[0].mxu0 %v1490
        %v1662 = vpop.f32.mrb[0].mxu0
        %v1663 = vadd.f32 0.0, %v1662
        %v1664 = vpop.f32.mrb[0].mxu0
        %1665 = vmatprep.mubr.f32.mxu0 0.0
        %1666 = vmatmul.mubr.f32.gmra.mrb[0].mxu0 %v1493
        %v1667 = vpop.f32.mrb[0].mxu0
        %v1668 = vadd.f32 0.0, %v1667
        %v1669 = vpop.f32.mrb[0].mxu0
        %1670 = vmatprep.mubr.f32.mxu0 0.0
        %1671 = vmatmul.mubr.f32.gmra.mrb[0].mxu0 %v1496
        %v1672 = vpop.f32.mrb[0].mxu0
        %v1673 = vadd.f32 0.0, %v1672
        %v1674 = vpop.f32.mrb[0].mxu0
        %1675 = vmatprep.mubr.f32.mxu0 0.0
        %1676 = vmatmul.mubr.f32.gmra.mrb[0].mxu0 %v1499
        %v1677 = vpop.f32.mrb[0].mxu0
        %v1678 = vadd.f32 0.0, %v1677
        %v1679 = vpop.f32.mrb[0].mxu0
        %1680 = vmatprep.mubr.f32.mxu0 0.0
        %1681 = vmatmul.mubr.f32.gmra.mrb[0].mxu0 %v1502
        %v1682 = vpop.f32.mrb[0].mxu0
        %v1683 = vadd.f32 0.0, %v1682
        %v1684 = vpop.f32.mrb[0].mxu0
        %1685 = vmatprep.mubr.f32.mxu0 0.0
        %1686 = vmatmul.mubr.f32.gmra.mrb[0].mxu0 %v1505
        %v1687 = vpop.f32.mrb[0].mxu0
        %v1688 = vadd.f32 0.0, %v1687
        %v1689 = vpop.f32.mrb[0].mxu0
        %1690 = vmatprep.mubr.f32.mxu0 0.0
        %1691 = vmatmul.mubr.f32.gmra.mrb[0].mxu0 %v1508
        %v1692 = vpop.f32.mrb[0].mxu0
        %v1693 = vadd.f32 0.0, %v1692
        %v1694 = vpop.f32.mrb[0].mxu0
        %1695 = vmatprep.mubr.f32.mxu0 0.0
        %1696 = vmatmul.mubr.f32.gmra.mrb[0].mxu0 %v1511
        %v1697 = vpop.f32.mrb[0].mxu0
        %v1698 = vadd.f32 0.0, %v1697
        %v1699 = vpop.f32.mrb[0].mxu0
        %1700 = vmatprep.mubr.f32.mxu0 0.0
        %1701 = vmatmul.mubr.f32.gmra.mrb[0].mxu0 %v1514
        %v1702 = vpop.f32.mrb[0].mxu0
        %v1703 = vadd.f32 0.0, %v1702
        %v1704 = vpop.f32.mrb[0].mxu0
        %1705 = vmatprep.mubr.f32.mxu0 0.0
        %1706 = vmatmul.mubr.f32.gmra.mrb[0].mxu0 %v1517
        %v1707 = vpop.f32.mrb[0].mxu0
        %v1708 = vadd.f32 0.0, %v1707
        %v1709 = vpop.f32.mrb[0].mxu0
        %1710 = vmatprep.mubr.f32.mxu0 0.0
        %1711 = vmatmul.mubr.f32.gmra.mrb[0].mxu0 %v1520
        %v1712 = vpop.f32.mrb[0].mxu0
        %v1713 = vadd.f32 0.0, %v1712
        %v1714 = vpop.f32.mrb[0].mxu0
        %1715 = vmatprep.mubr.f32.mxu0 0.0
        %1716 = vmatmul.mubr.f32.gmra.mrb[0].mxu0 %v1523
        %v1717 = vpop.f32.mrb[0].mxu0
        %v1718 = vadd.f32 0.0, %v1717
        %v1719 = vpop.f32.mrb[0].mxu0
        %1720 = vmatprep.mubr.f32.mxu0 0.0
        %1721 = vmatmul.mubr.f32.gmra.mrb[0].mxu0 %v1526
        %v1722 = vpop.f32.mrb[0].mxu0
        %v1723 = vadd.f32 0.0, %v1722
        %v1724 = vpop.f32.mrb[0].mxu0
        %1725 = vmatprep.mubr.f32.mxu0 0.0
        %1726 = vmatmul.mubr.f32.gmra.mrb[0].mxu0 %v1529
        %v1727 = vpop.f32.mrb[0].mxu0
        %v1728 = vadd.f32 0.0, %v1727
        %v1729 = vpop.f32.mrb[0].mxu0
        %1730 = vmatprep.mubr.f32.mxu0 0.0
        %1731 = vmatmul.mubr.f32.gmra.mrb[0].mxu0 %v1532
        %v1732 = vpop.f32.mrb[0].mxu0
        %v1733 = vadd.f32 0.0, %v1732
        %v1734 = vpop.f32.mrb[0].mxu0
        %1735 = vmatprep.mubr.f32.mxu0 0.0
        %1736 = vmatmul.mubr.f32.gmra.mrb[0].mxu0 %v1535
        %v1737 = vpop.f32.mrb[0].mxu0
        %v1738 = vadd.f32 0.0, %v1737
        %v1739 = vpop.f32.mrb[0].mxu0
        %1740 = vmatprep.mubr.f32.mxu0 0.0
        %1741 = vmatmul.mubr.f32.gmra.mrb[0].mxu0 %v1538
        %v1742 = vpop.f32.mrb[0].mxu0
        %v1743 = vadd.f32 0.0, %v1742
        %v1744 = vpop.f32.mrb[0].mxu0
        %1745 = vmatprep.mubr.f32.mxu0 0.0
        %1746 = vmatmul.mubr.f32.gmra.mrb[0].mxu0 %v1541
        %v1747 = vpop.f32.mrb[0].mxu0
        %v1748 = vadd.f32 0.0, %v1747
        %v1749 = vpop.f32.mrb[0].mxu0
        %1750 = vmatprep.mubr.f32.mxu0 0.0
        %1751 = vmatmul.mubr.f32.gmra.mrb[0].mxu0 %v1544
        %v1752 = vpop.f32.mrb[0].mxu0
        %v1753 = vadd.f32 0.0, %v1752
        %v1754 = vpop.f32.mrb[0].mxu0
        %1755 = vmatprep.mubr.f32.mxu0 0.0
        %1756 = vmatmul.mubr.f32.gmra.mrb[0].mxu0 %v1547
        %v1757 = vpop.f32.mrb[0].mxu0
        %v1758 = vadd.f32 0.0, %v1757
        %v1759 = vpop.f32.mrb[0].mxu0
        %1760 = vmatprep.mubr.f32.mxu0 0.0
        %1761 = vmatmul.mubr.f32.gmra.mrb[0].mxu0 %v1550
        %v1762 = vpop.f32.mrb[0].mxu0
        %v1763 = vadd.f32 0.0, %v1762
        %v1764 = vpop.f32.mrb[0].mxu0
        %1765 = vmatprep.mubr.f32.mxu0 0.0
        %1766 = vmatmul.mubr.f32.gmra.mrb[0].mxu0 %v1553
        %v1767 = vpop.f32.mrb[0].mxu0
        %v1768 = vadd.f32 0.0, %v1767
        %v1769 = vpop.f32.mrb[0].mxu0
        %1770 = vmatprep.mubr.f32.mxu0 0.0
        %1771 = vmatmul.mubr.f32.gmra.mrb[0].mxu0 %v1556
        %v1772 = vpop.f32.mrb[0].mxu0
        %v1773 = vadd.f32 0.0, %v1772
        %v1774 = vpop.f32.mrb[0].mxu0
        %1775 = vmatprep.mubr.f32.mxu0 0.0
        %1776 = vmatmul.mubr.f32.gmra.mrb[0].mxu0 %v1559
        %v1777 = vpop.f32.mrb[0].mxu0
        %v1778 = vadd.f32 0.0, %v1777
        %v1779 = vpop.f32.mrb[0].mxu0
        %1780 = vmatprep.mubr.f32.mxu0 0.0
        %1781 = vmatmul.mubr.f32.gmra.mrb[0].mxu0 %v1562
        %v1782 = vpop.f32.mrb[0].mxu0
        %v1783 = vadd.f32 0.0, %v1782
        %v1784 = vpop.f32.mrb[0].mxu0
        %1785 = vmatprep.mubr.f32.mxu0 0.0
        %1786 = vmatmul.mubr.f32.gmra.mrb[0].mxu0 %v1565
        %v1787 = vpop.f32.mrb[0].mxu0
        %v1788 = vadd.f32 0.0, %v1787
        %v1789 = vpop.f32.mrb[0].mxu0
        %1790 = vmatprep.mubr.f32.mxu0 0.0
        %1791 = vmatmul.mubr.f32.gmra.mrb[0].mxu0 %v1568
        %v1792 = vpop.f32.mrb[0].mxu0
        %v1793 = vadd.f32 0.0, %v1792
        %v1794 = vpop.f32.mrb[0].mxu0
        %1795 = vmatprep.mubr.f32.mxu0 0.0
        %1796 = vmatmul.mubr.f32.gmra.mrb[0].mxu0 %v1571
        %v1797 = vpop.f32.mrb[0].mxu0
        %v1798 = vadd.f32 0.0, %v1797
        %v1799 = vpop.f32.mrb[0].mxu0
        %1800 = vdwg.mxu0
        %v1801 = vadd.f32 %v1411, %v1643
        %v1802 = vadd.f32 %v1412, %v1648
        %v1803 = vadd.f32 %v1413, %v1653
        %v1804 = vadd.f32 %v1414, %v1658
        %v1805 = vadd.f32 %v1415, %v1663
        %v1806 = vadd.f32 %v1416, %v1668
        %v1807 = vadd.f32 %v1417, %v1673
        %v1808 = vadd.f32 %v1418, %v1678
        %v1809 = vadd.f32 %v1419, %v1683
        %v1810 = vadd.f32 %v1420, %v1688
        %v1811 = vadd.f32 %v1421, %v1693
        %v1812 = vadd.f32 %v1422, %v1698
        %v1813 = vadd.f32 %v1423, %v1703
        %v1814 = vadd.f32 %v1424, %v1708
        %v1815 = vadd.f32 %v1425, %v1713
        %v1816 = vadd.f32 %v1426, %v1718
        %v1817 = vadd.f32 %v1427, %v1723
        %v1818 = vadd.f32 %v1428, %v1728
        %v1819 = vadd.f32 %v1429, %v1733
        %v1820 = vadd.f32 %v1430, %v1738
        %v1821 = vadd.f32 %v1431, %v1743
        %v1822 = vadd.f32 %v1432, %v1748
        %v1823 = vadd.f32 %v1433, %v1753
        %v1824 = vadd.f32 %v1434, %v1758
        %v1825 = vadd.f32 %v1435, %v1763
        %v1826 = vadd.f32 %v1436, %v1768
        %v1827 = vadd.f32 %v1437, %v1773
        %v1828 = vadd.f32 %v1438, %v1778
        %v1829 = vadd.f32 %v1439, %v1783
        %v1830 = vadd.f32 %v1440, %v1788
        %v1831 = vadd.f32 %v1441, %v1793
        %v1832 = vadd.f32 %v1442, %v1798
        %v1833 = vld [vmem:[%s304 + $0x1] sm:$0xff]
        %v1834 = vld [vmem:[%s304 + $0x9] sm:$0xff]
        %v1835 = vld [vmem:[%s304 + $0x19] sm:$0xff]
        %v1836 = vld [vmem:[%s304 + $0x21] sm:$0xff]
        %v1837 = vld [vmem:[%s304 + $0x31] sm:$0xff]
        %v1838 = vld [vmem:[%s304 + $0x39] sm:$0xff]
        %v1839 = vld [vmem:[%s304 + $0x49] sm:$0xff]
        %v1840 = vld [vmem:[%s304 + $0x51] sm:$0xff]
        %v1841 = vld [vmem:[%s304 + $0x61] sm:$0xff]
        %v1842 = vld [vmem:[%s304 + $0x69] sm:$0xff]
        %v1843 = vld [vmem:[%s304 + $0x79] sm:$0xff]
        %v1844 = vld [vmem:[%s304 + $0x81] sm:$0xff]
        %v1845 = vld [vmem:[%s304 + $0x91] sm:$0xff]
        %v1846 = vld [vmem:[%s304 + $0x99] sm:$0xff]
        %v1847 = vld [vmem:[%s304 + $0xa9] sm:$0xff]
        %v1848 = vld [vmem:[%s304 + $0xb1] sm:$0xff]
        %v1849 = vld [vmem:[%s304 + $0xc1] sm:$0xff]
        %v1850 = vld [vmem:[%s304 + $0xc9] sm:$0xff]
        %v1851 = vld [vmem:[%s304 + $0xd9] sm:$0xff]
        %v1852 = vld [vmem:[%s304 + $0xe1] sm:$0xff]
        %v1853 = vld [vmem:[%s304 + $0xf1] sm:$0xff]
        %v1854 = vld [vmem:[%s304 + $0xf9] sm:$0xff]
        %v1855 = vld [vmem:[%s304 + $0x109] sm:$0xff]
        %v1856 = vld [vmem:[%s304 + $0x111] sm:$0xff]
        %v1857 = vld [vmem:[%s304 + $0x121] sm:$0xff]
        %v1858 = vld [vmem:[%s304 + $0x129] sm:$0xff]
        %v1859 = vld [vmem:[%s304 + $0x139] sm:$0xff]
        %v1860 = vld [vmem:[%s304 + $0x141] sm:$0xff]
        %v1861 = vld [vmem:[%s304 + $0x151] sm:$0xff]
        %v1862 = vld [vmem:[%s304 + $0x159] sm:$0xff]
        %v1863 = vld [vmem:[%s304 + $0x169] sm:$0xff]
        %v1864 = vld [vmem:[%s304 + $0x171] sm:$0xff]
        %s1865 = scalar_lea.vmem [#allocation6], 16
        %v1866 = vld [vmem:[%s1865] sm:$0xf]
        %v1868 = vsel %vm216, %v1833, 0
        %v1871 = vsel %vm216, %v1834, 0
        %v1874 = vsel %vm216, %v1835, 0
        %v1877 = vsel %vm216, %v1836, 0
        %v1880 = vsel %vm216, %v1837, 0
        %v1883 = vsel %vm216, %v1838, 0
        %v1886 = vsel %vm216, %v1839, 0
        %v1889 = vsel %vm216, %v1840, 0
        %v1892 = vsel %vm216, %v1841, 0
        %v1895 = vsel %vm216, %v1842, 0
        %v1898 = vsel %vm216, %v1843, 0
        %v1901 = vsel %vm216, %v1844, 0
        %v1904 = vsel %vm216, %v1845, 0
        %v1907 = vsel %vm216, %v1846, 0
        %v1910 = vsel %vm216, %v1847, 0
        %v1913 = vsel %vm216, %v1848, 0
        %v1916 = vsel %vm216, %v1849, 0
        %v1919 = vsel %vm216, %v1850, 0
        %v1922 = vsel %vm216, %v1851, 0
        %v1925 = vsel %vm216, %v1852, 0
        %v1928 = vsel %vm216, %v1853, 0
        %v1931 = vsel %vm216, %v1854, 0
        %v1934 = vsel %vm216, %v1855, 0
        %v1937 = vsel %vm216, %v1856, 0
        %v1940 = vsel %vm216, %v1857, 0
        %v1943 = vsel %vm216, %v1858, 0
        %v1946 = vsel %vm216, %v1859, 0
        %v1949 = vsel %vm216, %v1860, 0
        %v1952 = vsel %vm216, %v1861, 0
        %v1955 = vsel %vm216, %v1862, 0
        %v1958 = vsel %vm216, %v1863, 0
        %v1961 = vsel %vm216, %v1864, 0
        %v1964 = vsel %vm500, %v1866, 0
        %1966 = vmatprep.subr.mxu0 0.0
        %1967 = vmatpush1.msra.mxu0 %v1964
        %1968 = vmatprep.subr.mxu0 0.0
        %1969 = vmatpush1.msra.mxu0 0.0
        %1970 = vmatprep.subr.mxu0 0.0
        %1971 = vmatpush1.msra.mxu0 0.0
        %1972 = vmatprep.subr.mxu0 0.0
        %1973 = vmatpush1.msra.mxu0 0.0
        %1974 = vmatprep.subr.mxu0 0.0
        %1975 = vmatpush1.msra.mxu0 0.0
        %1976 = vmatprep.subr.mxu0 0.0
        %1977 = vmatpush1.msra.mxu0 0.0
        %1978 = vmatprep.subr.mxu0 0.0
        %1979 = vmatpush1.msra.mxu0 0.0
        %1980 = vmatprep.subr.mxu0 0.0
        %1981 = vmatpush1.msra.mxu0 0.0
        %1982 = vmatprep.subr.mxu0 0.0
        %1983 = vmatpush1.msra.mxu0 0.0
        %1984 = vmatprep.subr.mxu0 0.0
        %1985 = vmatpush1.msra.mxu0 0.0
        %1986 = vmatprep.subr.mxu0 0.0
        %1987 = vmatpush1.msra.mxu0 0.0
        %1988 = vmatprep.subr.mxu0 0.0
        %1989 = vmatpush1.msra.mxu0 0.0
        %1990 = vmatprep.subr.mxu0 0.0
        %1991 = vmatpush1.msra.mxu0 0.0
        %1992 = vmatprep.subr.mxu0 0.0
        %1993 = vmatpush1.msra.mxu0 0.0
        %1994 = vmatprep.subr.mxu0 0.0
        %1995 = vmatpush1.msra.mxu0 0.0
        %1996 = vmatprep.subr.mxu0 0.0
        %1997 = vmatpush1.msra.mxu0 0.0
        %1998 = vmatprep.subr.mxu0 0.0
        %1999 = vmatpush1.msra.mxu0 0.0
        %2000 = vmatprep.subr.mxu0 0.0
        %2001 = vmatpush1.msra.mxu0 0.0
        %2002 = vmatprep.subr.mxu0 0.0
        %2003 = vmatpush1.msra.mxu0 0.0
        %2004 = vmatprep.subr.mxu0 0.0
        %2005 = vmatpush1.msra.mxu0 0.0
        %2006 = vmatprep.subr.mxu0 0.0
        %2007 = vmatpush1.msra.mxu0 0.0
        %2008 = vmatprep.subr.mxu0 0.0
        %2009 = vmatpush1.msra.mxu0 0.0
        %2010 = vmatprep.subr.mxu0 0.0
        %2011 = vmatpush1.msra.mxu0 0.0
        %2012 = vmatprep.subr.mxu0 0.0
        %2013 = vmatpush1.msra.mxu0 0.0
        %2014 = vmatprep.subr.mxu0 0.0
        %2015 = vmatpush1.msra.mxu0 0.0
        %2016 = vmatprep.subr.mxu0 0.0
        %2017 = vmatpush1.msra.mxu0 0.0
        %2018 = vmatprep.subr.mxu0 0.0
        %2019 = vmatpush1.msra.mxu0 0.0
        %2020 = vmatprep.subr.mxu0 0.0
        %2021 = vmatpush1.msra.mxu0 0.0
        %2022 = vmatprep.subr.mxu0 0.0
        %2023 = vmatpush1.msra.mxu0 0.0
        %2024 = vmatprep.subr.mxu0 0.0
        %2025 = vmatpush1.msra.mxu0 0.0
        %2026 = vmatprep.subr.mxu0 0.0
        %2027 = vmatpush1.msra.mxu0 0.0
        %2028 = vmatprep.subr.mxu0 0.0
        %2029 = vmatpush1.msra.mxu0 0.0
        %2030 = vmatprep.mubr.f32.mxu0 0.0
        %2031 = vmatmul.mubr.f32.gmra.mrb[0].mxu0 %v1868
        %v2032 = vpop.f32.mrb[0].mxu0
        %v2033 = vadd.f32 0.0, %v2032
        %v2034 = vpop.f32.mrb[0].mxu0
        %2035 = vmatprep.mubr.f32.mxu0 0.0
        %2036 = vmatmul.mubr.f32.gmra.mrb[0].mxu0 %v1871
        %v2037 = vpop.f32.mrb[0].mxu0
        %v2038 = vadd.f32 0.0, %v2037
        %v2039 = vpop.f32.mrb[0].mxu0
        %2040 = vmatprep.mubr.f32.mxu0 0.0
        %2041 = vmatmul.mubr.f32.gmra.mrb[0].mxu0 %v1874
        %v2042 = vpop.f32.mrb[0].mxu0
        %v2043 = vadd.f32 0.0, %v2042
        %v2044 = vpop.f32.mrb[0].mxu0
        %2045 = vmatprep.mubr.f32.mxu0 0.0
        %2046 = vmatmul.mubr.f32.gmra.mrb[0].mxu0 %v1877
        %v2047 = vpop.f32.mrb[0].mxu0
        %v2048 = vadd.f32 0.0, %v2047
        %v2049 = vpop.f32.mrb[0].mxu0
        %2050 = vmatprep.mubr.f32.mxu0 0.0
        %2051 = vmatmul.mubr.f32.gmra.mrb[0].mxu0 %v1880
        %v2052 = vpop.f32.mrb[0].mxu0
        %v2053 = vadd.f32 0.0, %v2052
        %v2054 = vpop.f32.mrb[0].mxu0
        %2055 = vmatprep.mubr.f32.mxu0 0.0
        %2056 = vmatmul.mubr.f32.gmra.mrb[0].mxu0 %v1883
        %v2057 = vpop.f32.mrb[0].mxu0
        %v2058 = vadd.f32 0.0, %v2057
        %v2059 = vpop.f32.mrb[0].mxu0
        %2060 = vmatprep.mubr.f32.mxu0 0.0
        %2061 = vmatmul.mubr.f32.gmra.mrb[0].mxu0 %v1886
        %v2062 = vpop.f32.mrb[0].mxu0
        %v2063 = vadd.f32 0.0, %v2062
        %v2064 = vpop.f32.mrb[0].mxu0
        %2065 = vmatprep.mubr.f32.mxu0 0.0
        %2066 = vmatmul.mubr.f32.gmra.mrb[0].mxu0 %v1889
        %v2067 = vpop.f32.mrb[0].mxu0
        %v2068 = vadd.f32 0.0, %v2067
        %v2069 = vpop.f32.mrb[0].mxu0
        %2070 = vmatprep.mubr.f32.mxu0 0.0
        %2071 = vmatmul.mubr.f32.gmra.mrb[0].mxu0 %v1892
        %v2072 = vpop.f32.mrb[0].mxu0
        %v2073 = vadd.f32 0.0, %v2072
        %v2074 = vpop.f32.mrb[0].mxu0
        %2075 = vmatprep.mubr.f32.mxu0 0.0
        %2076 = vmatmul.mubr.f32.gmra.mrb[0].mxu0 %v1895
        %v2077 = vpop.f32.mrb[0].mxu0
        %v2078 = vadd.f32 0.0, %v2077
        %v2079 = vpop.f32.mrb[0].mxu0
        %2080 = vmatprep.mubr.f32.mxu0 0.0
        %2081 = vmatmul.mubr.f32.gmra.mrb[0].mxu0 %v1898
        %v2082 = vpop.f32.mrb[0].mxu0
        %v2083 = vadd.f32 0.0, %v2082
        %v2084 = vpop.f32.mrb[0].mxu0
        %2085 = vmatprep.mubr.f32.mxu0 0.0
        %2086 = vmatmul.mubr.f32.gmra.mrb[0].mxu0 %v1901
        %v2087 = vpop.f32.mrb[0].mxu0
        %v2088 = vadd.f32 0.0, %v2087
        %v2089 = vpop.f32.mrb[0].mxu0
        %2090 = vmatprep.mubr.f32.mxu0 0.0
        %2091 = vmatmul.mubr.f32.gmra.mrb[0].mxu0 %v1904
        %v2092 = vpop.f32.mrb[0].mxu0
        %v2093 = vadd.f32 0.0, %v2092
        %v2094 = vpop.f32.mrb[0].mxu0
        %2095 = vmatprep.mubr.f32.mxu0 0.0
        %2096 = vmatmul.mubr.f32.gmra.mrb[0].mxu0 %v1907
        %v2097 = vpop.f32.mrb[0].mxu0
        %v2098 = vadd.f32 0.0, %v2097
        %v2099 = vpop.f32.mrb[0].mxu0
        %2100 = vmatprep.mubr.f32.mxu0 0.0
        %2101 = vmatmul.mubr.f32.gmra.mrb[0].mxu0 %v1910
        %v2102 = vpop.f32.mrb[0].mxu0
        %v2103 = vadd.f32 0.0, %v2102
        %v2104 = vpop.f32.mrb[0].mxu0
        %2105 = vmatprep.mubr.f32.mxu0 0.0
        %2106 = vmatmul.mubr.f32.gmra.mrb[0].mxu0 %v1913
        %v2107 = vpop.f32.mrb[0].mxu0
        %v2108 = vadd.f32 0.0, %v2107
        %v2109 = vpop.f32.mrb[0].mxu0
        %2110 = vmatprep.mubr.f32.mxu0 0.0
        %2111 = vmatmul.mubr.f32.gmra.mrb[0].mxu0 %v1916
        %v2112 = vpop.f32.mrb[0].mxu0
        %v2113 = vadd.f32 0.0, %v2112
        %v2114 = vpop.f32.mrb[0].mxu0
        %2115 = vmatprep.mubr.f32.mxu0 0.0
        %2116 = vmatmul.mubr.f32.gmra.mrb[0].mxu0 %v1919
        %v2117 = vpop.f32.mrb[0].mxu0
        %v2118 = vadd.f32 0.0, %v2117
        %v2119 = vpop.f32.mrb[0].mxu0
        %2120 = vmatprep.mubr.f32.mxu0 0.0
        %2121 = vmatmul.mubr.f32.gmra.mrb[0].mxu0 %v1922
        %v2122 = vpop.f32.mrb[0].mxu0
        %v2123 = vadd.f32 0.0, %v2122
        %v2124 = vpop.f32.mrb[0].mxu0
        %2125 = vmatprep.mubr.f32.mxu0 0.0
        %2126 = vmatmul.mubr.f32.gmra.mrb[0].mxu0 %v1925
        %v2127 = vpop.f32.mrb[0].mxu0
        %v2128 = vadd.f32 0.0, %v2127
        %v2129 = vpop.f32.mrb[0].mxu0
        %2130 = vmatprep.mubr.f32.mxu0 0.0
        %2131 = vmatmul.mubr.f32.gmra.mrb[0].mxu0 %v1928
        %v2132 = vpop.f32.mrb[0].mxu0
        %v2133 = vadd.f32 0.0, %v2132
        %v2134 = vpop.f32.mrb[0].mxu0
        %2135 = vmatprep.mubr.f32.mxu0 0.0
        %2136 = vmatmul.mubr.f32.gmra.mrb[0].mxu0 %v1931
        %v2137 = vpop.f32.mrb[0].mxu0
        %v2138 = vadd.f32 0.0, %v2137
        %v2139 = vpop.f32.mrb[0].mxu0
        %2140 = vmatprep.mubr.f32.mxu0 0.0
        %2141 = vmatmul.mubr.f32.gmra.mrb[0].mxu0 %v1934
        %v2142 = vpop.f32.mrb[0].mxu0
        %v2143 = vadd.f32 0.0, %v2142
        %v2144 = vpop.f32.mrb[0].mxu0
        %2145 = vmatprep.mubr.f32.mxu0 0.0
        %2146 = vmatmul.mubr.f32.gmra.mrb[0].mxu0 %v1937
        %v2147 = vpop.f32.mrb[0].mxu0
        %v2148 = vadd.f32 0.0, %v2147
        %v2149 = vpop.f32.mrb[0].mxu0
        %2150 = vmatprep.mubr.f32.mxu0 0.0
        %2151 = vmatmul.mubr.f32.gmra.mrb[0].mxu0 %v1940
        %v2152 = vpop.f32.mrb[0].mxu0
        %v2153 = vadd.f32 0.0, %v2152
        %v2154 = vpop.f32.mrb[0].mxu0
        %2155 = vmatprep.mubr.f32.mxu0 0.0
        %2156 = vmatmul.mubr.f32.gmra.mrb[0].mxu0 %v1943
        %v2157 = vpop.f32.mrb[0].mxu0
        %v2158 = vadd.f32 0.0, %v2157
        %v2159 = vpop.f32.mrb[0].mxu0
        %2160 = vmatprep.mubr.f32.mxu0 0.0
        %2161 = vmatmul.mubr.f32.gmra.mrb[0].mxu0 %v1946
        %v2162 = vpop.f32.mrb[0].mxu0
        %v2163 = vadd.f32 0.0, %v2162
        %v2164 = vpop.f32.mrb[0].mxu0
        %2165 = vmatprep.mubr.f32.mxu0 0.0
        %2166 = vmatmul.mubr.f32.gmra.mrb[0].mxu0 %v1949
        %v2167 = vpop.f32.mrb[0].mxu0
        %v2168 = vadd.f32 0.0, %v2167
        %v2169 = vpop.f32.mrb[0].mxu0
        %2170 = vmatprep.mubr.f32.mxu0 0.0
        %2171 = vmatmul.mubr.f32.gmra.mrb[0].mxu0 %v1952
        %v2172 = vpop.f32.mrb[0].mxu0
        %v2173 = vadd.f32 0.0, %v2172
        %v2174 = vpop.f32.mrb[0].mxu0
        %2175 = vmatprep.mubr.f32.mxu0 0.0
        %2176 = vmatmul.mubr.f32.gmra.mrb[0].mxu0 %v1955
        %v2177 = vpop.f32.mrb[0].mxu0
        %v2178 = vadd.f32 0.0, %v2177
        %v2179 = vpop.f32.mrb[0].mxu0
        %2180 = vmatprep.mubr.f32.mxu0 0.0
        %2181 = vmatmul.mubr.f32.gmra.mrb[0].mxu0 %v1958
        %v2182 = vpop.f32.mrb[0].mxu0
        %v2183 = vadd.f32 0.0, %v2182
        %v2184 = vpop.f32.mrb[0].mxu0
        %2185 = vmatprep.mubr.f32.mxu0 0.0
        %2186 = vmatmul.mubr.f32.gmra.mrb[0].mxu0 %v1961
        %v2187 = vpop.f32.mrb[0].mxu0
        %v2188 = vadd.f32 0.0, %v2187
        %v2189 = vpop.f32.mrb[0].mxu0
        %2190 = vdwg.mxu0
        %v2191 = vadd.f32 %v1801, %v2033
        %v2192 = vadd.f32 %v1802, %v2038
        %v2193 = vadd.f32 %v1803, %v2043
        %v2194 = vadd.f32 %v1804, %v2048
        %v2195 = vadd.f32 %v1805, %v2053
        %v2196 = vadd.f32 %v1806, %v2058
        %v2197 = vadd.f32 %v1807, %v2063
        %v2198 = vadd.f32 %v1808, %v2068
        %v2199 = vadd.f32 %v1809, %v2073
        %v2200 = vadd.f32 %v1810, %v2078
        %v2201 = vadd.f32 %v1811, %v2083
        %v2202 = vadd.f32 %v1812, %v2088
        %v2203 = vadd.f32 %v1813, %v2093
        %v2204 = vadd.f32 %v1814, %v2098
        %v2205 = vadd.f32 %v1815, %v2103
        %v2206 = vadd.f32 %v1816, %v2108
        %v2207 = vadd.f32 %v1817, %v2113
        %v2208 = vadd.f32 %v1818, %v2118
        %v2209 = vadd.f32 %v1819, %v2123
        %v2210 = vadd.f32 %v1820, %v2128
        %v2211 = vadd.f32 %v1821, %v2133
        %v2212 = vadd.f32 %v1822, %v2138
        %v2213 = vadd.f32 %v1823, %v2143
        %v2214 = vadd.f32 %v1824, %v2148
        %v2215 = vadd.f32 %v1825, %v2153
        %v2216 = vadd.f32 %v1826, %v2158
        %v2217 = vadd.f32 %v1827, %v2163
        %v2218 = vadd.f32 %v1828, %v2168
        %v2219 = vadd.f32 %v1829, %v2173
        %v2220 = vadd.f32 %v1830, %v2178
        %v2221 = vadd.f32 %v1831, %v2183
        %v2222 = vadd.f32 %v1832, %v2188
        %v2223 = vld [vmem:[%s304 + $0x2] sm:$0xff]
        %v2224 = vld [vmem:[%s304 + $0xa] sm:$0xff]
        %v2225 = vld [vmem:[%s304 + $0x1a] sm:$0xff]
        %v2226 = vld [vmem:[%s304 + $0x22] sm:$0xff]
        %v2227 = vld [vmem:[%s304 + $0x32] sm:$0xff]
        %v2228 = vld [vmem:[%s304 + $0x3a] sm:$0xff]
        %v2229 = vld [vmem:[%s304 + $0x4a] sm:$0xff]
        %v2230 = vld [vmem:[%s304 + $0x52] sm:$0xff]
        %v2231 = vld [vmem:[%s304 + $0x62] sm:$0xff]
        %v2232 = vld [vmem:[%s304 + $0x6a] sm:$0xff]
        %v2233 = vld [vmem:[%s304 + $0x7a] sm:$0xff]
        %v2234 = vld [vmem:[%s304 + $0x82] sm:$0xff]
        %v2235 = vld [vmem:[%s304 + $0x92] sm:$0xff]
        %v2236 = vld [vmem:[%s304 + $0x9a] sm:$0xff]
        %v2237 = vld [vmem:[%s304 + $0xaa] sm:$0xff]
        %v2238 = vld [vmem:[%s304 + $0xb2] sm:$0xff]
        %v2239 = vld [vmem:[%s304 + $0xc2] sm:$0xff]
        %v2240 = vld [vmem:[%s304 + $0xca] sm:$0xff]
        %v2241 = vld [vmem:[%s304 + $0xda] sm:$0xff]
        %v2242 = vld [vmem:[%s304 + $0xe2] sm:$0xff]
        %v2243 = vld [vmem:[%s304 + $0xf2] sm:$0xff]
        %v2244 = vld [vmem:[%s304 + $0xfa] sm:$0xff]
        %v2245 = vld [vmem:[%s304 + $0x10a] sm:$0xff]
        %v2246 = vld [vmem:[%s304 + $0x112] sm:$0xff]
        %v2247 = vld [vmem:[%s304 + $0x122] sm:$0xff]
        %v2248 = vld [vmem:[%s304 + $0x12a] sm:$0xff]
        %v2249 = vld [vmem:[%s304 + $0x13a] sm:$0xff]
        %v2250 = vld [vmem:[%s304 + $0x142] sm:$0xff]
        %v2251 = vld [vmem:[%s304 + $0x152] sm:$0xff]
        %v2252 = vld [vmem:[%s304 + $0x15a] sm:$0xff]
        %v2253 = vld [vmem:[%s304 + $0x16a] sm:$0xff]
        %v2254 = vld [vmem:[%s304 + $0x172] sm:$0xff]
        %s2255 = scalar_lea.vmem [#allocation6], 20
        %v2256 = vld [vmem:[%s2255] sm:$0xf]
        %v2258 = vsel %vm216, %v2223, 0
        %v2261 = vsel %vm216, %v2224, 0
        %v2264 = vsel %vm216, %v2225, 0
        %v2267 = vsel %vm216, %v2226, 0
        %v2270 = vsel %vm216, %v2227, 0
        %v2273 = vsel %vm216, %v2228, 0
        %v2276 = vsel %vm216, %v2229, 0
        %v2279 = vsel %vm216, %v2230, 0
        %v2282 = vsel %vm216, %v2231, 0
        %v2285 = vsel %vm216, %v2232, 0
        %v2288 = vsel %vm216, %v2233, 0
        %v2291 = vsel %vm216, %v2234, 0
        %v2294 = vsel %vm216, %v2235, 0
        %v2297 = vsel %vm216, %v2236, 0
        %v2300 = vsel %vm216, %v2237, 0
        %v2303 = vsel %vm216, %v2238, 0
        %v2306 = vsel %vm216, %v2239, 0
        %v2309 = vsel %vm216, %v2240, 0
        %v2312 = vsel %vm216, %v2241, 0
        %v2315 = vsel %vm216, %v2242, 0
        %v2318 = vsel %vm216, %v2243, 0
        %v2321 = vsel %vm216, %v2244, 0
        %v2324 = vsel %vm216, %v2245, 0
        %v2327 = vsel %vm216, %v2246, 0
        %v2330 = vsel %vm216, %v2247, 0
        %v2333 = vsel %vm216, %v2248, 0
        %v2336 = vsel %vm216, %v2249, 0
        %v2339 = vsel %vm216, %v2250, 0
        %v2342 = vsel %vm216, %v2251, 0
        %v2345 = vsel %vm216, %v2252, 0
        %v2348 = vsel %vm216, %v2253, 0
        %v2351 = vsel %vm216, %v2254, 0
        %v2354 = vsel %vm500, %v2256, 0
        %2356 = vmatprep.subr.mxu0 0.0
        %2357 = vmatpush1.msra.mxu0 %v2354
        %2358 = vmatprep.subr.mxu0 0.0
        %2359 = vmatpush1.msra.mxu0 0.0
        %2360 = vmatprep.subr.mxu0 0.0
        %2361 = vmatpush1.msra.mxu0 0.0
        %2362 = vmatprep.subr.mxu0 0.0
        %2363 = vmatpush1.msra.mxu0 0.0
        %2364 = vmatprep.subr.mxu0 0.0
        %2365 = vmatpush1.msra.mxu0 0.0
        %2366 = vmatprep.subr.mxu0 0.0
        %2367 = vmatpush1.msra.mxu0 0.0
        %2368 = vmatprep.subr.mxu0 0.0
        %2369 = vmatpush1.msra.mxu0 0.0
        %2370 = vmatprep.subr.mxu0 0.0
        %2371 = vmatpush1.msra.mxu0 0.0
        %2372 = vmatprep.subr.mxu0 0.0
        %2373 = vmatpush1.msra.mxu0 0.0
        %2374 = vmatprep.subr.mxu0 0.0
        %2375 = vmatpush1.msra.mxu0 0.0
        %2376 = vmatprep.subr.mxu0 0.0
        %2377 = vmatpush1.msra.mxu0 0.0
        %2378 = vmatprep.subr.mxu0 0.0
        %2379 = vmatpush1.msra.mxu0 0.0
        %2380 = vmatprep.subr.mxu0 0.0
        %2381 = vmatpush1.msra.mxu0 0.0
        %2382 = vmatprep.subr.mxu0 0.0
        %2383 = vmatpush1.msra.mxu0 0.0
        %2384 = vmatprep.subr.mxu0 0.0
        %2385 = vmatpush1.msra.mxu0 0.0
        %2386 = vmatprep.subr.mxu0 0.0
        %2387 = vmatpush1.msra.mxu0 0.0
        %2388 = vmatprep.subr.mxu0 0.0
        %2389 = vmatpush1.msra.mxu0 0.0
        %2390 = vmatprep.subr.mxu0 0.0
        %2391 = vmatpush1.msra.mxu0 0.0
        %2392 = vmatprep.subr.mxu0 0.0
        %2393 = vmatpush1.msra.mxu0 0.0
        %2394 = vmatprep.subr.mxu0 0.0
        %2395 = vmatpush1.msra.mxu0 0.0
        %2396 = vmatprep.subr.mxu0 0.0
        %2397 = vmatpush1.msra.mxu0 0.0
        %2398 = vmatprep.subr.mxu0 0.0
        %2399 = vmatpush1.msra.mxu0 0.0
        %2400 = vmatprep.subr.mxu0 0.0
        %2401 = vmatpush1.msra.mxu0 0.0
        %2402 = vmatprep.subr.mxu0 0.0
        %2403 = vmatpush1.msra.mxu0 0.0
        %2404 = vmatprep.subr.mxu0 0.0
        %2405 = vmatpush1.msra.mxu0 0.0
        %2406 = vmatprep.subr.mxu0 0.0
        %2407 = vmatpush1.msra.mxu0 0.0
        %2408 = vmatprep.subr.mxu0 0.0
        %2409 = vmatpush1.msra.mxu0 0.0
        %2410 = vmatprep.subr.mxu0 0.0
        %2411 = vmatpush1.msra.mxu0 0.0
        %2412 = vmatprep.subr.mxu0 0.0
        %2413 = vmatpush1.msra.mxu0 0.0
        %2414 = vmatprep.subr.mxu0 0.0
        %2415 = vmatpush1.msra.mxu0 0.0
        %2416 = vmatprep.subr.mxu0 0.0
        %2417 = vmatpush1.msra.mxu0 0.0
        %2418 = vmatprep.subr.mxu0 0.0
        %2419 = vmatpush1.msra.mxu0 0.0
        %2420 = vmatprep.mubr.f32.mxu0 0.0
        %2421 = vmatmul.mubr.f32.gmra.mrb[0].mxu0 %v2258
        %v2422 = vpop.f32.mrb[0].mxu0
        %v2423 = vadd.f32 0.0, %v2422
        %v2424 = vpop.f32.mrb[0].mxu0
        %2425 = vmatprep.mubr.f32.mxu0 0.0
        %2426 = vmatmul.mubr.f32.gmra.mrb[0].mxu0 %v2261
        %v2427 = vpop.f32.mrb[0].mxu0
        %v2428 = vadd.f32 0.0, %v2427
        %v2429 = vpop.f32.mrb[0].mxu0
        %2430 = vmatprep.mubr.f32.mxu0 0.0
        %2431 = vmatmul.mubr.f32.gmra.mrb[0].mxu0 %v2264
        %v2432 = vpop.f32.mrb[0].mxu0
        %v2433 = vadd.f32 0.0, %v2432
        %v2434 = vpop.f32.mrb[0].mxu0
        %2435 = vmatprep.mubr.f32.mxu0 0.0
        %2436 = vmatmul.mubr.f32.gmra.mrb[0].mxu0 %v2267
        %v2437 = vpop.f32.mrb[0].mxu0
        %v2438 = vadd.f32 0.0, %v2437
        %v2439 = vpop.f32.mrb[0].mxu0
        %2440 = vmatprep.mubr.f32.mxu0 0.0
        %2441 = vmatmul.mubr.f32.gmra.mrb[0].mxu0 %v2270
        %v2442 = vpop.f32.mrb[0].mxu0
        %v2443 = vadd.f32 0.0, %v2442
        %v2444 = vpop.f32.mrb[0].mxu0
        %2445 = vmatprep.mubr.f32.mxu0 0.0
        %2446 = vmatmul.mubr.f32.gmra.mrb[0].mxu0 %v2273
        %v2447 = vpop.f32.mrb[0].mxu0
        %v2448 = vadd.f32 0.0, %v2447
        %v2449 = vpop.f32.mrb[0].mxu0
        %2450 = vmatprep.mubr.f32.mxu0 0.0
        %2451 = vmatmul.mubr.f32.gmra.mrb[0].mxu0 %v2276
        %v2452 = vpop.f32.mrb[0].mxu0
        %v2453 = vadd.f32 0.0, %v2452
        %v2454 = vpop.f32.mrb[0].mxu0
        %2455 = vmatprep.mubr.f32.mxu0 0.0
        %2456 = vmatmul.mubr.f32.gmra.mrb[0].mxu0 %v2279
        %v2457 = vpop.f32.mrb[0].mxu0
        %v2458 = vadd.f32 0.0, %v2457
        %v2459 = vpop.f32.mrb[0].mxu0
        %2460 = vmatprep.mubr.f32.mxu0 0.0
        %2461 = vmatmul.mubr.f32.gmra.mrb[0].mxu0 %v2282
        %v2462 = vpop.f32.mrb[0].mxu0
        %v2463 = vadd.f32 0.0, %v2462
        %v2464 = vpop.f32.mrb[0].mxu0
        %2465 = vmatprep.mubr.f32.mxu0 0.0
        %2466 = vmatmul.mubr.f32.gmra.mrb[0].mxu0 %v2285
        %v2467 = vpop.f32.mrb[0].mxu0
        %v2468 = vadd.f32 0.0, %v2467
        %v2469 = vpop.f32.mrb[0].mxu0
        %2470 = vmatprep.mubr.f32.mxu0 0.0
        %2471 = vmatmul.mubr.f32.gmra.mrb[0].mxu0 %v2288
        %v2472 = vpop.f32.mrb[0].mxu0
        %v2473 = vadd.f32 0.0, %v2472
        %v2474 = vpop.f32.mrb[0].mxu0
        %2475 = vmatprep.mubr.f32.mxu0 0.0
        %2476 = vmatmul.mubr.f32.gmra.mrb[0].mxu0 %v2291
        %v2477 = vpop.f32.mrb[0].mxu0
        %v2478 = vadd.f32 0.0, %v2477
        %v2479 = vpop.f32.mrb[0].mxu0
        %2480 = vmatprep.mubr.f32.mxu0 0.0
        %2481 = vmatmul.mubr.f32.gmra.mrb[0].mxu0 %v2294
        %v2482 = vpop.f32.mrb[0].mxu0
        %v2483 = vadd.f32 0.0, %v2482
        %v2484 = vpop.f32.mrb[0].mxu0
        %2485 = vmatprep.mubr.f32.mxu0 0.0
        %2486 = vmatmul.mubr.f32.gmra.mrb[0].mxu0 %v2297
        %v2487 = vpop.f32.mrb[0].mxu0
        %v2488 = vadd.f32 0.0, %v2487
        %v2489 = vpop.f32.mrb[0].mxu0
        %2490 = vmatprep.mubr.f32.mxu0 0.0
        %2491 = vmatmul.mubr.f32.gmra.mrb[0].mxu0 %v2300
        %v2492 = vpop.f32.mrb[0].mxu0
        %v2493 = vadd.f32 0.0, %v2492
        %v2494 = vpop.f32.mrb[0].mxu0
        %2495 = vmatprep.mubr.f32.mxu0 0.0
        %2496 = vmatmul.mubr.f32.gmra.mrb[0].mxu0 %v2303
        %v2497 = vpop.f32.mrb[0].mxu0
        %v2498 = vadd.f32 0.0, %v2497
        %v2499 = vpop.f32.mrb[0].mxu0
        %2500 = vmatprep.mubr.f32.mxu0 0.0
        %2501 = vmatmul.mubr.f32.gmra.mrb[0].mxu0 %v2306
        %v2502 = vpop.f32.mrb[0].mxu0
        %v2503 = vadd.f32 0.0, %v2502
        %v2504 = vpop.f32.mrb[0].mxu0
        %2505 = vmatprep.mubr.f32.mxu0 0.0
        %2506 = vmatmul.mubr.f32.gmra.mrb[0].mxu0 %v2309
        %v2507 = vpop.f32.mrb[0].mxu0
        %v2508 = vadd.f32 0.0, %v2507
        %v2509 = vpop.f32.mrb[0].mxu0
        %2510 = vmatprep.mubr.f32.mxu0 0.0
        %2511 = vmatmul.mubr.f32.gmra.mrb[0].mxu0 %v2312
        %v2512 = vpop.f32.mrb[0].mxu0
        %v2513 = vadd.f32 0.0, %v2512
        %v2514 = vpop.f32.mrb[0].mxu0
        %2515 = vmatprep.mubr.f32.mxu0 0.0
        %2516 = vmatmul.mubr.f32.gmra.mrb[0].mxu0 %v2315
        %v2517 = vpop.f32.mrb[0].mxu0
        %v2518 = vadd.f32 0.0, %v2517
        %v2519 = vpop.f32.mrb[0].mxu0
        %2520 = vmatprep.mubr.f32.mxu0 0.0
        %2521 = vmatmul.mubr.f32.gmra.mrb[0].mxu0 %v2318
        %v2522 = vpop.f32.mrb[0].mxu0
        %v2523 = vadd.f32 0.0, %v2522
        %v2524 = vpop.f32.mrb[0].mxu0
        %2525 = vmatprep.mubr.f32.mxu0 0.0
        %2526 = vmatmul.mubr.f32.gmra.mrb[0].mxu0 %v2321
        %v2527 = vpop.f32.mrb[0].mxu0
        %v2528 = vadd.f32 0.0, %v2527
        %v2529 = vpop.f32.mrb[0].mxu0
        %2530 = vmatprep.mubr.f32.mxu0 0.0
        %2531 = vmatmul.mubr.f32.gmra.mrb[0].mxu0 %v2324
        %v2532 = vpop.f32.mrb[0].mxu0
        %v2533 = vadd.f32 0.0, %v2532
        %v2534 = vpop.f32.mrb[0].mxu0
        %2535 = vmatprep.mubr.f32.mxu0 0.0
        %2536 = vmatmul.mubr.f32.gmra.mrb[0].mxu0 %v2327
        %v2537 = vpop.f32.mrb[0].mxu0
        %v2538 = vadd.f32 0.0, %v2537
        %v2539 = vpop.f32.mrb[0].mxu0
        %2540 = vmatprep.mubr.f32.mxu0 0.0
        %2541 = vmatmul.mubr.f32.gmra.mrb[0].mxu0 %v2330
        %v2542 = vpop.f32.mrb[0].mxu0
        %v2543 = vadd.f32 0.0, %v2542
        %v2544 = vpop.f32.mrb[0].mxu0
        %2545 = vmatprep.mubr.f32.mxu0 0.0
        %2546 = vmatmul.mubr.f32.gmra.mrb[0].mxu0 %v2333
        %v2547 = vpop.f32.mrb[0].mxu0
        %v2548 = vadd.f32 0.0, %v2547
        %v2549 = vpop.f32.mrb[0].mxu0
        %2550 = vmatprep.mubr.f32.mxu0 0.0
        %2551 = vmatmul.mubr.f32.gmra.mrb[0].mxu0 %v2336
        %v2552 = vpop.f32.mrb[0].mxu0
        %v2553 = vadd.f32 0.0, %v2552
        %v2554 = vpop.f32.mrb[0].mxu0
        %2555 = vmatprep.mubr.f32.mxu0 0.0
        %2556 = vmatmul.mubr.f32.gmra.mrb[0].mxu0 %v2339
        %v2557 = vpop.f32.mrb[0].mxu0
        %v2558 = vadd.f32 0.0, %v2557
        %v2559 = vpop.f32.mrb[0].mxu0
        %2560 = vmatprep.mubr.f32.mxu0 0.0
        %2561 = vmatmul.mubr.f32.gmra.mrb[0].mxu0 %v2342
        %v2562 = vpop.f32.mrb[0].mxu0
        %v2563 = vadd.f32 0.0, %v2562
        %v2564 = vpop.f32.mrb[0].mxu0
        %2565 = vmatprep.mubr.f32.mxu0 0.0
        %2566 = vmatmul.mubr.f32.gmra.mrb[0].mxu0 %v2345
        %v2567 = vpop.f32.mrb[0].mxu0
        %v2568 = vadd.f32 0.0, %v2567
        %v2569 = vpop.f32.mrb[0].mxu0
        %2570 = vmatprep.mubr.f32.mxu0 0.0
        %2571 = vmatmul.mubr.f32.gmra.mrb[0].mxu0 %v2348
        %v2572 = vpop.f32.mrb[0].mxu0
        %v2573 = vadd.f32 0.0, %v2572
        %v2574 = vpop.f32.mrb[0].mxu0
        %2575 = vmatprep.mubr.f32.mxu0 0.0
        %2576 = vmatmul.mubr.f32.gmra.mrb[0].mxu0 %v2351
        %v2577 = vpop.f32.mrb[0].mxu0
        %v2578 = vadd.f32 0.0, %v2577
        %v2579 = vpop.f32.mrb[0].mxu0
        %2580 = vdwg.mxu0
        %v2581 = vadd.f32 %v2191, %v2423
        %v2582 = vadd.f32 %v2192, %v2428
        %v2583 = vadd.f32 %v2193, %v2433
        %v2584 = vadd.f32 %v2194, %v2438
        %v2585 = vadd.f32 %v2195, %v2443
        %v2586 = vadd.f32 %v2196, %v2448
        %v2587 = vadd.f32 %v2197, %v2453
        %v2588 = vadd.f32 %v2198, %v2458
        %v2589 = vadd.f32 %v2199, %v2463
        %v2590 = vadd.f32 %v2200, %v2468
        %v2591 = vadd.f32 %v2201, %v2473
        %v2592 = vadd.f32 %v2202, %v2478
        %v2593 = vadd.f32 %v2203, %v2483
        %v2594 = vadd.f32 %v2204, %v2488
        %v2595 = vadd.f32 %v2205, %v2493
        %v2596 = vadd.f32 %v2206, %v2498
        %v2597 = vadd.f32 %v2207, %v2503
        %v2598 = vadd.f32 %v2208, %v2508
        %v2599 = vadd.f32 %v2209, %v2513
        %v2600 = vadd.f32 %v2210, %v2518
        %v2601 = vadd.f32 %v2211, %v2523
        %v2602 = vadd.f32 %v2212, %v2528
        %v2603 = vadd.f32 %v2213, %v2533
        %v2604 = vadd.f32 %v2214, %v2538
        %v2605 = vadd.f32 %v2215, %v2543
        %v2606 = vadd.f32 %v2216, %v2548
        %v2607 = vadd.f32 %v2217, %v2553
        %v2608 = vadd.f32 %v2218, %v2558
        %v2609 = vadd.f32 %v2219, %v2563
        %v2610 = vadd.f32 %v2220, %v2568
        %v2611 = vadd.f32 %v2221, %v2573
        %v2612 = vadd.f32 %v2222, %v2578
        %s2613 = scalar_lea.vmem [#allocation2], 48
        %v2614 = vld [vmem:[%s2613] sm:$0xff]
        %v2615 = vld [vmem:[%s2613 + $0x8] sm:$0xff]
        %v2616 = vld [vmem:[%s2613 + $0x18] sm:$0xff]
        %v2617 = vld [vmem:[%s2613 + $0x20] sm:$0xff]
        %v2618 = vld [vmem:[%s2613 + $0x30] sm:$0xff]
        %v2619 = vld [vmem:[%s2613 + $0x38] sm:$0xff]
        %v2620 = vld [vmem:[%s2613 + $0x48] sm:$0xff]
        %v2621 = vld [vmem:[%s2613 + $0x50] sm:$0xff]
        %v2622 = vld [vmem:[%s2613 + $0x60] sm:$0xff]
        %v2623 = vld [vmem:[%s2613 + $0x68] sm:$0xff]
        %v2624 = vld [vmem:[%s2613 + $0x78] sm:$0xff]
        %v2625 = vld [vmem:[%s2613 + $0x80] sm:$0xff]
        %v2626 = vld [vmem:[%s2613 + $0x90] sm:$0xff]
        %v2627 = vld [vmem:[%s2613 + $0x98] sm:$0xff]
        %v2628 = vld [vmem:[%s2613 + $0xa8] sm:$0xff]
        %v2629 = vld [vmem:[%s2613 + $0xb0] sm:$0xff]
        %v2630 = vld [vmem:[%s2613 + $0xc0] sm:$0xff]
        %v2631 = vld [vmem:[%s2613 + $0xc8] sm:$0xff]
        %v2632 = vld [vmem:[%s2613 + $0xd8] sm:$0xff]
        %v2633 = vld [vmem:[%s2613 + $0xe0] sm:$0xff]
        %v2634 = vld [vmem:[%s2613 + $0xf0] sm:$0xff]
        %v2635 = vld [vmem:[%s2613 + $0xf8] sm:$0xff]
        %v2636 = vld [vmem:[%s2613 + $0x108] sm:$0xff]
        %v2637 = vld [vmem:[%s2613 + $0x110] sm:$0xff]
        %v2638 = vld [vmem:[%s2613 + $0x120] sm:$0xff]
        %v2639 = vld [vmem:[%s2613 + $0x128] sm:$0xff]
        %v2640 = vld [vmem:[%s2613 + $0x138] sm:$0xff]
        %v2641 = vld [vmem:[%s2613 + $0x140] sm:$0xff]
        %v2642 = vld [vmem:[%s2613 + $0x150] sm:$0xff]
        %v2643 = vld [vmem:[%s2613 + $0x158] sm:$0xff]
        %v2644 = vld [vmem:[%s2613 + $0x168] sm:$0xff]
        %v2645 = vld [vmem:[%s2613 + $0x170] sm:$0xff]
        %s2646 = scalar_lea.vmem [#allocation6], 24
        %v2647 = vld [vmem:[%s2646] sm:$0xf]
        %v2649 = vsel %vm216, %v2614, 0
        %v2652 = vsel %vm216, %v2615, 0
        %v2655 = vsel %vm216, %v2616, 0
        %v2658 = vsel %vm216, %v2617, 0
        %v2661 = vsel %vm216, %v2618, 0
        %v2664 = vsel %vm216, %v2619, 0
        %v2667 = vsel %vm216, %v2620, 0
        %v2670 = vsel %vm216, %v2621, 0
        %v2673 = vsel %vm216, %v2622, 0
        %v2676 = vsel %vm216, %v2623, 0
        %v2679 = vsel %vm216, %v2624, 0
        %v2682 = vsel %vm216, %v2625, 0
        %v2685 = vsel %vm216, %v2626, 0
        %v2688 = vsel %vm216, %v2627, 0
        %v2691 = vsel %vm216, %v2628, 0
        %v2694 = vsel %vm216, %v2629, 0
        %v2697 = vsel %vm216, %v2630, 0
        %v2700 = vsel %vm216, %v2631, 0
        %v2703 = vsel %vm216, %v2632, 0
        %v2706 = vsel %vm216, %v2633, 0
        %v2709 = vsel %vm216, %v2634, 0
        %v2712 = vsel %vm216, %v2635, 0
        %v2715 = vsel %vm216, %v2636, 0
        %v2718 = vsel %vm216, %v2637, 0
        %v2721 = vsel %vm216, %v2638, 0
        %v2724 = vsel %vm216, %v2639, 0
        %v2727 = vsel %vm216, %v2640, 0
        %v2730 = vsel %vm216, %v2641, 0
        %v2733 = vsel %vm216, %v2642, 0
        %v2736 = vsel %vm216, %v2643, 0
        %v2739 = vsel %vm216, %v2644, 0
        %v2742 = vsel %vm216, %v2645, 0
        %v2745 = vsel %vm500, %v2647, 0
        %2747 = vmatprep.subr.mxu0 0.0
        %2748 = vmatpush1.msra.mxu0 %v2745
        %2749 = vmatprep.subr.mxu0 0.0
        %2750 = vmatpush1.msra.mxu0 0.0
        %2751 = vmatprep.subr.mxu0 0.0
        %2752 = vmatpush1.msra.mxu0 0.0
        %2753 = vmatprep.subr.mxu0 0.0
        %2754 = vmatpush1.msra.mxu0 0.0
        %2755 = vmatprep.subr.mxu0 0.0
        %2756 = vmatpush1.msra.mxu0 0.0
        %2757 = vmatprep.subr.mxu0 0.0
        %2758 = vmatpush1.msra.mxu0 0.0
        %2759 = vmatprep.subr.mxu0 0.0
        %2760 = vmatpush1.msra.mxu0 0.0
        %2761 = vmatprep.subr.mxu0 0.0
        %2762 = vmatpush1.msra.mxu0 0.0
        %2763 = vmatprep.subr.mxu0 0.0
        %2764 = vmatpush1.msra.mxu0 0.0
        %2765 = vmatprep.subr.mxu0 0.0
        %2766 = vmatpush1.msra.mxu0 0.0
        %2767 = vmatprep.subr.mxu0 0.0
        %2768 = vmatpush1.msra.mxu0 0.0
        %2769 = vmatprep.subr.mxu0 0.0
        %2770 = vmatpush1.msra.mxu0 0.0
        %2771 = vmatprep.subr.mxu0 0.0
        %2772 = vmatpush1.msra.mxu0 0.0
        %2773 = vmatprep.subr.mxu0 0.0
        %2774 = vmatpush1.msra.mxu0 0.0
        %2775 = vmatprep.subr.mxu0 0.0
        %2776 = vmatpush1.msra.mxu0 0.0
        %2777 = vmatprep.subr.mxu0 0.0
        %2778 = vmatpush1.msra.mxu0 0.0
        %2779 = vmatprep.subr.mxu0 0.0
        %2780 = vmatpush1.msra.mxu0 0.0
        %2781 = vmatprep.subr.mxu0 0.0
        %2782 = vmatpush1.msra.mxu0 0.0
        %2783 = vmatprep.subr.mxu0 0.0
        %2784 = vmatpush1.msra.mxu0 0.0
        %2785 = vmatprep.subr.mxu0 0.0
        %2786 = vmatpush1.msra.mxu0 0.0
        %2787 = vmatprep.subr.mxu0 0.0
        %2788 = vmatpush1.msra.mxu0 0.0
        %2789 = vmatprep.subr.mxu0 0.0
        %2790 = vmatpush1.msra.mxu0 0.0
        %2791 = vmatprep.subr.mxu0 0.0
        %2792 = vmatpush1.msra.mxu0 0.0
        %2793 = vmatprep.subr.mxu0 0.0
        %2794 = vmatpush1.msra.mxu0 0.0
        %2795 = vmatprep.subr.mxu0 0.0
        %2796 = vmatpush1.msra.mxu0 0.0
        %2797 = vmatprep.subr.mxu0 0.0
        %2798 = vmatpush1.msra.mxu0 0.0
        %2799 = vmatprep.subr.mxu0 0.0
        %2800 = vmatpush1.msra.mxu0 0.0
        %2801 = vmatprep.subr.mxu0 0.0
        %2802 = vmatpush1.msra.mxu0 0.0
        %2803 = vmatprep.subr.mxu0 0.0
        %2804 = vmatpush1.msra.mxu0 0.0
        %2805 = vmatprep.subr.mxu0 0.0
        %2806 = vmatpush1.msra.mxu0 0.0
        %2807 = vmatprep.subr.mxu0 0.0
        %2808 = vmatpush1.msra.mxu0 0.0
        %2809 = vmatprep.subr.mxu0 0.0
        %2810 = vmatpush1.msra.mxu0 0.0
        %2811 = vmatprep.mubr.f32.mxu0 0.0
        %2812 = vmatmul.mubr.f32.gmra.mrb[0].mxu0 %v2649
        %v2813 = vpop.f32.mrb[0].mxu0
        %v2814 = vadd.f32 0.0, %v2813
        %v2815 = vpop.f32.mrb[0].mxu0
        %2816 = vmatprep.mubr.f32.mxu0 0.0
        %2817 = vmatmul.mubr.f32.gmra.mrb[0].mxu0 %v2652
        %v2818 = vpop.f32.mrb[0].mxu0
        %v2819 = vadd.f32 0.0, %v2818
        %v2820 = vpop.f32.mrb[0].mxu0
        %2821 = vmatprep.mubr.f32.mxu0 0.0
        %2822 = vmatmul.mubr.f32.gmra.mrb[0].mxu0 %v2655
        %v2823 = vpop.f32.mrb[0].mxu0
        %v2824 = vadd.f32 0.0, %v2823
        %v2825 = vpop.f32.mrb[0].mxu0
        %2826 = vmatprep.mubr.f32.mxu0 0.0
        %2827 = vmatmul.mubr.f32.gmra.mrb[0].mxu0 %v2658
        %v2828 = vpop.f32.mrb[0].mxu0
        %v2829 = vadd.f32 0.0, %v2828
        %v2830 = vpop.f32.mrb[0].mxu0
        %2831 = vmatprep.mubr.f32.mxu0 0.0
        %2832 = vmatmul.mubr.f32.gmra.mrb[0].mxu0 %v2661
        %v2833 = vpop.f32.mrb[0].mxu0
        %v2834 = vadd.f32 0.0, %v2833
        %v2835 = vpop.f32.mrb[0].mxu0
        %2836 = vmatprep.mubr.f32.mxu0 0.0
        %2837 = vmatmul.mubr.f32.gmra.mrb[0].mxu0 %v2664
        %v2838 = vpop.f32.mrb[0].mxu0
        %v2839 = vadd.f32 0.0, %v2838
        %v2840 = vpop.f32.mrb[0].mxu0
        %2841 = vmatprep.mubr.f32.mxu0 0.0
        %2842 = vmatmul.mubr.f32.gmra.mrb[0].mxu0 %v2667
        %v2843 = vpop.f32.mrb[0].mxu0
        %v2844 = vadd.f32 0.0, %v2843
        %v2845 = vpop.f32.mrb[0].mxu0
        %2846 = vmatprep.mubr.f32.mxu0 0.0
        %2847 = vmatmul.mubr.f32.gmra.mrb[0].mxu0 %v2670
        %v2848 = vpop.f32.mrb[0].mxu0
        %v2849 = vadd.f32 0.0, %v2848
        %v2850 = vpop.f32.mrb[0].mxu0
        %2851 = vmatprep.mubr.f32.mxu0 0.0
        %2852 = vmatmul.mubr.f32.gmra.mrb[0].mxu0 %v2673
        %v2853 = vpop.f32.mrb[0].mxu0
        %v2854 = vadd.f32 0.0, %v2853
        %v2855 = vpop.f32.mrb[0].mxu0
        %2856 = vmatprep.mubr.f32.mxu0 0.0
        %2857 = vmatmul.mubr.f32.gmra.mrb[0].mxu0 %v2676
        %v2858 = vpop.f32.mrb[0].mxu0
        %v2859 = vadd.f32 0.0, %v2858
        %v2860 = vpop.f32.mrb[0].mxu0
        %2861 = vmatprep.mubr.f32.mxu0 0.0
        %2862 = vmatmul.mubr.f32.gmra.mrb[0].mxu0 %v2679
        %v2863 = vpop.f32.mrb[0].mxu0
        %v2864 = vadd.f32 0.0, %v2863
        %v2865 = vpop.f32.mrb[0].mxu0
        %2866 = vmatprep.mubr.f32.mxu0 0.0
        %2867 = vmatmul.mubr.f32.gmra.mrb[0].mxu0 %v2682
        %v2868 = vpop.f32.mrb[0].mxu0
        %v2869 = vadd.f32 0.0, %v2868
        %v2870 = vpop.f32.mrb[0].mxu0
        %2871 = vmatprep.mubr.f32.mxu0 0.0
        %2872 = vmatmul.mubr.f32.gmra.mrb[0].mxu0 %v2685
        %v2873 = vpop.f32.mrb[0].mxu0
        %v2874 = vadd.f32 0.0, %v2873
        %v2875 = vpop.f32.mrb[0].mxu0
        %2876 = vmatprep.mubr.f32.mxu0 0.0
        %2877 = vmatmul.mubr.f32.gmra.mrb[0].mxu0 %v2688
        %v2878 = vpop.f32.mrb[0].mxu0
        %v2879 = vadd.f32 0.0, %v2878
        %v2880 = vpop.f32.mrb[0].mxu0
        %2881 = vmatprep.mubr.f32.mxu0 0.0
        %2882 = vmatmul.mubr.f32.gmra.mrb[0].mxu0 %v2691
        %v2883 = vpop.f32.mrb[0].mxu0
        %v2884 = vadd.f32 0.0, %v2883
        %v2885 = vpop.f32.mrb[0].mxu0
        %2886 = vmatprep.mubr.f32.mxu0 0.0
        %2887 = vmatmul.mubr.f32.gmra.mrb[0].mxu0 %v2694
        %v2888 = vpop.f32.mrb[0].mxu0
        %v2889 = vadd.f32 0.0, %v2888
        %v2890 = vpop.f32.mrb[0].mxu0
        %2891 = vmatprep.mubr.f32.mxu0 0.0
        %2892 = vmatmul.mubr.f32.gmra.mrb[0].mxu0 %v2697
        %v2893 = vpop.f32.mrb[0].mxu0
        %v2894 = vadd.f32 0.0, %v2893
        %v2895 = vpop.f32.mrb[0].mxu0
        %2896 = vmatprep.mubr.f32.mxu0 0.0
        %2897 = vmatmul.mubr.f32.gmra.mrb[0].mxu0 %v2700
        %v2898 = vpop.f32.mrb[0].mxu0
        %v2899 = vadd.f32 0.0, %v2898
        %v2900 = vpop.f32.mrb[0].mxu0
        %2901 = vmatprep.mubr.f32.mxu0 0.0
        %2902 = vmatmul.mubr.f32.gmra.mrb[0].mxu0 %v2703
        %v2903 = vpop.f32.mrb[0].mxu0
        %v2904 = vadd.f32 0.0, %v2903
        %v2905 = vpop.f32.mrb[0].mxu0
        %2906 = vmatprep.mubr.f32.mxu0 0.0
        %2907 = vmatmul.mubr.f32.gmra.mrb[0].mxu0 %v2706
        %v2908 = vpop.f32.mrb[0].mxu0
        %v2909 = vadd.f32 0.0, %v2908
        %v2910 = vpop.f32.mrb[0].mxu0
        %2911 = vmatprep.mubr.f32.mxu0 0.0
        %2912 = vmatmul.mubr.f32.gmra.mrb[0].mxu0 %v2709
        %v2913 = vpop.f32.mrb[0].mxu0
        %v2914 = vadd.f32 0.0, %v2913
        %v2915 = vpop.f32.mrb[0].mxu0
        %2916 = vmatprep.mubr.f32.mxu0 0.0
        %2917 = vmatmul.mubr.f32.gmra.mrb[0].mxu0 %v2712
        %v2918 = vpop.f32.mrb[0].mxu0
        %v2919 = vadd.f32 0.0, %v2918
        %v2920 = vpop.f32.mrb[0].mxu0
        %2921 = vmatprep.mubr.f32.mxu0 0.0
        %2922 = vmatmul.mubr.f32.gmra.mrb[0].mxu0 %v2715
        %v2923 = vpop.f32.mrb[0].mxu0
        %v2924 = vadd.f32 0.0, %v2923
        %v2925 = vpop.f32.mrb[0].mxu0
        %2926 = vmatprep.mubr.f32.mxu0 0.0
        %2927 = vmatmul.mubr.f32.gmra.mrb[0].mxu0 %v2718
        %v2928 = vpop.f32.mrb[0].mxu0
        %v2929 = vadd.f32 0.0, %v2928
        %v2930 = vpop.f32.mrb[0].mxu0
        %2931 = vmatprep.mubr.f32.mxu0 0.0
        %2932 = vmatmul.mubr.f32.gmra.mrb[0].mxu0 %v2721
        %v2933 = vpop.f32.mrb[0].mxu0
        %v2934 = vadd.f32 0.0, %v2933
        %v2935 = vpop.f32.mrb[0].mxu0
        %2936 = vmatprep.mubr.f32.mxu0 0.0
        %2937 = vmatmul.mubr.f32.gmra.mrb[0].mxu0 %v2724
        %v2938 = vpop.f32.mrb[0].mxu0
        %v2939 = vadd.f32 0.0, %v2938
        %v2940 = vpop.f32.mrb[0].mxu0
        %2941 = vmatprep.mubr.f32.mxu0 0.0
        %2942 = vmatmul.mubr.f32.gmra.mrb[0].mxu0 %v2727
        %v2943 = vpop.f32.mrb[0].mxu0
        %v2944 = vadd.f32 0.0, %v2943
        %v2945 = vpop.f32.mrb[0].mxu0
        %2946 = vmatprep.mubr.f32.mxu0 0.0
        %2947 = vmatmul.mubr.f32.gmra.mrb[0].mxu0 %v2730
        %v2948 = vpop.f32.mrb[0].mxu0
        %v2949 = vadd.f32 0.0, %v2948
        %v2950 = vpop.f32.mrb[0].mxu0
        %2951 = vmatprep.mubr.f32.mxu0 0.0
        %2952 = vmatmul.mubr.f32.gmra.mrb[0].mxu0 %v2733
        %v2953 = vpop.f32.mrb[0].mxu0
        %v2954 = vadd.f32 0.0, %v2953
        %v2955 = vpop.f32.mrb[0].mxu0
        %2956 = vmatprep.mubr.f32.mxu0 0.0
        %2957 = vmatmul.mubr.f32.gmra.mrb[0].mxu0 %v2736
        %v2958 = vpop.f32.mrb[0].mxu0
        %v2959 = vadd.f32 0.0, %v2958
        %v2960 = vpop.f32.mrb[0].mxu0
        %2961 = vmatprep.mubr.f32.mxu0 0.0
        %2962 = vmatmul.mubr.f32.gmra.mrb[0].mxu0 %v2739
        %v2963 = vpop.f32.mrb[0].mxu0
        %v2964 = vadd.f32 0.0, %v2963
        %v2965 = vpop.f32.mrb[0].mxu0
        %2966 = vmatprep.mubr.f32.mxu0 0.0
        %2967 = vmatmul.mubr.f32.gmra.mrb[0].mxu0 %v2742
        %v2968 = vpop.f32.mrb[0].mxu0
        %v2969 = vadd.f32 0.0, %v2968
        %v2970 = vpop.f32.mrb[0].mxu0
        %2971 = vdwg.mxu0
        %v2972 = vadd.f32 %v2581, %v2814
        %v2973 = vadd.f32 %v2582, %v2819
        %v2974 = vadd.f32 %v2583, %v2824
        %v2975 = vadd.f32 %v2584, %v2829
        %v2976 = vadd.f32 %v2585, %v2834
        %v2977 = vadd.f32 %v2586, %v2839
        %v2978 = vadd.f32 %v2587, %v2844
        %v2979 = vadd.f32 %v2588, %v2849
        %v2980 = vadd.f32 %v2589, %v2854
        %v2981 = vadd.f32 %v2590, %v2859
        %v2982 = vadd.f32 %v2591, %v2864
        %v2983 = vadd.f32 %v2592, %v2869
        %v2984 = vadd.f32 %v2593, %v2874
        %v2985 = vadd.f32 %v2594, %v2879
        %v2986 = vadd.f32 %v2595, %v2884
        %v2987 = vadd.f32 %v2596, %v2889
        %v2988 = vadd.f32 %v2597, %v2894
        %v2989 = vadd.f32 %v2598, %v2899
        %v2990 = vadd.f32 %v2599, %v2904
        %v2991 = vadd.f32 %v2600, %v2909
        %v2992 = vadd.f32 %v2601, %v2914
        %v2993 = vadd.f32 %v2602, %v2919
        %v2994 = vadd.f32 %v2603, %v2924
        %v2995 = vadd.f32 %v2604, %v2929
        %v2996 = vadd.f32 %v2605, %v2934
        %v2997 = vadd.f32 %v2606, %v2939
        %v2998 = vadd.f32 %v2607, %v2944
        %v2999 = vadd.f32 %v2608, %v2949
        %v3000 = vadd.f32 %v2609, %v2954
        %v3001 = vadd.f32 %v2610, %v2959
        %v3002 = vadd.f32 %v2611, %v2964
        %v3003 = vadd.f32 %v2612, %v2969
        %v3004 = vld [vmem:[%s2613 + $0x1] sm:$0xff]
        %v3005 = vld [vmem:[%s2613 + $0x9] sm:$0xff]
        %v3006 = vld [vmem:[%s2613 + $0x19] sm:$0xff]
        %v3007 = vld [vmem:[%s2613 + $0x21] sm:$0xff]
        %v3008 = vld [vmem:[%s2613 + $0x31] sm:$0xff]
        %v3009 = vld [vmem:[%s2613 + $0x39] sm:$0xff]
        %v3010 = vld [vmem:[%s2613 + $0x49] sm:$0xff]
        %v3011 = vld [vmem:[%s2613 + $0x51] sm:$0xff]
        %v3012 = vld [vmem:[%s2613 + $0x61] sm:$0xff]
        %v3013 = vld [vmem:[%s2613 + $0x69] sm:$0xff]
        %v3014 = vld [vmem:[%s2613 + $0x79] sm:$0xff]
        %v3015 = vld [vmem:[%s2613 + $0x81] sm:$0xff]
        %v3016 = vld [vmem:[%s2613 + $0x91] sm:$0xff]
        %v3017 = vld [vmem:[%s2613 + $0x99] sm:$0xff]
        %v3018 = vld [vmem:[%s2613 + $0xa9] sm:$0xff]
        %v3019 = vld [vmem:[%s2613 + $0xb1] sm:$0xff]
        %v3020 = vld [vmem:[%s2613 + $0xc1] sm:$0xff]
        %v3021 = vld [vmem:[%s2613 + $0xc9] sm:$0xff]
        %v3022 = vld [vmem:[%s2613 + $0xd9] sm:$0xff]
        %v3023 = vld [vmem:[%s2613 + $0xe1] sm:$0xff]
        %v3024 = vld [vmem:[%s2613 + $0xf1] sm:$0xff]
        %v3025 = vld [vmem:[%s2613 + $0xf9] sm:$0xff]
        %v3026 = vld [vmem:[%s2613 + $0x109] sm:$0xff]
        %v3027 = vld [vmem:[%s2613 + $0x111] sm:$0xff]
        %v3028 = vld [vmem:[%s2613 + $0x121] sm:$0xff]
        %v3029 = vld [vmem:[%s2613 + $0x129] sm:$0xff]
        %v3030 = vld [vmem:[%s2613 + $0x139] sm:$0xff]
        %v3031 = vld [vmem:[%s2613 + $0x141] sm:$0xff]
        %v3032 = vld [vmem:[%s2613 + $0x151] sm:$0xff]
        %v3033 = vld [vmem:[%s2613 + $0x159] sm:$0xff]
        %v3034 = vld [vmem:[%s2613 + $0x169] sm:$0xff]
        %v3035 = vld [vmem:[%s2613 + $0x171] sm:$0xff]
        %s3036 = scalar_lea.vmem [#allocation6], 28
        %v3037 = vld [vmem:[%s3036] sm:$0xf]
        %v3039 = vsel %vm216, %v3004, 0
        %v3042 = vsel %vm216, %v3005, 0
        %v3045 = vsel %vm216, %v3006, 0
        %v3048 = vsel %vm216, %v3007, 0
        %v3051 = vsel %vm216, %v3008, 0
        %v3054 = vsel %vm216, %v3009, 0
        %v3057 = vsel %vm216, %v3010, 0
        %v3060 = vsel %vm216, %v3011, 0
        %v3063 = vsel %vm216, %v3012, 0
        %v3066 = vsel %vm216, %v3013, 0
        %v3069 = vsel %vm216, %v3014, 0
        %v3072 = vsel %vm216, %v3015, 0
        %v3075 = vsel %vm216, %v3016, 0
        %v3078 = vsel %vm216, %v3017, 0
        %v3081 = vsel %vm216, %v3018, 0
        %v3084 = vsel %vm216, %v3019, 0
        %v3087 = vsel %vm216, %v3020, 0
        %v3090 = vsel %vm216, %v3021, 0
        %v3093 = vsel %vm216, %v3022, 0
        %v3096 = vsel %vm216, %v3023, 0
        %v3099 = vsel %vm216, %v3024, 0
        %v3102 = vsel %vm216, %v3025, 0
        %v3105 = vsel %vm216, %v3026, 0
        %v3108 = vsel %vm216, %v3027, 0
        %v3111 = vsel %vm216, %v3028, 0
        %v3114 = vsel %vm216, %v3029, 0
        %v3117 = vsel %vm216, %v3030, 0
        %v3120 = vsel %vm216, %v3031, 0
        %v3123 = vsel %vm216, %v3032, 0
        %v3126 = vsel %vm216, %v3033, 0
        %v3129 = vsel %vm216, %v3034, 0
        %v3132 = vsel %vm216, %v3035, 0
        %v3135 = vsel %vm500, %v3037, 0
        %3137 = vmatprep.subr.mxu0 0.0
        %3138 = vmatpush1.msra.mxu0 %v3135
        %3139 = vmatprep.subr.mxu0 0.0
        %3140 = vmatpush1.msra.mxu0 0.0
        %3141 = vmatprep.subr.mxu0 0.0
        %3142 = vmatpush1.msra.mxu0 0.0
        %3143 = vmatprep.subr.mxu0 0.0
        %3144 = vmatpush1.msra.mxu0 0.0
        %3145 = vmatprep.subr.mxu0 0.0
        %3146 = vmatpush1.msra.mxu0 0.0
        %3147 = vmatprep.subr.mxu0 0.0
        %3148 = vmatpush1.msra.mxu0 0.0
        %3149 = vmatprep.subr.mxu0 0.0
        %3150 = vmatpush1.msra.mxu0 0.0
        %3151 = vmatprep.subr.mxu0 0.0
        %3152 = vmatpush1.msra.mxu0 0.0
        %3153 = vmatprep.subr.mxu0 0.0
        %3154 = vmatpush1.msra.mxu0 0.0
        %3155 = vmatprep.subr.mxu0 0.0
        %3156 = vmatpush1.msra.mxu0 0.0
        %3157 = vmatprep.subr.mxu0 0.0
        %3158 = vmatpush1.msra.mxu0 0.0
        %3159 = vmatprep.subr.mxu0 0.0
        %3160 = vmatpush1.msra.mxu0 0.0
        %3161 = vmatprep.subr.mxu0 0.0
        %3162 = vmatpush1.msra.mxu0 0.0
        %3163 = vmatprep.subr.mxu0 0.0
        %3164 = vmatpush1.msra.mxu0 0.0
        %3165 = vmatprep.subr.mxu0 0.0
        %3166 = vmatpush1.msra.mxu0 0.0
        %3167 = vmatprep.subr.mxu0 0.0
        %3168 = vmatpush1.msra.mxu0 0.0
        %3169 = vmatprep.subr.mxu0 0.0
        %3170 = vmatpush1.msra.mxu0 0.0
        %3171 = vmatprep.subr.mxu0 0.0
        %3172 = vmatpush1.msra.mxu0 0.0
        %3173 = vmatprep.subr.mxu0 0.0
        %3174 = vmatpush1.msra.mxu0 0.0
        %3175 = vmatprep.subr.mxu0 0.0
        %3176 = vmatpush1.msra.mxu0 0.0
        %3177 = vmatprep.subr.mxu0 0.0
        %3178 = vmatpush1.msra.mxu0 0.0
        %3179 = vmatprep.subr.mxu0 0.0
        %3180 = vmatpush1.msra.mxu0 0.0
        %3181 = vmatprep.subr.mxu0 0.0
        %3182 = vmatpush1.msra.mxu0 0.0
        %3183 = vmatprep.subr.mxu0 0.0
        %3184 = vmatpush1.msra.mxu0 0.0
        %3185 = vmatprep.subr.mxu0 0.0
        %3186 = vmatpush1.msra.mxu0 0.0
        %3187 = vmatprep.subr.mxu0 0.0
        %3188 = vmatpush1.msra.mxu0 0.0
        %3189 = vmatprep.subr.mxu0 0.0
        %3190 = vmatpush1.msra.mxu0 0.0
        %3191 = vmatprep.subr.mxu0 0.0
        %3192 = vmatpush1.msra.mxu0 0.0
        %3193 = vmatprep.subr.mxu0 0.0
        %3194 = vmatpush1.msra.mxu0 0.0
        %3195 = vmatprep.subr.mxu0 0.0
        %3196 = vmatpush1.msra.mxu0 0.0
        %3197 = vmatprep.subr.mxu0 0.0
        %3198 = vmatpush1.msra.mxu0 0.0
        %3199 = vmatprep.subr.mxu0 0.0
        %3200 = vmatpush1.msra.mxu0 0.0
        %3201 = vmatprep.mubr.f32.mxu0 0.0
        %3202 = vmatmul.mubr.f32.gmra.mrb[0].mxu0 %v3039
        %v3203 = vpop.f32.mrb[0].mxu0
        %v3204 = vadd.f32 0.0, %v3203
        %v3205 = vpop.f32.mrb[0].mxu0
        %3206 = vmatprep.mubr.f32.mxu0 0.0
        %3207 = vmatmul.mubr.f32.gmra.mrb[0].mxu0 %v3042
        %v3208 = vpop.f32.mrb[0].mxu0
        %v3209 = vadd.f32 0.0, %v3208
        %v3210 = vpop.f32.mrb[0].mxu0
        %3211 = vmatprep.mubr.f32.mxu0 0.0
        %3212 = vmatmul.mubr.f32.gmra.mrb[0].mxu0 %v3045
        %v3213 = vpop.f32.mrb[0].mxu0
        %v3214 = vadd.f32 0.0, %v3213
        %v3215 = vpop.f32.mrb[0].mxu0
        %3216 = vmatprep.mubr.f32.mxu0 0.0
        %3217 = vmatmul.mubr.f32.gmra.mrb[0].mxu0 %v3048
        %v3218 = vpop.f32.mrb[0].mxu0
        %v3219 = vadd.f32 0.0, %v3218
        %v3220 = vpop.f32.mrb[0].mxu0
        %3221 = vmatprep.mubr.f32.mxu0 0.0
        %3222 = vmatmul.mubr.f32.gmra.mrb[0].mxu0 %v3051
        %v3223 = vpop.f32.mrb[0].mxu0
        %v3224 = vadd.f32 0.0, %v3223
        %v3225 = vpop.f32.mrb[0].mxu0
        %3226 = vmatprep.mubr.f32.mxu0 0.0
        %3227 = vmatmul.mubr.f32.gmra.mrb[0].mxu0 %v3054
        %v3228 = vpop.f32.mrb[0].mxu0
        %v3229 = vadd.f32 0.0, %v3228
        %v3230 = vpop.f32.mrb[0].mxu0
        %3231 = vmatprep.mubr.f32.mxu0 0.0
        %3232 = vmatmul.mubr.f32.gmra.mrb[0].mxu0 %v3057
        %v3233 = vpop.f32.mrb[0].mxu0
        %v3234 = vadd.f32 0.0, %v3233
        %v3235 = vpop.f32.mrb[0].mxu0
        %3236 = vmatprep.mubr.f32.mxu0 0.0
        %3237 = vmatmul.mubr.f32.gmra.mrb[0].mxu0 %v3060
        %v3238 = vpop.f32.mrb[0].mxu0
        %v3239 = vadd.f32 0.0, %v3238
        %v3240 = vpop.f32.mrb[0].mxu0
        %3241 = vmatprep.mubr.f32.mxu0 0.0
        %3242 = vmatmul.mubr.f32.gmra.mrb[0].mxu0 %v3063
        %v3243 = vpop.f32.mrb[0].mxu0
        %v3244 = vadd.f32 0.0, %v3243
        %v3245 = vpop.f32.mrb[0].mxu0
        %3246 = vmatprep.mubr.f32.mxu0 0.0
        %3247 = vmatmul.mubr.f32.gmra.mrb[0].mxu0 %v3066
        %v3248 = vpop.f32.mrb[0].mxu0
        %v3249 = vadd.f32 0.0, %v3248
        %v3250 = vpop.f32.mrb[0].mxu0
        %3251 = vmatprep.mubr.f32.mxu0 0.0
        %3252 = vmatmul.mubr.f32.gmra.mrb[0].mxu0 %v3069
        %v3253 = vpop.f32.mrb[0].mxu0
        %v3254 = vadd.f32 0.0, %v3253
        %v3255 = vpop.f32.mrb[0].mxu0
        %3256 = vmatprep.mubr.f32.mxu0 0.0
        %3257 = vmatmul.mubr.f32.gmra.mrb[0].mxu0 %v3072
        %v3258 = vpop.f32.mrb[0].mxu0
        %v3259 = vadd.f32 0.0, %v3258
        %v3260 = vpop.f32.mrb[0].mxu0
        %3261 = vmatprep.mubr.f32.mxu0 0.0
        %3262 = vmatmul.mubr.f32.gmra.mrb[0].mxu0 %v3075
        %v3263 = vpop.f32.mrb[0].mxu0
        %v3264 = vadd.f32 0.0, %v3263
        %v3265 = vpop.f32.mrb[0].mxu0
        %3266 = vmatprep.mubr.f32.mxu0 0.0
        %3267 = vmatmul.mubr.f32.gmra.mrb[0].mxu0 %v3078
        %v3268 = vpop.f32.mrb[0].mxu0
        %v3269 = vadd.f32 0.0, %v3268
        %v3270 = vpop.f32.mrb[0].mxu0
        %3271 = vmatprep.mubr.f32.mxu0 0.0
        %3272 = vmatmul.mubr.f32.gmra.mrb[0].mxu0 %v3081
        %v3273 = vpop.f32.mrb[0].mxu0
        %v3274 = vadd.f32 0.0, %v3273
        %v3275 = vpop.f32.mrb[0].mxu0
        %3276 = vmatprep.mubr.f32.mxu0 0.0
        %3277 = vmatmul.mubr.f32.gmra.mrb[0].mxu0 %v3084
        %v3278 = vpop.f32.mrb[0].mxu0
        %v3279 = vadd.f32 0.0, %v3278
        %v3280 = vpop.f32.mrb[0].mxu0
        %3281 = vmatprep.mubr.f32.mxu0 0.0
        %3282 = vmatmul.mubr.f32.gmra.mrb[0].mxu0 %v3087
        %v3283 = vpop.f32.mrb[0].mxu0
        %v3284 = vadd.f32 0.0, %v3283
        %v3285 = vpop.f32.mrb[0].mxu0
        %3286 = vmatprep.mubr.f32.mxu0 0.0
        %3287 = vmatmul.mubr.f32.gmra.mrb[0].mxu0 %v3090
        %v3288 = vpop.f32.mrb[0].mxu0
        %v3289 = vadd.f32 0.0, %v3288
        %v3290 = vpop.f32.mrb[0].mxu0
        %3291 = vmatprep.mubr.f32.mxu0 0.0
        %3292 = vmatmul.mubr.f32.gmra.mrb[0].mxu0 %v3093
        %v3293 = vpop.f32.mrb[0].mxu0
        %v3294 = vadd.f32 0.0, %v3293
        %v3295 = vpop.f32.mrb[0].mxu0
        %3296 = vmatprep.mubr.f32.mxu0 0.0
        %3297 = vmatmul.mubr.f32.gmra.mrb[0].mxu0 %v3096
        %v3298 = vpop.f32.mrb[0].mxu0
        %v3299 = vadd.f32 0.0, %v3298
        %v3300 = vpop.f32.mrb[0].mxu0
        %3301 = vmatprep.mubr.f32.mxu0 0.0
        %3302 = vmatmul.mubr.f32.gmra.mrb[0].mxu0 %v3099
        %v3303 = vpop.f32.mrb[0].mxu0
        %v3304 = vadd.f32 0.0, %v3303
        %v3305 = vpop.f32.mrb[0].mxu0
        %3306 = vmatprep.mubr.f32.mxu0 0.0
        %3307 = vmatmul.mubr.f32.gmra.mrb[0].mxu0 %v3102
        %v3308 = vpop.f32.mrb[0].mxu0
        %v3309 = vadd.f32 0.0, %v3308
        %v3310 = vpop.f32.mrb[0].mxu0
        %3311 = vmatprep.mubr.f32.mxu0 0.0
        %3312 = vmatmul.mubr.f32.gmra.mrb[0].mxu0 %v3105
        %v3313 = vpop.f32.mrb[0].mxu0
        %v3314 = vadd.f32 0.0, %v3313
        %v3315 = vpop.f32.mrb[0].mxu0
        %3316 = vmatprep.mubr.f32.mxu0 0.0
        %3317 = vmatmul.mubr.f32.gmra.mrb[0].mxu0 %v3108
        %v3318 = vpop.f32.mrb[0].mxu0
        %v3319 = vadd.f32 0.0, %v3318
        %v3320 = vpop.f32.mrb[0].mxu0
        %3321 = vmatprep.mubr.f32.mxu0 0.0
        %3322 = vmatmul.mubr.f32.gmra.mrb[0].mxu0 %v3111
        %v3323 = vpop.f32.mrb[0].mxu0
        %v3324 = vadd.f32 0.0, %v3323
        %v3325 = vpop.f32.mrb[0].mxu0
        %3326 = vmatprep.mubr.f32.mxu0 0.0
        %3327 = vmatmul.mubr.f32.gmra.mrb[0].mxu0 %v3114
        %v3328 = vpop.f32.mrb[0].mxu0
        %v3329 = vadd.f32 0.0, %v3328
        %v3330 = vpop.f32.mrb[0].mxu0
        %3331 = vmatprep.mubr.f32.mxu0 0.0
        %3332 = vmatmul.mubr.f32.gmra.mrb[0].mxu0 %v3117
        %v3333 = vpop.f32.mrb[0].mxu0
        %v3334 = vadd.f32 0.0, %v3333
        %v3335 = vpop.f32.mrb[0].mxu0
        %3336 = vmatprep.mubr.f32.mxu0 0.0
        %3337 = vmatmul.mubr.f32.gmra.mrb[0].mxu0 %v3120
        %v3338 = vpop.f32.mrb[0].mxu0
        %v3339 = vadd.f32 0.0, %v3338
        %v3340 = vpop.f32.mrb[0].mxu0
        %3341 = vmatprep.mubr.f32.mxu0 0.0
        %3342 = vmatmul.mubr.f32.gmra.mrb[0].mxu0 %v3123
        %v3343 = vpop.f32.mrb[0].mxu0
        %v3344 = vadd.f32 0.0, %v3343
        %v3345 = vpop.f32.mrb[0].mxu0
        %3346 = vmatprep.mubr.f32.mxu0 0.0
        %3347 = vmatmul.mubr.f32.gmra.mrb[0].mxu0 %v3126
        %v3348 = vpop.f32.mrb[0].mxu0
        %v3349 = vadd.f32 0.0, %v3348
        %v3350 = vpop.f32.mrb[0].mxu0
        %3351 = vmatprep.mubr.f32.mxu0 0.0
        %3352 = vmatmul.mubr.f32.gmra.mrb[0].mxu0 %v3129
        %v3353 = vpop.f32.mrb[0].mxu0
        %v3354 = vadd.f32 0.0, %v3353
        %v3355 = vpop.f32.mrb[0].mxu0
        %3356 = vmatprep.mubr.f32.mxu0 0.0
        %3357 = vmatmul.mubr.f32.gmra.mrb[0].mxu0 %v3132
        %v3358 = vpop.f32.mrb[0].mxu0
        %v3359 = vadd.f32 0.0, %v3358
        %v3360 = vpop.f32.mrb[0].mxu0
        %3361 = vdwg.mxu0
        %v3362 = vadd.f32 %v2972, %v3204
        %v3363 = vadd.f32 %v2973, %v3209
        %v3364 = vadd.f32 %v2974, %v3214
        %v3365 = vadd.f32 %v2975, %v3219
        %v3366 = vadd.f32 %v2976, %v3224
        %v3367 = vadd.f32 %v2977, %v3229
        %v3368 = vadd.f32 %v2978, %v3234
        %v3369 = vadd.f32 %v2979, %v3239
        %v3370 = vadd.f32 %v2980, %v3244
        %v3371 = vadd.f32 %v2981, %v3249
        %v3372 = vadd.f32 %v2982, %v3254
        %v3373 = vadd.f32 %v2983, %v3259
        %v3374 = vadd.f32 %v2984, %v3264
        %v3375 = vadd.f32 %v2985, %v3269
        %v3376 = vadd.f32 %v2986, %v3274
        %v3377 = vadd.f32 %v2987, %v3279
        %v3378 = vadd.f32 %v2988, %v3284
        %v3379 = vadd.f32 %v2989, %v3289
        %v3380 = vadd.f32 %v2990, %v3294
        %v3381 = vadd.f32 %v2991, %v3299
        %v3382 = vadd.f32 %v2992, %v3304
        %v3383 = vadd.f32 %v2993, %v3309
        %v3384 = vadd.f32 %v2994, %v3314
        %v3385 = vadd.f32 %v2995, %v3319
        %v3386 = vadd.f32 %v2996, %v3324
        %v3387 = vadd.f32 %v2997, %v3329
        %v3388 = vadd.f32 %v2998, %v3334
        %v3389 = vadd.f32 %v2999, %v3339
        %v3390 = vadd.f32 %v3000, %v3344
        %v3391 = vadd.f32 %v3001, %v3349
        %v3392 = vadd.f32 %v3002, %v3354
        %v3393 = vadd.f32 %v3003, %v3359
        %v3394 = vld [vmem:[%s2613 + $0x2] sm:$0xff]
        %v3395 = vld [vmem:[%s2613 + $0xa] sm:$0xff]
        %v3396 = vld [vmem:[%s2613 + $0x1a] sm:$0xff]
        %v3397 = vld [vmem:[%s2613 + $0x22] sm:$0xff]
        %v3398 = vld [vmem:[%s2613 + $0x32] sm:$0xff]
        %v3399 = vld [vmem:[%s2613 + $0x3a] sm:$0xff]
        %v3400 = vld [vmem:[%s2613 + $0x4a] sm:$0xff]
        %v3401 = vld [vmem:[%s2613 + $0x52] sm:$0xff]
        %v3402 = vld [vmem:[%s2613 + $0x62] sm:$0xff]
        %v3403 = vld [vmem:[%s2613 + $0x6a] sm:$0xff]
        %v3404 = vld [vmem:[%s2613 + $0x7a] sm:$0xff]
        %v3405 = vld [vmem:[%s2613 + $0x82] sm:$0xff]
        %v3406 = vld [vmem:[%s2613 + $0x92] sm:$0xff]
        %v3407 = vld [vmem:[%s2613 + $0x9a] sm:$0xff]
        %v3408 = vld [vmem:[%s2613 + $0xaa] sm:$0xff]
        %v3409 = vld [vmem:[%s2613 + $0xb2] sm:$0xff]
        %v3410 = vld [vmem:[%s2613 + $0xc2] sm:$0xff]
        %v3411 = vld [vmem:[%s2613 + $0xca] sm:$0xff]
        %v3412 = vld [vmem:[%s2613 + $0xda] sm:$0xff]
        %v3413 = vld [vmem:[%s2613 + $0xe2] sm:$0xff]
        %v3414 = vld [vmem:[%s2613 + $0xf2] sm:$0xff]
        %v3415 = vld [vmem:[%s2613 + $0xfa] sm:$0xff]
        %v3416 = vld [vmem:[%s2613 + $0x10a] sm:$0xff]
        %v3417 = vld [vmem:[%s2613 + $0x112] sm:$0xff]
        %v3418 = vld [vmem:[%s2613 + $0x122] sm:$0xff]
        %v3419 = vld [vmem:[%s2613 + $0x12a] sm:$0xff]
        %v3420 = vld [vmem:[%s2613 + $0x13a] sm:$0xff]
        %v3421 = vld [vmem:[%s2613 + $0x142] sm:$0xff]
        %v3422 = vld [vmem:[%s2613 + $0x152] sm:$0xff]
        %v3423 = vld [vmem:[%s2613 + $0x15a] sm:$0xff]
        %v3424 = vld [vmem:[%s2613 + $0x16a] sm:$0xff]
        %v3425 = vld [vmem:[%s2613 + $0x172] sm:$0xff]
        %s3426 = scalar_lea.vmem [#allocation6], 32
        %v3427 = vld [vmem:[%s3426] sm:$0xf]
        %v3429 = vsel %vm216, %v3394, 0
        %v3432 = vsel %vm216, %v3395, 0
        %v3435 = vsel %vm216, %v3396, 0
        %v3438 = vsel %vm216, %v3397, 0
        %v3441 = vsel %vm216, %v3398, 0
        %v3444 = vsel %vm216, %v3399, 0
        %v3447 = vsel %vm216, %v3400, 0
        %v3450 = vsel %vm216, %v3401, 0
        %v3453 = vsel %vm216, %v3402, 0
        %v3456 = vsel %vm216, %v3403, 0
        %v3459 = vsel %vm216, %v3404, 0
        %v3462 = vsel %vm216, %v3405, 0
        %v3465 = vsel %vm216, %v3406, 0
        %v3468 = vsel %vm216, %v3407, 0
        %v3471 = vsel %vm216, %v3408, 0
        %v3474 = vsel %vm216, %v3409, 0
        %v3477 = vsel %vm216, %v3410, 0
        %v3480 = vsel %vm216, %v3411, 0
        %v3483 = vsel %vm216, %v3412, 0
        %v3486 = vsel %vm216, %v3413, 0
        %v3489 = vsel %vm216, %v3414, 0
        %v3492 = vsel %vm216, %v3415, 0
        %v3495 = vsel %vm216, %v3416, 0
        %v3498 = vsel %vm216, %v3417, 0
        %v3501 = vsel %vm216, %v3418, 0
        %v3504 = vsel %vm216, %v3419, 0
        %v3507 = vsel %vm216, %v3420, 0
        %v3510 = vsel %vm216, %v3421, 0
        %v3513 = vsel %vm216, %v3422, 0
        %v3516 = vsel %vm216, %v3423, 0
        %v3519 = vsel %vm216, %v3424, 0
        %v3522 = vsel %vm216, %v3425, 0
        %v3525 = vsel %vm500, %v3427, 0
        %3527 = vmatprep.subr.mxu0 0.0
        %3528 = vmatpush1.msra.mxu0 %v3525
        %3529 = vmatprep.subr.mxu0 0.0
        %3530 = vmatpush1.msra.mxu0 0.0
        %3531 = vmatprep.subr.mxu0 0.0
        %3532 = vmatpush1.msra.mxu0 0.0
        %3533 = vmatprep.subr.mxu0 0.0
        %3534 = vmatpush1.msra.mxu0 0.0
        %3535 = vmatprep.subr.mxu0 0.0
        %3536 = vmatpush1.msra.mxu0 0.0
        %3537 = vmatprep.subr.mxu0 0.0
        %3538 = vmatpush1.msra.mxu0 0.0
        %3539 = vmatprep.subr.mxu0 0.0
        %3540 = vmatpush1.msra.mxu0 0.0
        %3541 = vmatprep.subr.mxu0 0.0
        %3542 = vmatpush1.msra.mxu0 0.0
        %3543 = vmatprep.subr.mxu0 0.0
        %3544 = vmatpush1.msra.mxu0 0.0
        %3545 = vmatprep.subr.mxu0 0.0
        %3546 = vmatpush1.msra.mxu0 0.0
        %3547 = vmatprep.subr.mxu0 0.0
        %3548 = vmatpush1.msra.mxu0 0.0
        %3549 = vmatprep.subr.mxu0 0.0
        %3550 = vmatpush1.msra.mxu0 0.0
        %3551 = vmatprep.subr.mxu0 0.0
        %3552 = vmatpush1.msra.mxu0 0.0
        %3553 = vmatprep.subr.mxu0 0.0
        %3554 = vmatpush1.msra.mxu0 0.0
        %3555 = vmatprep.subr.mxu0 0.0
        %3556 = vmatpush1.msra.mxu0 0.0
        %3557 = vmatprep.subr.mxu0 0.0
        %3558 = vmatpush1.msra.mxu0 0.0
        %3559 = vmatprep.subr.mxu0 0.0
        %3560 = vmatpush1.msra.mxu0 0.0
        %3561 = vmatprep.subr.mxu0 0.0
        %3562 = vmatpush1.msra.mxu0 0.0
        %3563 = vmatprep.subr.mxu0 0.0
        %3564 = vmatpush1.msra.mxu0 0.0
        %3565 = vmatprep.subr.mxu0 0.0
        %3566 = vmatpush1.msra.mxu0 0.0
        %3567 = vmatprep.subr.mxu0 0.0
        %3568 = vmatpush1.msra.mxu0 0.0
        %3569 = vmatprep.subr.mxu0 0.0
        %3570 = vmatpush1.msra.mxu0 0.0
        %3571 = vmatprep.subr.mxu0 0.0
        %3572 = vmatpush1.msra.mxu0 0.0
        %3573 = vmatprep.subr.mxu0 0.0
        %3574 = vmatpush1.msra.mxu0 0.0
        %3575 = vmatprep.subr.mxu0 0.0
        %3576 = vmatpush1.msra.mxu0 0.0
        %3577 = vmatprep.subr.mxu0 0.0
        %3578 = vmatpush1.msra.mxu0 0.0
        %3579 = vmatprep.subr.mxu0 0.0
        %3580 = vmatpush1.msra.mxu0 0.0
        %3581 = vmatprep.subr.mxu0 0.0
        %3582 = vmatpush1.msra.mxu0 0.0
        %3583 = vmatprep.subr.mxu0 0.0
        %3584 = vmatpush1.msra.mxu0 0.0
        %3585 = vmatprep.subr.mxu0 0.0
        %3586 = vmatpush1.msra.mxu0 0.0
        %3587 = vmatprep.subr.mxu0 0.0
        %3588 = vmatpush1.msra.mxu0 0.0
        %3589 = vmatprep.subr.mxu0 0.0
        %3590 = vmatpush1.msra.mxu0 0.0
        %3591 = vmatprep.mubr.f32.mxu0 0.0
        %3592 = vmatmul.mubr.f32.gmra.mrb[0].mxu0 %v3429
        %v3593 = vpop.f32.mrb[0].mxu0
        %v3594 = vadd.f32 0.0, %v3593
        %v3595 = vpop.f32.mrb[0].mxu0
        %3596 = vmatprep.mubr.f32.mxu0 0.0
        %3597 = vmatmul.mubr.f32.gmra.mrb[0].mxu0 %v3432
        %v3598 = vpop.f32.mrb[0].mxu0
        %v3599 = vadd.f32 0.0, %v3598
        %v3600 = vpop.f32.mrb[0].mxu0
        %3601 = vmatprep.mubr.f32.mxu0 0.0
        %3602 = vmatmul.mubr.f32.gmra.mrb[0].mxu0 %v3435
        %v3603 = vpop.f32.mrb[0].mxu0
        %v3604 = vadd.f32 0.0, %v3603
        %v3605 = vpop.f32.mrb[0].mxu0
        %3606 = vmatprep.mubr.f32.mxu0 0.0
        %3607 = vmatmul.mubr.f32.gmra.mrb[0].mxu0 %v3438
        %v3608 = vpop.f32.mrb[0].mxu0
        %v3609 = vadd.f32 0.0, %v3608
        %v3610 = vpop.f32.mrb[0].mxu0
        %3611 = vmatprep.mubr.f32.mxu0 0.0
        %3612 = vmatmul.mubr.f32.gmra.mrb[0].mxu0 %v3441
        %v3613 = vpop.f32.mrb[0].mxu0
        %v3614 = vadd.f32 0.0, %v3613
        %v3615 = vpop.f32.mrb[0].mxu0
        %3616 = vmatprep.mubr.f32.mxu0 0.0
        %3617 = vmatmul.mubr.f32.gmra.mrb[0].mxu0 %v3444
        %v3618 = vpop.f32.mrb[0].mxu0
        %v3619 = vadd.f32 0.0, %v3618
        %v3620 = vpop.f32.mrb[0].mxu0
        %3621 = vmatprep.mubr.f32.mxu0 0.0
        %3622 = vmatmul.mubr.f32.gmra.mrb[0].mxu0 %v3447
        %v3623 = vpop.f32.mrb[0].mxu0
        %v3624 = vadd.f32 0.0, %v3623
        %v3625 = vpop.f32.mrb[0].mxu0
        %3626 = vmatprep.mubr.f32.mxu0 0.0
        %3627 = vmatmul.mubr.f32.gmra.mrb[0].mxu0 %v3450
        %v3628 = vpop.f32.mrb[0].mxu0
        %v3629 = vadd.f32 0.0, %v3628
        %v3630 = vpop.f32.mrb[0].mxu0
        %3631 = vmatprep.mubr.f32.mxu0 0.0
        %3632 = vmatmul.mubr.f32.gmra.mrb[0].mxu0 %v3453
        %v3633 = vpop.f32.mrb[0].mxu0
        %v3634 = vadd.f32 0.0, %v3633
        %v3635 = vpop.f32.mrb[0].mxu0
        %3636 = vmatprep.mubr.f32.mxu0 0.0
        %3637 = vmatmul.mubr.f32.gmra.mrb[0].mxu0 %v3456
        %v3638 = vpop.f32.mrb[0].mxu0
        %v3639 = vadd.f32 0.0, %v3638
        %v3640 = vpop.f32.mrb[0].mxu0
        %3641 = vmatprep.mubr.f32.mxu0 0.0
        %3642 = vmatmul.mubr.f32.gmra.mrb[0].mxu0 %v3459
        %v3643 = vpop.f32.mrb[0].mxu0
        %v3644 = vadd.f32 0.0, %v3643
        %v3645 = vpop.f32.mrb[0].mxu0
        %3646 = vmatprep.mubr.f32.mxu0 0.0
        %3647 = vmatmul.mubr.f32.gmra.mrb[0].mxu0 %v3462
        %v3648 = vpop.f32.mrb[0].mxu0
        %v3649 = vadd.f32 0.0, %v3648
        %v3650 = vpop.f32.mrb[0].mxu0
        %3651 = vmatprep.mubr.f32.mxu0 0.0
        %3652 = vmatmul.mubr.f32.gmra.mrb[0].mxu0 %v3465
        %v3653 = vpop.f32.mrb[0].mxu0
        %v3654 = vadd.f32 0.0, %v3653
        %v3655 = vpop.f32.mrb[0].mxu0
        %3656 = vmatprep.mubr.f32.mxu0 0.0
        %3657 = vmatmul.mubr.f32.gmra.mrb[0].mxu0 %v3468
        %v3658 = vpop.f32.mrb[0].mxu0
        %v3659 = vadd.f32 0.0, %v3658
        %v3660 = vpop.f32.mrb[0].mxu0
        %3661 = vmatprep.mubr.f32.mxu0 0.0
        %3662 = vmatmul.mubr.f32.gmra.mrb[0].mxu0 %v3471
        %v3663 = vpop.f32.mrb[0].mxu0
        %v3664 = vadd.f32 0.0, %v3663
        %v3665 = vpop.f32.mrb[0].mxu0
        %3666 = vmatprep.mubr.f32.mxu0 0.0
        %3667 = vmatmul.mubr.f32.gmra.mrb[0].mxu0 %v3474
        %v3668 = vpop.f32.mrb[0].mxu0
        %v3669 = vadd.f32 0.0, %v3668
        %v3670 = vpop.f32.mrb[0].mxu0
        %3671 = vmatprep.mubr.f32.mxu0 0.0
        %3672 = vmatmul.mubr.f32.gmra.mrb[0].mxu0 %v3477
        %v3673 = vpop.f32.mrb[0].mxu0
        %v3674 = vadd.f32 0.0, %v3673
        %v3675 = vpop.f32.mrb[0].mxu0
        %3676 = vmatprep.mubr.f32.mxu0 0.0
        %3677 = vmatmul.mubr.f32.gmra.mrb[0].mxu0 %v3480
        %v3678 = vpop.f32.mrb[0].mxu0
        %v3679 = vadd.f32 0.0, %v3678
        %v3680 = vpop.f32.mrb[0].mxu0
        %3681 = vmatprep.mubr.f32.mxu0 0.0
        %3682 = vmatmul.mubr.f32.gmra.mrb[0].mxu0 %v3483
        %v3683 = vpop.f32.mrb[0].mxu0
        %v3684 = vadd.f32 0.0, %v3683
        %v3685 = vpop.f32.mrb[0].mxu0
        %3686 = vmatprep.mubr.f32.mxu0 0.0
        %3687 = vmatmul.mubr.f32.gmra.mrb[0].mxu0 %v3486
        %v3688 = vpop.f32.mrb[0].mxu0
        %v3689 = vadd.f32 0.0, %v3688
        %v3690 = vpop.f32.mrb[0].mxu0
        %3691 = vmatprep.mubr.f32.mxu0 0.0
        %3692 = vmatmul.mubr.f32.gmra.mrb[0].mxu0 %v3489
        %v3693 = vpop.f32.mrb[0].mxu0
        %v3694 = vadd.f32 0.0, %v3693
        %v3695 = vpop.f32.mrb[0].mxu0
        %3696 = vmatprep.mubr.f32.mxu0 0.0
        %3697 = vmatmul.mubr.f32.gmra.mrb[0].mxu0 %v3492
        %v3698 = vpop.f32.mrb[0].mxu0
        %v3699 = vadd.f32 0.0, %v3698
        %v3700 = vpop.f32.mrb[0].mxu0
        %3701 = vmatprep.mubr.f32.mxu0 0.0
        %3702 = vmatmul.mubr.f32.gmra.mrb[0].mxu0 %v3495
        %v3703 = vpop.f32.mrb[0].mxu0
        %v3704 = vadd.f32 0.0, %v3703
        %v3705 = vpop.f32.mrb[0].mxu0
        %3706 = vmatprep.mubr.f32.mxu0 0.0
        %3707 = vmatmul.mubr.f32.gmra.mrb[0].mxu0 %v3498
        %v3708 = vpop.f32.mrb[0].mxu0
        %v3709 = vadd.f32 0.0, %v3708
        %v3710 = vpop.f32.mrb[0].mxu0
        %3711 = vmatprep.mubr.f32.mxu0 0.0
        %3712 = vmatmul.mubr.f32.gmra.mrb[0].mxu0 %v3501
        %v3713 = vpop.f32.mrb[0].mxu0
        %v3714 = vadd.f32 0.0, %v3713
        %v3715 = vpop.f32.mrb[0].mxu0
        %3716 = vmatprep.mubr.f32.mxu0 0.0
        %3717 = vmatmul.mubr.f32.gmra.mrb[0].mxu0 %v3504
        %v3718 = vpop.f32.mrb[0].mxu0
        %v3719 = vadd.f32 0.0, %v3718
        %v3720 = vpop.f32.mrb[0].mxu0
        %3721 = vmatprep.mubr.f32.mxu0 0.0
        %3722 = vmatmul.mubr.f32.gmra.mrb[0].mxu0 %v3507
        %v3723 = vpop.f32.mrb[0].mxu0
        %v3724 = vadd.f32 0.0, %v3723
        %v3725 = vpop.f32.mrb[0].mxu0
        %3726 = vmatprep.mubr.f32.mxu0 0.0
        %3727 = vmatmul.mubr.f32.gmra.mrb[0].mxu0 %v3510
        %v3728 = vpop.f32.mrb[0].mxu0
        %v3729 = vadd.f32 0.0, %v3728
        %v3730 = vpop.f32.mrb[0].mxu0
        %3731 = vmatprep.mubr.f32.mxu0 0.0
        %3732 = vmatmul.mubr.f32.gmra.mrb[0].mxu0 %v3513
        %v3733 = vpop.f32.mrb[0].mxu0
        %v3734 = vadd.f32 0.0, %v3733
        %v3735 = vpop.f32.mrb[0].mxu0
        %3736 = vmatprep.mubr.f32.mxu0 0.0
        %3737 = vmatmul.mubr.f32.gmra.mrb[0].mxu0 %v3516
        %v3738 = vpop.f32.mrb[0].mxu0
        %v3739 = vadd.f32 0.0, %v3738
        %v3740 = vpop.f32.mrb[0].mxu0
        %3741 = vmatprep.mubr.f32.mxu0 0.0
        %3742 = vmatmul.mubr.f32.gmra.mrb[0].mxu0 %v3519
        %v3743 = vpop.f32.mrb[0].mxu0
        %v3744 = vadd.f32 0.0, %v3743
        %v3745 = vpop.f32.mrb[0].mxu0
        %3746 = vmatprep.mubr.f32.mxu0 0.0
        %3747 = vmatmul.mubr.f32.gmra.mrb[0].mxu0 %v3522
        %v3748 = vpop.f32.mrb[0].mxu0
        %v3749 = vadd.f32 0.0, %v3748
        %v3750 = vpop.f32.mrb[0].mxu0
        %3751 = vdwg.mxu0
        %v3752 = vadd.f32 %v3362, %v3594
        %v3753 = vadd.f32 %v3363, %v3599
        %v3754 = vadd.f32 %v3364, %v3604
        %v3755 = vadd.f32 %v3365, %v3609
        %v3756 = vadd.f32 %v3366, %v3614
        %v3757 = vadd.f32 %v3367, %v3619
        %v3758 = vadd.f32 %v3368, %v3624
        %v3759 = vadd.f32 %v3369, %v3629
        %v3760 = vadd.f32 %v3370, %v3634
        %v3761 = vadd.f32 %v3371, %v3639
        %v3762 = vadd.f32 %v3372, %v3644
        %v3763 = vadd.f32 %v3373, %v3649
        %v3764 = vadd.f32 %v3374, %v3654
        %v3765 = vadd.f32 %v3375, %v3659
        %v3766 = vadd.f32 %v3376, %v3664
        %v3767 = vadd.f32 %v3377, %v3669
        %v3768 = vadd.f32 %v3378, %v3674
        %v3769 = vadd.f32 %v3379, %v3679
        %v3770 = vadd.f32 %v3380, %v3684
        %v3771 = vadd.f32 %v3381, %v3689
        %v3772 = vadd.f32 %v3382, %v3694
        %v3773 = vadd.f32 %v3383, %v3699
        %v3774 = vadd.f32 %v3384, %v3704
        %v3775 = vadd.f32 %v3385, %v3709
        %v3776 = vadd.f32 %v3386, %v3714
        %v3777 = vadd.f32 %v3387, %v3719
        %v3778 = vadd.f32 %v3388, %v3724
        %v3779 = vadd.f32 %v3389, %v3729
        %v3780 = vadd.f32 %v3390, %v3734
        %v3781 = vadd.f32 %v3391, %v3739
        %v3782 = vadd.f32 %v3392, %v3744
        %v3783 = vadd.f32 %v3393, %v3749
        %v3784 = vld [vmem:[#allocation8] sm:$0x1]
        %v3786 = vlaneseq
        %v3787 = vshrl.u32 %v3786, 7
        %v3788 = vsub.s32 0, %v3787
        %v3789 = vrot.slane %v3784, %v3788
        %v3791 = vadd.f32 %v3752, %v3789
        %v3792 = vadd.f32 %v3753, %v3789
        %v3793 = vadd.f32 %v3754, %v3789
        %v3794 = vadd.f32 %v3755, %v3789
        %v3795 = vadd.f32 %v3756, %v3789
        %v3796 = vadd.f32 %v3757, %v3789
        %v3797 = vadd.f32 %v3758, %v3789
        %v3798 = vadd.f32 %v3759, %v3789
        %v3799 = vadd.f32 %v3760, %v3789
        %v3800 = vadd.f32 %v3761, %v3789
        %v3801 = vadd.f32 %v3762, %v3789
        %v3802 = vadd.f32 %v3763, %v3789
        %v3803 = vadd.f32 %v3764, %v3789
        %v3804 = vadd.f32 %v3765, %v3789
        %v3805 = vadd.f32 %v3766, %v3789
        %v3806 = vadd.f32 %v3767, %v3789
        %v3807 = vadd.f32 %v3768, %v3789
        %v3808 = vadd.f32 %v3769, %v3789
        %v3809 = vadd.f32 %v3770, %v3789
        %v3810 = vadd.f32 %v3771, %v3789
        %v3811 = vadd.f32 %v3772, %v3789
        %v3812 = vadd.f32 %v3773, %v3789
        %v3813 = vadd.f32 %v3774, %v3789
        %v3814 = vadd.f32 %v3775, %v3789
        %v3815 = vadd.f32 %v3776, %v3789
        %v3816 = vadd.f32 %v3777, %v3789
        %v3817 = vadd.f32 %v3778, %v3789
        %v3818 = vadd.f32 %v3779, %v3789
        %v3819 = vadd.f32 %v3780, %v3789
        %v3820 = vadd.f32 %v3781, %v3789
        %v3821 = vadd.f32 %v3782, %v3789
        %v3822 = vadd.f32 %v3783, %v3789
        %3823 = vst.msk [vmem:[%s215] sm:$0xff] %vm216, %v3791
        %3824 = vst.msk [vmem:[%s215 + $0x8] sm:$0xff] %vm216, %v3792
        %3825 = vst.msk [vmem:[%s215 + $0x10] sm:$0xff] %vm216, %v3793
        %3826 = vst.msk [vmem:[%s215 + $0x18] sm:$0xff] %vm216, %v3794
        %3827 = vst.msk [vmem:[%s215 + $0x20] sm:$0xff] %vm216, %v3795
        %3828 = vst.msk [vmem:[%s215 + $0x28] sm:$0xff] %vm216, %v3796
        %3829 = vst.msk [vmem:[%s215 + $0x30] sm:$0xff] %vm216, %v3797
        %3830 = vst.msk [vmem:[%s215 + $0x38] sm:$0xff] %vm216, %v3798
        %3831 = vst.msk [vmem:[%s215 + $0x40] sm:$0xff] %vm216, %v3799
        %3832 = vst.msk [vmem:[%s215 + $0x48] sm:$0xff] %vm216, %v3800
        %3833 = vst.msk [vmem:[%s215 + $0x50] sm:$0xff] %vm216, %v3801
        %3834 = vst.msk [vmem:[%s215 + $0x58] sm:$0xff] %vm216, %v3802
        %3835 = vst.msk [vmem:[%s215 + $0x60] sm:$0xff] %vm216, %v3803
        %3836 = vst.msk [vmem:[%s215 + $0x68] sm:$0xff] %vm216, %v3804
        %3837 = vst.msk [vmem:[%s215 + $0x70] sm:$0xff] %vm216, %v3805
        %3838 = vst.msk [vmem:[%s215 + $0x78] sm:$0xff] %vm216, %v3806
        %3839 = vst.msk [vmem:[%s215 + $0x80] sm:$0xff] %vm216, %v3807
        %3840 = vst.msk [vmem:[%s215 + $0x88] sm:$0xff] %vm216, %v3808
        %3841 = vst.msk [vmem:[%s215 + $0x90] sm:$0xff] %vm216, %v3809
        %3842 = vst.msk [vmem:[%s215 + $0x98] sm:$0xff] %vm216, %v3810
        %3843 = vst.msk [vmem:[%s215 + $0xa0] sm:$0xff] %vm216, %v3811
        %3844 = vst.msk [vmem:[%s215 + $0xa8] sm:$0xff] %vm216, %v3812
        %3845 = vst.msk [vmem:[%s215 + $0xb0] sm:$0xff] %vm216, %v3813
        %3846 = vst.msk [vmem:[%s215 + $0xb8] sm:$0xff] %vm216, %v3814
        %3847 = vst.msk [vmem:[%s215 + $0xc0] sm:$0xff] %vm216, %v3815
        %3848 = vst.msk [vmem:[%s215 + $0xc8] sm:$0xff] %vm216, %v3816
        %3849 = vst.msk [vmem:[%s215 + $0xd0] sm:$0xff] %vm216, %v3817
        %3850 = vst.msk [vmem:[%s215 + $0xd8] sm:$0xff] %vm216, %v3818
        %3851 = vst.msk [vmem:[%s215 + $0xe0] sm:$0xff] %vm216, %v3819
        %3852 = vst.msk [vmem:[%s215 + $0xe8] sm:$0xff] %vm216, %v3820
        %3853 = vst.msk [vmem:[%s215 + $0xf0] sm:$0xff] %vm216, %v3821
        %3854 = vst.msk [vmem:[%s215 + $0xf8] sm:$0xff] %vm216, %v3822
        %s3855 = sand.u32 %s97, 1
        %s3856 = scalar_lea.sflag [#allocation5], %s3855
        %s3857 = sand.u32 %s97, 1
        %s3858 = smul.addr %s3857, 256
        %s3859 = scalar_lea.vmem [#allocation9], %s3858
        // Predicated region
        $region45: #{downsample3d_conv.1} parent=31 // pred_check
          %p3860 = pneg %p107
        $region46: #{downsample3d_conv.1} parent=31 // pred_check_branch
          %3862 = sbr.rel (%p3860) target = $region48
        $region47: #{downsample3d_conv.1} parent=31 // pred_region
          %s3864 = ssub.s32 4096, 4096
          %3865 = vsyncadd %s3856, %s3864
          %s3866 = smul.addr %s21, 32
          %s3867 = smul.addr %s3866, 128
          %s3868 = scalar_lea.hbm %s3, %s3867
          %s3869 = sshll.u32 %s3859, 4
          %s3870 = int_to_ptr.vmem [resolvable:$true] %s3869
          %3875 = dma.vmem_to_hbm [thread:$0]  %s3870, 4096, %s3868, %s3856, 128, 128, 8
        $region48: #{downsample3d_conv.1} parent=31 // pred_fallthru
          _
      $region32: #{downsample3d_conv.1} parent=5 // pred_fallthru
        _
      %p3876 = scmp.le.s32.totalorder 2, %s16
      // Predicated region
      $region49: #{downsample3d_conv.1} parent=5 // pred_check
        %p3877 = pneg %p3876
      $region50: #{downsample3d_conv.1} parent=5 // pred_check_branch
        %3879 = sbr.rel (%p3877) target = $region52
      $region51: #{downsample3d_conv.1} parent=5 // pred_region
        %s3880 = ssub.s32 %s16, 2
        // Predicated region
        $region53: #{downsample3d_conv.1} parent=51 // pred_check
          %p3881 = pneg %p113
        $region54: #{downsample3d_conv.1} parent=51 // pred_check_branch
          %3883 = sbr.rel (%p3881) target = $region56
        $region55: #{downsample3d_conv.1} parent=51 // pred_region
          %s3884 = sand.u32 %s98, 1
          %s3885 = scalar_lea.sflag [#allocation5], %s3884
          %s3886 = sand.u32 %s98, 1
          %s3887 = smul.addr %s3886, 256
          %s3888 = scalar_lea.vmem [#allocation9], %s3887
          %3889 = dma.done %s3885, 4096
        $region56: #{downsample3d_conv.1} parent=51 // pred_fallthru
          _
      $region52: #{downsample3d_conv.1} parent=5 // pred_fallthru
        _
    $region6: #{downsample3d_conv.1} parent=1 // loop_footer
      %s20 = sadd.s32 1, %s16
    $region7: #{downsample3d_conv.1} parent=1 // loop_footer_branch
      %15 = sbr.rel target = $region3
    $region8: #{downsample3d_conv.1} parent=1 // loop_exit
      _
    %3890 = vsyncpa [#allocation4], 1
    %s3891 = scalar_lea.sflag [#allocation4], 1
    %3892 = vsyncpa %s3891, 1
    %3893 = vsyncpa [#allocation7], 1
    %3894 = vsyncpa [#allocation5], 1
    %s3895 = scalar_lea.sflag [#allocation5], 1
    %3896 = vsyncpa %s3895, 1

</llo_original>
